<compile_context>
chip_gen: v5e
topology: v5e:2x2
jax: 0.10.0
libtpu: 0.0.40
codegen_flags: <defaults>
</compile_context>

<pallas_src>
import functools

import jax
import jax.numpy as jnp
from jax.experimental import pallas as pl
from jax.experimental.pallas import tpu as pltpu


# ----------------------------- VMEM budgeting --------------------------------

def _tpu_vmem_capacity_bytes():
    try:
        return int(pltpu.get_tpu_info().vmem_capacity_bytes)
    except Exception:
        return 64 * 1024 * 1024            # conservative (v7x per-TC) fallback


_VMEM_CAP = _tpu_vmem_capacity_bytes()
_VMEM_BUDGET = int(0.40 * _VMEM_CAP)                          # live block target
_VMEM_LIMIT = int(min(0.75 * _VMEM_CAP, 100 * 1024 * 1024))   # scoped limit


def _pick_tr(ho, wo, cin, cout, out_bytes):
    """Output-row tile: largest row count whose double-buffered blocks fit."""
    k4, wp2 = 4 * cin, wo + 2
    fixed = 2 * (9 * cout * k4 * 2 + cout * cout * 2 + 8 * cout)  # resident params
    halo = 2 * 2 * k4 * wp2 * 2                                   # 2 halo band rows
    per_row = 2 * (k4 * wp2 * 2 + cout * wo * out_bytes)          # band + out rows
    avail = _VMEM_BUDGET - fixed - halo
    tr = max(1, min(ho, avail // per_row if avail > per_row else 1))
    nb = -(-ho // tr)
    return -(-ho // nb)        # balance tiles so padded tail rows stay < nb


# ------------------------------ Pallas kernels --------------------------------

def _conv_gdn_kernel(band_ref, w_ref, b_ref, g_ref, be_ref, o_ref):
    """Fused 5x5/s2 conv + bias + GDN for one (batch, row-band) block.

    band_ref: (TR+2, 4*Cin, Wo+2) bf16  polyphase input rows (2-row halo)
    w_ref   : (9, Cout, 4*Cin)    bf16  grouped conv taps (ah, aw)
    b_ref   : (Cout, 1)           f32   conv bias
    g_ref   : (Cout, Cout)        bf16  GDN gamma
    be_ref  : (Cout, 1)           f32   GDN beta
    o_ref   : (TR, Cout, Wo)            output rows
    """
    tr, cout, wo = o_ref.shape

    def row(i, carry):
        acc = jnp.zeros((cout, wo), jnp.float32)
        for ah in range(3):
            xrow = band_ref[i + ah]                          # (4Cin, Wo+2)
            for aw in range(3):
                acc = acc + jnp.dot(w_ref[3 * ah + aw], xrow[:, aw:aw + wo],
                                    preferred_element_type=jnp.float32)
        acc = acc + b_ref[...]
        den = jnp.dot(g_ref[...], (acc * acc).astype(jnp.bfloat16),
                      preferred_element_type=jnp.float32) + be_ref[...]
        o_ref[i] = (acc * jax.lax.rsqrt(den)).astype(o_ref.dtype)
        return carry

    jax.lax.fori_loop(0, tr, row, 0)


def _conv_kernel(band_ref, w_ref, b_ref, o_ref):
    """5x5/s2 conv + bias only (final layer, no GDN)."""
    tr, cout, wo = o_ref.shape

    def row(i, carry):
        acc = jnp.zeros((cout, wo), jnp.float32)
        for ah in range(3):
            xrow = band_ref[i + ah]
            for aw in range(3):
                acc = acc + jnp.dot(w_ref[3 * ah + aw], xrow[:, aw:aw + wo],
                                    preferred_element_type=jnp.float32)
        o_ref[i] = (acc + b_ref[...]).astype(o_ref.dtype)
        return carry

    jax.lax.fori_loop(0, tr, row, 0)


# ------------------------------ layer wrapper ---------------------------------

def _prep_bands(x_bhcw, tr):
    """Pad(2), polyphase split (space-to-depth by 2) and row-band gather.

    x_bhcw: (B, H, C, W) rows-major activation.  Returns
    xband (B, NB, TR+2, 4C, Wo+2) bf16, channel index p*C + c with p = pr*2+pc.
    """
    B, H, C, W = x_bhcw.shape
    ho, wo = H // 2, W // 2
    xp = jnp.pad(x_bhcw.astype(jnp.bfloat16), ((0, 0), (2, 2), (0, 0), (2, 2)))
    xph = jnp.stack([xp[:, pr::2, :, pc::2] for pr in (0, 1) for pc in (0, 1)],
                    axis=2)                                # (B, ho+2, 4, C, wo+2)
    xph = xph.reshape(B, ho + 2, 4 * C, wo + 2)
    nb = -(-ho // tr)
    pad_rows = nb * tr + 2 - (ho + 2)
    if pad_rows:
        xph = jnp.pad(xph, ((0, 0), (0, pad_rows), (0, 0), (0, 0)))
    ridx = jnp.arange(nb)[:, None] * tr + jnp.arange(tr + 2)[None, :]
    xband = xph[:, ridx]                                   # (B, nb, tr+2, 4C, wo+2)
    return xband, ho, wo, nb


def _conv_layer(x_bhcw, wt, bias, gamma=None, beta=None, out_dtype=jnp.bfloat16):
    """Conv2d(5,5,s=2,p=2) [+ fused GDN] as one Pallas call.

    Input (B, H, Cin, W) rows-major  ->  output (B, H//2, Cout, W//2).
    """
    B, H, C, W = x_bhcw.shape
    assert H % 2 == 0 and W % 2 == 0, "even spatial dims expected"
    _, cout, k4 = wt.shape
    out_bytes = jnp.dtype(out_dtype).itemsize

    tr = _pick_tr(H // 2, W // 2, C, cout, out_bytes)
    xband, ho, wo, nb = _prep_bands(x_bhcw, tr)
    wp2 = wo + 2

    in_specs = [
        pl.BlockSpec((None, None, tr + 2, 4 * C, wp2),
                     lambda b, t: (b, t, 0, 0, 0)),                # row band
        pl.BlockSpec((9, cout, k4), lambda b, t: (0, 0, 0)),       # taps (resident)
        pl.BlockSpec((cout, 1), lambda b, t: (0, 0)),              # bias
    ]
    args = (xband, wt, bias)
    kernel = _conv_kernel
    gdn = gamma is not None
    if gdn:
        in_specs += [pl.BlockSpec((cout, cout), lambda b, t: (0, 0)),   # gamma
                     pl.BlockSpec((cout, 1), lambda b, t: (0, 0))]      # beta
        args = args + (gamma, beta)
        kernel = _conv_gdn_kernel

    rows = B * nb * tr
    flops = 2 * rows * wo * cout * (9 * k4 + (cout if gdn else 0))
    bytes_accessed = (xband.size * 2 + wt.size * 2 + cout * 4
                      + (cout * cout * 2 + cout * 4 if gdn else 0)
                      + rows * cout * wo * out_bytes)
    cost = pl.CostEstimate(flops=int(flops),
                           transcendentals=int(rows * wo * cout) if gdn else 0,
                           bytes_accessed=int(bytes_accessed))

    out = pl.pallas_call(
        kernel,
        out_shape=jax.ShapeDtypeStruct((B, nb * tr, cout, wo), out_dtype),
        grid=(B, nb),
        in_specs=in_specs,
        out_specs=pl.BlockSpec((None, tr, cout, wo), lambda b, t: (b, t, 0, 0)),
        compiler_params=pltpu.CompilerParams(
            dimension_semantics=("parallel", "parallel"),
            vmem_limit_bytes=_VMEM_LIMIT),
        cost_estimate=cost,
    )(*args)
    return out[:, :ho]                                     # (B, ho, cout, wo)


# ------------------------------- param prep -----------------------------------

def prepare_params(raw):
    """One-time layout prep (outside the jitted hot path).

    Conv weights (Cout,Cin,5,5) -> (9, Cout, 4*Cin) bf16 grouped polyphase taps
    indexed [ah*3+aw, cout, (pr*2+pc)*Cin + cin]; biases/beta -> f32 columns;
    GDN gamma -> explicit bf16 MXU operand.
    """
    pp = {}
    for i in (1, 2, 3, 4):
        w = raw[f"w{i}"]
        cout, cin = w.shape[0], w.shape[1]
        wpad = jnp.pad(w, ((0, 0), (0, 0), (0, 1), (0, 1)))       # (Cout,Cin,6,6)
        wr = wpad.reshape(cout, cin, 3, 2, 3, 2)                   # kh=2ah+pr, kw=2aw+pc
        wt = jnp.transpose(wr, (2, 4, 0, 3, 5, 1)).reshape(9, cout, 4 * cin)
        pp[f"w{i}"] = wt.astype(jnp.bfloat16)
        pp[f"b{i}"] = raw[f"b{i}"].reshape(cout, 1).astype(jnp.float32)
    for i in (1, 2, 3):
        c = raw[f"g{i}"].shape[0]
        pp[f"g{i}"] = raw[f"g{i}"].astype(jnp.bfloat16)
        pp[f"be{i}"] = raw[f"be{i}"].reshape(c, 1).astype(jnp.float32)
    return pp


def g_a_forward(pp, x_nchw):
    x = jnp.transpose(x_nchw, (0, 2, 1, 3))               # NCHW -> (B, H, C, W)
    x = _conv_layer(x, pp["w1"], pp["b1"], pp["g1"], pp["be1"])
    x = _conv_layer(x, pp["w2"], pp["b2"], pp["g2"], pp["be2"])
    x = _conv_layer(x, pp["w3"], pp["b3"], pp["g3"], pp["be3"])
    x = _conv_layer(x, pp["w4"], pp["b4"], out_dtype=jnp.float32)
    return jnp.transpose(x, (0, 2, 1, 3))                 # back to NCHW


# --------------------------- plain-JAX reference ------------------------------

def g_a_reference(raw, x):
    def conv(x, w, b):
        y = jax.lax.conv_general_dilated(
            x, w, window_strides=(2, 2), padding=((2, 2), (2, 2)),
            dimension_numbers=("NCHW", "OIHW", "NCHW"))
        return y + b.reshape(1, -1, 1, 1)

    def gdn(x, g, be):
        d = jnp.einsum("cd,bdhw->bchw", g, x * x) + be.reshape(1, -1, 1, 1)
        return x * jax.lax.rsqrt(d)

    x = gdn(conv(x, raw["w1"], raw["b1"]), raw["g1"], raw["be1"])
    x = gdn(conv(x, raw["w2"], raw["b2"]), raw["g2"], raw["be2"])
    x = gdn(conv(x, raw["w3"], raw["b3"]), raw["g3"], raw["be3"])
    return conv(x, raw["w4"], raw["b4"])


# ----------------------------------- main --------------------------------------

if __name__ == "__main__":
    N_CH, M_CH = 8, 16         # small internal (N) and latent (M) channel counts
    B, H, W = 2, 64, 64

    key = jax.random.PRNGKey(0)
    ks = jax.random.split(key, 9)

    def conv_params(k, cout, cin):
        kw_, kb_ = jax.random.split(k)
        w = 0.1 * jax.random.normal(kw_, (cout, cin, 5, 5), jnp.float32)
        b = 0.01 * jax.random.normal(kb_, (cout,), jnp.float32)
        return w, b

    w1, b1 = conv_params(ks[0], N_CH, 3)
    w2, b2 = conv_params(ks[1], N_CH, N_CH)
    w3, b3 = conv_params(ks[2], N_CH, N_CH)
    w4, b4 = conv_params(ks[3], M_CH, N_CH)

    # CompressAI GDN default init: beta = 1, gamma = 0.1 * I
    def gdn_params(c):
        return 0.1 * jnp.eye(c, dtype=jnp.float32), jnp.ones((c,), jnp.float32)

    g1, be1 = gdn_params(N_CH)
    g2, be2 = gdn_params(N_CH)
    g3, be3 = gdn_params(N_CH)

    raw = dict(
        w1=w1, b1=b1, w2=w2, b2=b2, w3=w3, b3=b3, w4=w4, b4=b4,
        g1=g1, be1=be1, g2=g2, be2=be2, g3=g3, be3=be3,
    )
    pp = prepare_params(raw)   # one-time weight layout prep

    x = jax.random.normal(ks[8], (B, 3, H, W), jnp.float32)

    fwd = jax.jit(functools.partial(g_a_forward, pp))
    y = fwd(x)
    jax.block_until_ready(y)

    assert y.shape == (B, M_CH, H // 16, W // 16), y.shape
    assert bool(jnp.all(jnp.isfinite(y)))

    # Loose check vs. f32 XLA reference (kernel runs bf16 MXU ops, f32 accum).
    y_ref = g_a_reference(raw, x)
    err = float(jnp.max(jnp.abs(y - y_ref)))
    scale = float(jnp.max(jnp.abs(y_ref))) + 1e-6
    assert err / scale < 0.08, (err, scale)

    print("KERNEL_OK")
</pallas_src>

<mosaic_0001>
module attributes {stable_mosaic.version = 11 : i64} {
  func.func @_conv_gdn_kernel(%arg0: i32, %arg1: i32, %arg2: memref<1x1x34x12x34xbf16, #tpu.memory_space<vmem>>, %arg3: memref<9x8x12xbf16, #tpu.memory_space<vmem>>, %arg4: memref<8x1xf32, #tpu.memory_space<vmem>>, %arg5: memref<8x8xbf16, #tpu.memory_space<vmem>>, %arg6: memref<8x1xf32, #tpu.memory_space<vmem>>, %arg7: memref<1x32x8x32xbf16, #tpu.memory_space<vmem>>) attributes {dimension_semantics = [#tpu.dimension_semantics<parallel>, #tpu.dimension_semantics<parallel>], iteration_bounds = array<i64: 2, 1>, scalar_prefetch = 0 : i64, scratch_operands = 0 : i64, tpu.core_type = #tpu.core_type<tc>, window_params = [{transform_indices = @transform_0, window_bounds = array<i64: 1, 1, 34, 12, 34>}, {pipeline_mode = #tpu.pipeline_mode<synchronous>, transform_indices = @transform_1, window_bounds = array<i64: 9, 8, 12>}, {pipeline_mode = #tpu.pipeline_mode<synchronous>, transform_indices = @transform_2, window_bounds = array<i64: 8, 1>}, {pipeline_mode = #tpu.pipeline_mode<synchronous>, transform_indices = @transform_3, window_bounds = array<i64: 8, 8>}, {pipeline_mode = #tpu.pipeline_mode<synchronous>, transform_indices = @transform_4, window_bounds = array<i64: 8, 1>}, {transform_indices = @transform_5, window_bounds = array<i64: 1, 32, 8, 32>}]} {
    %c0_i32 = arith.constant 0 : i32
    %c32_i32 = arith.constant 32 : i32
    %0 = arith.addi %c0_i32, %c32_i32 : i32
    %c1_i32 = arith.constant 1 : i32
    scf.for %arg8 = %c0_i32 to %0 step %c1_i32  : i32 {
      %cst = arith.constant 0.000000e+00 : f32
      %1 = vector.broadcast %cst : f32 to vector<8x32xf32>
      %c0_i32_1 = arith.constant 0 : i32
      %2 = arith.addi %arg8, %c0_i32_1 : i32
      %c0 = arith.constant 0 : index
      %c0_2 = arith.constant 0 : index
      %3 = arith.index_cast %2 : i32 to index
      %c0_3 = arith.constant 0 : index
      %c0_4 = arith.constant 0 : index
      %4 = vector.load %arg2[%c0, %c0_2, %3, %c0_3, %c0_4] : memref<1x1x34x12x34xbf16, #tpu.memory_space<vmem>>, vector<1x1x1x12x34xbf16>
      %5 = vector.shape_cast %4 : vector<1x1x1x12x34xbf16> to vector<12x34xbf16>
      %c0_5 = arith.constant 0 : index
      %c0_6 = arith.constant 0 : index
      %c0_7 = arith.constant 0 : index
      %6 = vector.load %arg3[%c0_5, %c0_6, %c0_7] : memref<9x8x12xbf16, #tpu.memory_space<vmem>>, vector<1x8x12xbf16>
      %7 = vector.shape_cast %6 : vector<1x8x12xbf16> to vector<8x12xbf16>
      %8 = vector.extract_strided_slice %5 {offsets = [0, 0], sizes = [12, 32], strides = [1, 1]} : vector<12x34xbf16> to vector<12x32xbf16>
      %cst_8 = arith.constant dense<0.000000e+00> : vector<8x32xf32>
      %9 = tpu.matmul %7, %8, %cst_8 {dimension_numbers = #tpu.dot_dimension_numbers<[1], [0], [0], [1], [0, 0, 1, 1], [], []>} : vector<8x12xbf16>, vector<12x32xbf16>, vector<8x32xf32> -> vector<8x32xf32>
      %10 = arith.addf %1, %9 : vector<8x32xf32>
      %c1 = arith.constant 1 : index
      %c0_9 = arith.constant 0 : index
      %c0_10 = arith.constant 0 : index
      %11 = vector.load %arg3[%c1, %c0_9, %c0_10] : memref<9x8x12xbf16, #tpu.memory_space<vmem>>, vector<1x8x12xbf16>
      %12 = vector.shape_cast %11 : vector<1x8x12xbf16> to vector<8x12xbf16>
      %13 = vector.extract_strided_slice %5 {offsets = [0, 1], sizes = [12, 32], strides = [1, 1]} : vector<12x34xbf16> to vector<12x32xbf16>
      %cst_11 = arith.constant dense<0.000000e+00> : vector<8x32xf32>
      %14 = tpu.matmul %12, %13, %cst_11 {dimension_numbers = #tpu.dot_dimension_numbers<[1], [0], [0], [1], [0, 0, 1, 1], [], []>} : vector<8x12xbf16>, vector<12x32xbf16>, vector<8x32xf32> -> vector<8x32xf32>
      %15 = arith.addf %10, %14 : vector<8x32xf32>
      %c2 = arith.constant 2 : index
      %c0_12 = arith.constant 0 : index
      %c0_13 = arith.constant 0 : index
      %16 = vector.load %arg3[%c2, %c0_12, %c0_13] : memref<9x8x12xbf16, #tpu.memory_space<vmem>>, vector<1x8x12xbf16>
      %17 = vector.shape_cast %16 : vector<1x8x12xbf16> to vector<8x12xbf16>
      %18 = vector.extract_strided_slice %5 {offsets = [0, 2], sizes = [12, 32], strides = [1, 1]} : vector<12x34xbf16> to vector<12x32xbf16>
      %cst_14 = arith.constant dense<0.000000e+00> : vector<8x32xf32>
      %19 = tpu.matmul %17, %18, %cst_14 {dimension_numbers = #tpu.dot_dimension_numbers<[1], [0], [0], [1], [0, 0, 1, 1], [], []>} : vector<8x12xbf16>, vector<12x32xbf16>, vector<8x32xf32> -> vector<8x32xf32>
      %20 = arith.addf %15, %19 : vector<8x32xf32>
      %c1_i32_15 = arith.constant 1 : i32
      %21 = arith.addi %arg8, %c1_i32_15 : i32
      %c0_16 = arith.constant 0 : index
      %c0_17 = arith.constant 0 : index
      %22 = arith.index_cast %21 : i32 to index
      %c0_18 = arith.constant 0 : index
      %c0_19 = arith.constant 0 : index
      %23 = vector.load %arg2[%c0_16, %c0_17, %22, %c0_18, %c0_19] : memref<1x1x34x12x34xbf16, #tpu.memory_space<vmem>>, vector<1x1x1x12x34xbf16>
      %24 = vector.shape_cast %23 : vector<1x1x1x12x34xbf16> to vector<12x34xbf16>
      %c3 = arith.constant 3 : index
      %c0_20 = arith.constant 0 : index
      %c0_21 = arith.constant 0 : index
      %25 = vector.load %arg3[%c3, %c0_20, %c0_21] : memref<9x8x12xbf16, #tpu.memory_space<vmem>>, vector<1x8x12xbf16>
      %26 = vector.shape_cast %25 : vector<1x8x12xbf16> to vector<8x12xbf16>
      %27 = vector.extract_strided_slice %24 {offsets = [0, 0], sizes = [12, 32], strides = [1, 1]} : vector<12x34xbf16> to vector<12x32xbf16>
      %cst_22 = arith.constant dense<0.000000e+00> : vector<8x32xf32>
      %28 = tpu.matmul %26, %27, %cst_22 {dimension_numbers = #tpu.dot_dimension_numbers<[1], [0], [0], [1], [0, 0, 1, 1], [], []>} : vector<8x12xbf16>, vector<12x32xbf16>, vector<8x32xf32> -> vector<8x32xf32>
      %29 = arith.addf %20, %28 : vector<8x32xf32>
      %c4 = arith.constant 4 : index
      %c0_23 = arith.constant 0 : index
      %c0_24 = arith.constant 0 : index
      %30 = vector.load %arg3[%c4, %c0_23, %c0_24] : memref<9x8x12xbf16, #tpu.memory_space<vmem>>, vector<1x8x12xbf16>
      %31 = vector.shape_cast %30 : vector<1x8x12xbf16> to vector<8x12xbf16>
      %32 = vector.extract_strided_slice %24 {offsets = [0, 1], sizes = [12, 32], strides = [1, 1]} : vector<12x34xbf16> to vector<12x32xbf16>
      %cst_25 = arith.constant dense<0.000000e+00> : vector<8x32xf32>
      %33 = tpu.matmul %31, %32, %cst_25 {dimension_numbers = #tpu.dot_dimension_numbers<[1], [0], [0], [1], [0, 0, 1, 1], [], []>} : vector<8x12xbf16>, vector<12x32xbf16>, vector<8x32xf32> -> vector<8x32xf32>
      %34 = arith.addf %29, %33 : vector<8x32xf32>
      %c5 = arith.constant 5 : index
      %c0_26 = arith.constant 0 : index
      %c0_27 = arith.constant 0 : index
      %35 = vector.load %arg3[%c5, %c0_26, %c0_27] : memref<9x8x12xbf16, #tpu.memory_space<vmem>>, vector<1x8x12xbf16>
      %36 = vector.shape_cast %35 : vector<1x8x12xbf16> to vector<8x12xbf16>
      %37 = vector.extract_strided_slice %24 {offsets = [0, 2], sizes = [12, 32], strides = [1, 1]} : vector<12x34xbf16> to vector<12x32xbf16>
      %cst_28 = arith.constant dense<0.000000e+00> : vector<8x32xf32>
      %38 = tpu.matmul %36, %37, %cst_28 {dimension_numbers = #tpu.dot_dimension_numbers<[1], [0], [0], [1], [0, 0, 1, 1], [], []>} : vector<8x12xbf16>, vector<12x32xbf16>, vector<8x32xf32> -> vector<8x32xf32>
      %39 = arith.addf %34, %38 : vector<8x32xf32>
      %c2_i32 = arith.constant 2 : i32
      %40 = arith.addi %arg8, %c2_i32 : i32
      %c0_29 = arith.constant 0 : index
      %c0_30 = arith.constant 0 : index
      %41 = arith.index_cast %40 : i32 to index
      %c0_31 = arith.constant 0 : index
      %c0_32 = arith.constant 0 : index
      %42 = vector.load %arg2[%c0_29, %c0_30, %41, %c0_31, %c0_32] : memref<1x1x34x12x34xbf16, #tpu.memory_space<vmem>>, vector<1x1x1x12x34xbf16>
      %43 = vector.shape_cast %42 : vector<1x1x1x12x34xbf16> to vector<12x34xbf16>
      %c6 = arith.constant 6 : index
      %c0_33 = arith.constant 0 : index
      %c0_34 = arith.constant 0 : index
      %44 = vector.load %arg3[%c6, %c0_33, %c0_34] : memref<9x8x12xbf16, #tpu.memory_space<vmem>>, vector<1x8x12xbf16>
      %45 = vector.shape_cast %44 : vector<1x8x12xbf16> to vector<8x12xbf16>
      %46 = vector.extract_strided_slice %43 {offsets = [0, 0], sizes = [12, 32], strides = [1, 1]} : vector<12x34xbf16> to vector<12x32xbf16>
      %cst_35 = arith.constant dense<0.000000e+00> : vector<8x32xf32>
      %47 = tpu.matmul %45, %46, %cst_35 {dimension_numbers = #tpu.dot_dimension_numbers<[1], [0], [0], [1], [0, 0, 1, 1], [], []>} : vector<8x12xbf16>, vector<12x32xbf16>, vector<8x32xf32> -> vector<8x32xf32>
      %48 = arith.addf %39, %47 : vector<8x32xf32>
      %c7 = arith.constant 7 : index
      %c0_36 = arith.constant 0 : index
      %c0_37 = arith.constant 0 : index
      %49 = vector.load %arg3[%c7, %c0_36, %c0_37] : memref<9x8x12xbf16, #tpu.memory_space<vmem>>, vector<1x8x12xbf16>
      %50 = vector.shape_cast %49 : vector<1x8x12xbf16> to vector<8x12xbf16>
      %51 = vector.extract_strided_slice %43 {offsets = [0, 1], sizes = [12, 32], strides = [1, 1]} : vector<12x34xbf16> to vector<12x32xbf16>
      %cst_38 = arith.constant dense<0.000000e+00> : vector<8x32xf32>
      %52 = tpu.matmul %50, %51, %cst_38 {dimension_numbers = #tpu.dot_dimension_numbers<[1], [0], [0], [1], [0, 0, 1, 1], [], []>} : vector<8x12xbf16>, vector<12x32xbf16>, vector<8x32xf32> -> vector<8x32xf32>
      %53 = arith.addf %48, %52 : vector<8x32xf32>
      %c8 = arith.constant 8 : index
      %c0_39 = arith.constant 0 : index
      %c0_40 = arith.constant 0 : index
      %54 = vector.load %arg3[%c8, %c0_39, %c0_40] : memref<9x8x12xbf16, #tpu.memory_space<vmem>>, vector<1x8x12xbf16>
      %55 = vector.shape_cast %54 : vector<1x8x12xbf16> to vector<8x12xbf16>
      %56 = vector.extract_strided_slice %43 {offsets = [0, 2], sizes = [12, 32], strides = [1, 1]} : vector<12x34xbf16> to vector<12x32xbf16>
      %cst_41 = arith.constant dense<0.000000e+00> : vector<8x32xf32>
      %57 = tpu.matmul %55, %56, %cst_41 {dimension_numbers = #tpu.dot_dimension_numbers<[1], [0], [0], [1], [0, 0, 1, 1], [], []>} : vector<8x12xbf16>, vector<12x32xbf16>, vector<8x32xf32> -> vector<8x32xf32>
      %58 = arith.addf %53, %57 : vector<8x32xf32>
      %c0_42 = arith.constant 0 : index
      %c0_43 = arith.constant 0 : index
      %59 = vector.load %arg4[%c0_42, %c0_43] : memref<8x1xf32, #tpu.memory_space<vmem>>, vector<8x1xf32>
      %60 = vector.broadcast %59 : vector<8x1xf32> to vector<8x32xf32>
      %61 = arith.addf %58, %60 : vector<8x32xf32>
      %c0_44 = arith.constant 0 : index
      %c0_45 = arith.constant 0 : index
      %62 = vector.load %arg5[%c0_44, %c0_45] : memref<8x8xbf16, #tpu.memory_space<vmem>>, vector<8x8xbf16>
      %63 = arith.mulf %61, %61 : vector<8x32xf32>
      %64 = arith.truncf %63 : vector<8x32xf32> to vector<8x32xbf16>
      %cst_46 = arith.constant dense<0.000000e+00> : vector<8x32xf32>
      %65 = tpu.matmul %62, %64, %cst_46 {dimension_numbers = #tpu.dot_dimension_numbers<[1], [0], [0], [1], [0, 0, 1, 1], [], []>} : vector<8x8xbf16>, vector<8x32xbf16>, vector<8x32xf32> -> vector<8x32xf32>
      %c0_47 = arith.constant 0 : index
      %c0_48 = arith.constant 0 : index
      %66 = vector.load %arg6[%c0_47, %c0_48] : memref<8x1xf32, #tpu.memory_space<vmem>>, vector<8x1xf32>
      %67 = vector.broadcast %66 : vector<8x1xf32> to vector<8x32xf32>
      %68 = arith.addf %65, %67 : vector<8x32xf32>
      %69 = math.rsqrt %68 : vector<8x32xf32>
      %70 = arith.mulf %61, %69 : vector<8x32xf32>
      %71 = arith.truncf %70 : vector<8x32xf32> to vector<8x32xbf16>
      %c0_49 = arith.constant 0 : index
      %72 = arith.index_cast %arg8 : i32 to index
      %c0_50 = arith.constant 0 : index
      %c0_51 = arith.constant 0 : index
      %73 = vector.load %arg7[%c0_49, %72, %c0_50, %c0_51] : memref<1x32x8x32xbf16, #tpu.memory_space<vmem>>, vector<1x1x8x32xbf16>
      %74 = vector.shape_cast %73 : vector<1x1x8x32xbf16> to vector<8x32xbf16>
      %75 = vector.shape_cast %71 : vector<8x32xbf16> to vector<1x1x8x32xbf16>
      tpu.vector_store %arg7[%c0_49, %72, %c0_50, %c0_51], %75 {strides = array<i32>} : memref<1x32x8x32xbf16, #tpu.memory_space<vmem>>, vector<1x1x8x32xbf16>,
    }
    %c32_i32_0 = arith.constant 32 : i32
    return
  }
  func.func @transform_0(%arg0: i32, %arg1: i32) -> (i32, i32, i32, i32, i32) {
    %c0_i32 = arith.constant 0 : i32
    %c0_i32_0 = arith.constant 0 : i32
    %c0_i32_1 = arith.constant 0 : i32
    %c0_i32_2 = arith.constant 0 : i32
    return %arg0, %arg1, %c0_i32, %c0_i32_0, %c0_i32_1 : i32, i32, i32, i32, i32
  }
  func.func @transform_1(%arg0: i32, %arg1: i32) -> (i32, i32, i32) {
    %c0_i32 = arith.constant 0 : i32
    %c0_i32_0 = arith.constant 0 : i32
    %c0_i32_1 = arith.constant 0 : i32
    %c0_i32_2 = arith.constant 0 : i32
    return %c0_i32, %c0_i32_0, %c0_i32_1 : i32, i32, i32
  }
  func.func @transform_2(%arg0: i32, %arg1: i32) -> (i32, i32) {
    %c0_i32 = arith.constant 0 : i32
    %c0_i32_0 = arith.constant 0 : i32
    %c0_i32_1 = arith.constant 0 : i32
    return %c0_i32, %c0_i32_0 : i32, i32
  }
  func.func @transform_3(%arg0: i32, %arg1: i32) -> (i32, i32) {
    %c0_i32 = arith.constant 0 : i32
    %c0_i32_0 = arith.constant 0 : i32
    %c0_i32_1 = arith.constant 0 : i32
    return %c0_i32, %c0_i32_0 : i32, i32
  }
  func.func @transform_4(%arg0: i32, %arg1: i32) -> (i32, i32) {
    %c0_i32 = arith.constant 0 : i32
    %c0_i32_0 = arith.constant 0 : i32
    %c0_i32_1 = arith.constant 0 : i32
    return %c0_i32, %c0_i32_0 : i32, i32
  }
  func.func @transform_5(%arg0: i32, %arg1: i32) -> (i32, i32, i32, i32) {
    %c0_i32 = arith.constant 0 : i32
    %c0_i32_0 = arith.constant 0 : i32
    %c0_i32_1 = arith.constant 0 : i32
    return %arg0, %arg1, %c0_i32, %c0_i32_0 : i32, i32, i32, i32
  }
}

module attributes {stable_mosaic.version = 11 : i64} {
  func.func @_conv_gdn_kernel(%arg0: i32, %arg1: i32, %arg2: memref<1x1x18x32x18xbf16, #tpu.memory_space<vmem>>, %arg3: memref<9x8x32xbf16, #tpu.memory_space<vmem>>, %arg4: memref<8x1xf32, #tpu.memory_space<vmem>>, %arg5: memref<8x8xbf16, #tpu.memory_space<vmem>>, %arg6: memref<8x1xf32, #tpu.memory_space<vmem>>, %arg7: memref<1x16x8x16xbf16, #tpu.memory_space<vmem>>) attributes {dimension_semantics = [#tpu.dimension_semantics<parallel>, #tpu.dimension_semantics<parallel>], iteration_bounds = array<i64: 2, 1>, scalar_prefetch = 0 : i64, scratch_operands = 0 : i64, tpu.core_type = #tpu.core_type<tc>, window_params = [{transform_indices = @transform_0, window_bounds = array<i64: 1, 1, 18, 32, 18>}, {pipeline_mode = #tpu.pipeline_mode<synchronous>, transform_indices = @transform_1, window_bounds = array<i64: 9, 8, 32>}, {pipeline_mode = #tpu.pipeline_mode<synchronous>, transform_indices = @transform_2, window_bounds = array<i64: 8, 1>}, {pipeline_mode = #tpu.pipeline_mode<synchronous>, transform_indices = @transform_3, window_bounds = array<i64: 8, 8>}, {pipeline_mode = #tpu.pipeline_mode<synchronous>, transform_indices = @transform_4, window_bounds = array<i64: 8, 1>}, {transform_indices = @transform_5, window_bounds = array<i64: 1, 16, 8, 16>}]} {
    %c0_i32 = arith.constant 0 : i32
    %c16_i32 = arith.constant 16 : i32
    %0 = arith.addi %c0_i32, %c16_i32 : i32
    %c1_i32 = arith.constant 1 : i32
    scf.for %arg8 = %c0_i32 to %0 step %c1_i32  : i32 {
      %cst = arith.constant 0.000000e+00 : f32
      %1 = vector.broadcast %cst : f32 to vector<8x16xf32>
      %c0_i32_1 = arith.constant 0 : i32
      %2 = arith.addi %arg8, %c0_i32_1 : i32
      %c0 = arith.constant 0 : index
      %c0_2 = arith.constant 0 : index
      %3 = arith.index_cast %2 : i32 to index
      %c0_3 = arith.constant 0 : index
      %c0_4 = arith.constant 0 : index
      %4 = vector.load %arg2[%c0, %c0_2, %3, %c0_3, %c0_4] : memref<1x1x18x32x18xbf16, #tpu.memory_space<vmem>>, vector<1x1x1x32x18xbf16>
      %5 = vector.shape_cast %4 : vector<1x1x1x32x18xbf16> to vector<32x18xbf16>
      %c0_5 = arith.constant 0 : index
      %c0_6 = arith.constant 0 : index
      %c0_7 = arith.constant 0 : index
      %6 = vector.load %arg3[%c0_5, %c0_6, %c0_7] : memref<9x8x32xbf16, #tpu.memory_space<vmem>>, vector<1x8x32xbf16>
      %7 = vector.shape_cast %6 : vector<1x8x32xbf16> to vector<8x32xbf16>
      %8 = vector.extract_strided_slice %5 {offsets = [0, 0], sizes = [32, 16], strides = [1, 1]} : vector<32x18xbf16> to vector<32x16xbf16>
      %cst_8 = arith.constant dense<0.000000e+00> : vector<8x16xf32>
      %9 = tpu.matmul %7, %8, %cst_8 {dimension_numbers = #tpu.dot_dimension_numbers<[1], [0], [0], [1], [0, 0, 1, 1], [], []>} : vector<8x32xbf16>, vector<32x16xbf16>, vector<8x16xf32> -> vector<8x16xf32>
      %10 = arith.addf %1, %9 : vector<8x16xf32>
      %c1 = arith.constant 1 : index
      %c0_9 = arith.constant 0 : index
      %c0_10 = arith.constant 0 : index
      %11 = vector.load %arg3[%c1, %c0_9, %c0_10] : memref<9x8x32xbf16, #tpu.memory_space<vmem>>, vector<1x8x32xbf16>
      %12 = vector.shape_cast %11 : vector<1x8x32xbf16> to vector<8x32xbf16>
      %13 = vector.extract_strided_slice %5 {offsets = [0, 1], sizes = [32, 16], strides = [1, 1]} : vector<32x18xbf16> to vector<32x16xbf16>
      %cst_11 = arith.constant dense<0.000000e+00> : vector<8x16xf32>
      %14 = tpu.matmul %12, %13, %cst_11 {dimension_numbers = #tpu.dot_dimension_numbers<[1], [0], [0], [1], [0, 0, 1, 1], [], []>} : vector<8x32xbf16>, vector<32x16xbf16>, vector<8x16xf32> -> vector<8x16xf32>
      %15 = arith.addf %10, %14 : vector<8x16xf32>
      %c2 = arith.constant 2 : index
      %c0_12 = arith.constant 0 : index
      %c0_13 = arith.constant 0 : index
      %16 = vector.load %arg3[%c2, %c0_12, %c0_13] : memref<9x8x32xbf16, #tpu.memory_space<vmem>>, vector<1x8x32xbf16>
      %17 = vector.shape_cast %16 : vector<1x8x32xbf16> to vector<8x32xbf16>
      %18 = vector.extract_strided_slice %5 {offsets = [0, 2], sizes = [32, 16], strides = [1, 1]} : vector<32x18xbf16> to vector<32x16xbf16>
      %cst_14 = arith.constant dense<0.000000e+00> : vector<8x16xf32>
      %19 = tpu.matmul %17, %18, %cst_14 {dimension_numbers = #tpu.dot_dimension_numbers<[1], [0], [0], [1], [0, 0, 1, 1], [], []>} : vector<8x32xbf16>, vector<32x16xbf16>, vector<8x16xf32> -> vector<8x16xf32>
      %20 = arith.addf %15, %19 : vector<8x16xf32>
      %c1_i32_15 = arith.constant 1 : i32
      %21 = arith.addi %arg8, %c1_i32_15 : i32
      %c0_16 = arith.constant 0 : index
      %c0_17 = arith.constant 0 : index
      %22 = arith.index_cast %21 : i32 to index
      %c0_18 = arith.constant 0 : index
      %c0_19 = arith.constant 0 : index
      %23 = vector.load %arg2[%c0_16, %c0_17, %22, %c0_18, %c0_19] : memref<1x1x18x32x18xbf16, #tpu.memory_space<vmem>>, vector<1x1x1x32x18xbf16>
      %24 = vector.shape_cast %23 : vector<1x1x1x32x18xbf16> to vector<32x18xbf16>
      %c3 = arith.constant 3 : index
      %c0_20 = arith.constant 0 : index
      %c0_21 = arith.constant 0 : index
      %25 = vector.load %arg3[%c3, %c0_20, %c0_21] : memref<9x8x32xbf16, #tpu.memory_space<vmem>>, vector<1x8x32xbf16>
      %26 = vector.shape_cast %25 : vector<1x8x32xbf16> to vector<8x32xbf16>
      %27 = vector.extract_strided_slice %24 {offsets = [0, 0], sizes = [32, 16], strides = [1, 1]} : vector<32x18xbf16> to vector<32x16xbf16>
      %cst_22 = arith.constant dense<0.000000e+00> : vector<8x16xf32>
      %28 = tpu.matmul %26, %27, %cst_22 {dimension_numbers = #tpu.dot_dimension_numbers<[1], [0], [0], [1], [0, 0, 1, 1], [], []>} : vector<8x32xbf16>, vector<32x16xbf16>, vector<8x16xf32> -> vector<8x16xf32>
      %29 = arith.addf %20, %28 : vector<8x16xf32>
      %c4 = arith.constant 4 : index
      %c0_23 = arith.constant 0 : index
      %c0_24 = arith.constant 0 : index
      %30 = vector.load %arg3[%c4, %c0_23, %c0_24] : memref<9x8x32xbf16, #tpu.memory_space<vmem>>, vector<1x8x32xbf16>
      %31 = vector.shape_cast %30 : vector<1x8x32xbf16> to vector<8x32xbf16>
      %32 = vector.extract_strided_slice %24 {offsets = [0, 1], sizes = [32, 16], strides = [1, 1]} : vector<32x18xbf16> to vector<32x16xbf16>
      %cst_25 = arith.constant dense<0.000000e+00> : vector<8x16xf32>
      %33 = tpu.matmul %31, %32, %cst_25 {dimension_numbers = #tpu.dot_dimension_numbers<[1], [0], [0], [1], [0, 0, 1, 1], [], []>} : vector<8x32xbf16>, vector<32x16xbf16>, vector<8x16xf32> -> vector<8x16xf32>
      %34 = arith.addf %29, %33 : vector<8x16xf32>
      %c5 = arith.constant 5 : index
      %c0_26 = arith.constant 0 : index
      %c0_27 = arith.constant 0 : index
      %35 = vector.load %arg3[%c5, %c0_26, %c0_27] : memref<9x8x32xbf16, #tpu.memory_space<vmem>>, vector<1x8x32xbf16>
      %36 = vector.shape_cast %35 : vector<1x8x32xbf16> to vector<8x32xbf16>
      %37 = vector.extract_strided_slice %24 {offsets = [0, 2], sizes = [32, 16], strides = [1, 1]} : vector<32x18xbf16> to vector<32x16xbf16>
      %cst_28 = arith.constant dense<0.000000e+00> : vector<8x16xf32>
      %38 = tpu.matmul %36, %37, %cst_28 {dimension_numbers = #tpu.dot_dimension_numbers<[1], [0], [0], [1], [0, 0, 1, 1], [], []>} : vector<8x32xbf16>, vector<32x16xbf16>, vector<8x16xf32> -> vector<8x16xf32>
      %39 = arith.addf %34, %38 : vector<8x16xf32>
      %c2_i32 = arith.constant 2 : i32
      %40 = arith.addi %arg8, %c2_i32 : i32
      %c0_29 = arith.constant 0 : index
      %c0_30 = arith.constant 0 : index
      %41 = arith.index_cast %40 : i32 to index
      %c0_31 = arith.constant 0 : index
      %c0_32 = arith.constant 0 : index
      %42 = vector.load %arg2[%c0_29, %c0_30, %41, %c0_31, %c0_32] : memref<1x1x18x32x18xbf16, #tpu.memory_space<vmem>>, vector<1x1x1x32x18xbf16>
      %43 = vector.shape_cast %42 : vector<1x1x1x32x18xbf16> to vector<32x18xbf16>
      %c6 = arith.constant 6 : index
      %c0_33 = arith.constant 0 : index
      %c0_34 = arith.constant 0 : index
      %44 = vector.load %arg3[%c6, %c0_33, %c0_34] : memref<9x8x32xbf16, #tpu.memory_space<vmem>>, vector<1x8x32xbf16>
      %45 = vector.shape_cast %44 : vector<1x8x32xbf16> to vector<8x32xbf16>
      %46 = vector.extract_strided_slice %43 {offsets = [0, 0], sizes = [32, 16], strides = [1, 1]} : vector<32x18xbf16> to vector<32x16xbf16>
      %cst_35 = arith.constant dense<0.000000e+00> : vector<8x16xf32>
      %47 = tpu.matmul %45, %46, %cst_35 {dimension_numbers = #tpu.dot_dimension_numbers<[1], [0], [0], [1], [0, 0, 1, 1], [], []>} : vector<8x32xbf16>, vector<32x16xbf16>, vector<8x16xf32> -> vector<8x16xf32>
      %48 = arith.addf %39, %47 : vector<8x16xf32>
      %c7 = arith.constant 7 : index
      %c0_36 = arith.constant 0 : index
      %c0_37 = arith.constant 0 : index
      %49 = vector.load %arg3[%c7, %c0_36, %c0_37] : memref<9x8x32xbf16, #tpu.memory_space<vmem>>, vector<1x8x32xbf16>
      %50 = vector.shape_cast %49 : vector<1x8x32xbf16> to vector<8x32xbf16>
      %51 = vector.extract_strided_slice %43 {offsets = [0, 1], sizes = [32, 16], strides = [1, 1]} : vector<32x18xbf16> to vector<32x16xbf16>
      %cst_38 = arith.constant dense<0.000000e+00> : vector<8x16xf32>
      %52 = tpu.matmul %50, %51, %cst_38 {dimension_numbers = #tpu.dot_dimension_numbers<[1], [0], [0], [1], [0, 0, 1, 1], [], []>} : vector<8x32xbf16>, vector<32x16xbf16>, vector<8x16xf32> -> vector<8x16xf32>
      %53 = arith.addf %48, %52 : vector<8x16xf32>
      %c8 = arith.constant 8 : index
      %c0_39 = arith.constant 0 : index
      %c0_40 = arith.constant 0 : index
      %54 = vector.load %arg3[%c8, %c0_39, %c0_40] : memref<9x8x32xbf16, #tpu.memory_space<vmem>>, vector<1x8x32xbf16>
      %55 = vector.shape_cast %54 : vector<1x8x32xbf16> to vector<8x32xbf16>
      %56 = vector.extract_strided_slice %43 {offsets = [0, 2], sizes = [32, 16], strides = [1, 1]} : vector<32x18xbf16> to vector<32x16xbf16>
      %cst_41 = arith.constant dense<0.000000e+00> : vector<8x16xf32>
      %57 = tpu.matmul %55, %56, %cst_41 {dimension_numbers = #tpu.dot_dimension_numbers<[1], [0], [0], [1], [0, 0, 1, 1], [], []>} : vector<8x32xbf16>, vector<32x16xbf16>, vector<8x16xf32> -> vector<8x16xf32>
      %58 = arith.addf %53, %57 : vector<8x16xf32>
      %c0_42 = arith.constant 0 : index
      %c0_43 = arith.constant 0 : index
      %59 = vector.load %arg4[%c0_42, %c0_43] : memref<8x1xf32, #tpu.memory_space<vmem>>, vector<8x1xf32>
      %60 = vector.broadcast %59 : vector<8x1xf32> to vector<8x16xf32>
      %61 = arith.addf %58, %60 : vector<8x16xf32>
      %c0_44 = arith.constant 0 : index
      %c0_45 = arith.constant 0 : index
      %62 = vector.load %arg5[%c0_44, %c0_45] : memref<8x8xbf16, #tpu.memory_space<vmem>>, vector<8x8xbf16>
      %63 = arith.mulf %61, %61 : vector<8x16xf32>
      %64 = arith.truncf %63 : vector<8x16xf32> to vector<8x16xbf16>
      %cst_46 = arith.constant dense<0.000000e+00> : vector<8x16xf32>
      %65 = tpu.matmul %62, %64, %cst_46 {dimension_numbers = #tpu.dot_dimension_numbers<[1], [0], [0], [1], [0, 0, 1, 1], [], []>} : vector<8x8xbf16>, vector<8x16xbf16>, vector<8x16xf32> -> vector<8x16xf32>
      %c0_47 = arith.constant 0 : index
      %c0_48 = arith.constant 0 : index
      %66 = vector.load %arg6[%c0_47, %c0_48] : memref<8x1xf32, #tpu.memory_space<vmem>>, vector<8x1xf32>
      %67 = vector.broadcast %66 : vector<8x1xf32> to vector<8x16xf32>
      %68 = arith.addf %65, %67 : vector<8x16xf32>
      %69 = math.rsqrt %68 : vector<8x16xf32>
      %70 = arith.mulf %61, %69 : vector<8x16xf32>
      %71 = arith.truncf %70 : vector<8x16xf32> to vector<8x16xbf16>
      %c0_49 = arith.constant 0 : index
      %72 = arith.index_cast %arg8 : i32 to index
      %c0_50 = arith.constant 0 : index
      %c0_51 = arith.constant 0 : index
      %73 = vector.load %arg7[%c0_49, %72, %c0_50, %c0_51] : memref<1x16x8x16xbf16, #tpu.memory_space<vmem>>, vector<1x1x8x16xbf16>
      %74 = vector.shape_cast %73 : vector<1x1x8x16xbf16> to vector<8x16xbf16>
      %75 = vector.shape_cast %71 : vector<8x16xbf16> to vector<1x1x8x16xbf16>
      tpu.vector_store %arg7[%c0_49, %72, %c0_50, %c0_51], %75 {strides = array<i32>} : memref<1x16x8x16xbf16, #tpu.memory_space<vmem>>, vector<1x1x8x16xbf16>,
    }
    %c16_i32_0 = arith.constant 16 : i32
    return
  }
  func.func @transform_0(%arg0: i32, %arg1: i32) -> (i32, i32, i32, i32, i32) {
    %c0_i32 = arith.constant 0 : i32
    %c0_i32_0 = arith.constant 0 : i32
    %c0_i32_1 = arith.constant 0 : i32
    %c0_i32_2 = arith.constant 0 : i32
    return %arg0, %arg1, %c0_i32, %c0_i32_0, %c0_i32_1 : i32, i32, i32, i32, i32
  }
  func.func @transform_1(%arg0: i32, %arg1: i32) -> (i32, i32, i32) {
    %c0_i32 = arith.constant 0 : i32
    %c0_i32_0 = arith.constant 0 : i32
    %c0_i32_1 = arith.constant 0 : i32
    %c0_i32_2 = arith.constant 0 : i32
    return %c0_i32, %c0_i32_0, %c0_i32_1 : i32, i32, i32
  }
  func.func @transform_2(%arg0: i32, %arg1: i32) -> (i32, i32) {
    %c0_i32 = arith.constant 0 : i32
    %c0_i32_0 = arith.constant 0 : i32
    %c0_i32_1 = arith.constant 0 : i32
    return %c0_i32, %c0_i32_0 : i32, i32
  }
  func.func @transform_3(%arg0: i32, %arg1: i32) -> (i32, i32) {
    %c0_i32 = arith.constant 0 : i32
    %c0_i32_0 = arith.constant 0 : i32
    %c0_i32_1 = arith.constant 0 : i32
    return %c0_i32, %c0_i32_0 : i32, i32
  }
  func.func @transform_4(%arg0: i32, %arg1: i32) -> (i32, i32) {
    %c0_i32 = arith.constant 0 : i32
    %c0_i32_0 = arith.constant 0 : i32
    %c0_i32_1 = arith.constant 0 : i32
    return %c0_i32, %c0_i32_0 : i32, i32
  }
  func.func @transform_5(%arg0: i32, %arg1: i32) -> (i32, i32, i32, i32) {
    %c0_i32 = arith.constant 0 : i32
    %c0_i32_0 = arith.constant 0 : i32
    %c0_i32_1 = arith.constant 0 : i32
    return %arg0, %arg1, %c0_i32, %c0_i32_0 : i32, i32, i32, i32
  }
}

module attributes {stable_mosaic.version = 11 : i64} {
  func.func @_conv_gdn_kernel(%arg0: i32, %arg1: i32, %arg2: memref<1x1x10x32x10xbf16, #tpu.memory_space<vmem>>, %arg3: memref<9x8x32xbf16, #tpu.memory_space<vmem>>, %arg4: memref<8x1xf32, #tpu.memory_space<vmem>>, %arg5: memref<8x8xbf16, #tpu.memory_space<vmem>>, %arg6: memref<8x1xf32, #tpu.memory_space<vmem>>, %arg7: memref<1x8x8x8xbf16, #tpu.memory_space<vmem>>) attributes {dimension_semantics = [#tpu.dimension_semantics<parallel>, #tpu.dimension_semantics<parallel>], iteration_bounds = array<i64: 2, 1>, scalar_prefetch = 0 : i64, scratch_operands = 0 : i64, tpu.core_type = #tpu.core_type<tc>, window_params = [{transform_indices = @transform_0, window_bounds = array<i64: 1, 1, 10, 32, 10>}, {pipeline_mode = #tpu.pipeline_mode<synchronous>, transform_indices = @transform_1, window_bounds = array<i64: 9, 8, 32>}, {pipeline_mode = #tpu.pipeline_mode<synchronous>, transform_indices = @transform_2, window_bounds = array<i64: 8, 1>}, {pipeline_mode = #tpu.pipeline_mode<synchronous>, transform_indices = @transform_3, window_bounds = array<i64: 8, 8>}, {pipeline_mode = #tpu.pipeline_mode<synchronous>, transform_indices = @transform_4, window_bounds = array<i64: 8, 1>}, {transform_indices = @transform_5, window_bounds = array<i64: 1, 8, 8, 8>}]} {
    %c0_i32 = arith.constant 0 : i32
    %c8_i32 = arith.constant 8 : i32
    %0 = arith.addi %c0_i32, %c8_i32 : i32
    %c1_i32 = arith.constant 1 : i32
    scf.for %arg8 = %c0_i32 to %0 step %c1_i32  : i32 {
      %cst = arith.constant 0.000000e+00 : f32
      %1 = vector.broadcast %cst : f32 to vector<8x8xf32>
      %c0_i32_1 = arith.constant 0 : i32
      %2 = arith.addi %arg8, %c0_i32_1 : i32
      %c0 = arith.constant 0 : index
      %c0_2 = arith.constant 0 : index
      %3 = arith.index_cast %2 : i32 to index
      %c0_3 = arith.constant 0 : index
      %c0_4 = arith.constant 0 : index
      %4 = vector.load %arg2[%c0, %c0_2, %3, %c0_3, %c0_4] : memref<1x1x10x32x10xbf16, #tpu.memory_space<vmem>>, vector<1x1x1x32x10xbf16>
      %5 = vector.shape_cast %4 : vector<1x1x1x32x10xbf16> to vector<32x10xbf16>
      %c0_5 = arith.constant 0 : index
      %c0_6 = arith.constant 0 : index
      %c0_7 = arith.constant 0 : index
      %6 = vector.load %arg3[%c0_5, %c0_6, %c0_7] : memref<9x8x32xbf16, #tpu.memory_space<vmem>>, vector<1x8x32xbf16>
      %7 = vector.shape_cast %6 : vector<1x8x32xbf16> to vector<8x32xbf16>
      %8 = vector.extract_strided_slice %5 {offsets = [0, 0], sizes = [32, 8], strides = [1, 1]} : vector<32x10xbf16> to vector<32x8xbf16>
      %cst_8 = arith.constant dense<0.000000e+00> : vector<8x8xf32>
      %9 = tpu.matmul %7, %8, %cst_8 {dimension_numbers = #tpu.dot_dimension_numbers<[1], [0], [0], [1], [0, 0, 1, 1], [], []>} : vector<8x32xbf16>, vector<32x8xbf16>, vector<8x8xf32> -> vector<8x8xf32>
      %10 = arith.addf %1, %9 : vector<8x8xf32>
      %c1 = arith.constant 1 : index
      %c0_9 = arith.constant 0 : index
      %c0_10 = arith.constant 0 : index
      %11 = vector.load %arg3[%c1, %c0_9, %c0_10] : memref<9x8x32xbf16, #tpu.memory_space<vmem>>, vector<1x8x32xbf16>
      %12 = vector.shape_cast %11 : vector<1x8x32xbf16> to vector<8x32xbf16>
      %13 = vector.extract_strided_slice %5 {offsets = [0, 1], sizes = [32, 8], strides = [1, 1]} : vector<32x10xbf16> to vector<32x8xbf16>
      %cst_11 = arith.constant dense<0.000000e+00> : vector<8x8xf32>
      %14 = tpu.matmul %12, %13, %cst_11 {dimension_numbers = #tpu.dot_dimension_numbers<[1], [0], [0], [1], [0, 0, 1, 1], [], []>} : vector<8x32xbf16>, vector<32x8xbf16>, vector<8x8xf32> -> vector<8x8xf32>
      %15 = arith.addf %10, %14 : vector<8x8xf32>
      %c2 = arith.constant 2 : index
      %c0_12 = arith.constant 0 : index
      %c0_13 = arith.constant 0 : index
      %16 = vector.load %arg3[%c2, %c0_12, %c0_13] : memref<9x8x32xbf16, #tpu.memory_space<vmem>>, vector<1x8x32xbf16>
      %17 = vector.shape_cast %16 : vector<1x8x32xbf16> to vector<8x32xbf16>
      %18 = vector.extract_strided_slice %5 {offsets = [0, 2], sizes = [32, 8], strides = [1, 1]} : vector<32x10xbf16> to vector<32x8xbf16>
      %cst_14 = arith.constant dense<0.000000e+00> : vector<8x8xf32>
      %19 = tpu.matmul %17, %18, %cst_14 {dimension_numbers = #tpu.dot_dimension_numbers<[1], [0], [0], [1], [0, 0, 1, 1], [], []>} : vector<8x32xbf16>, vector<32x8xbf16>, vector<8x8xf32> -> vector<8x8xf32>
      %20 = arith.addf %15, %19 : vector<8x8xf32>
      %c1_i32_15 = arith.constant 1 : i32
      %21 = arith.addi %arg8, %c1_i32_15 : i32
      %c0_16 = arith.constant 0 : index
      %c0_17 = arith.constant 0 : index
      %22 = arith.index_cast %21 : i32 to index
      %c0_18 = arith.constant 0 : index
      %c0_19 = arith.constant 0 : index
      %23 = vector.load %arg2[%c0_16, %c0_17, %22, %c0_18, %c0_19] : memref<1x1x10x32x10xbf16, #tpu.memory_space<vmem>>, vector<1x1x1x32x10xbf16>
      %24 = vector.shape_cast %23 : vector<1x1x1x32x10xbf16> to vector<32x10xbf16>
      %c3 = arith.constant 3 : index
      %c0_20 = arith.constant 0 : index
      %c0_21 = arith.constant 0 : index
      %25 = vector.load %arg3[%c3, %c0_20, %c0_21] : memref<9x8x32xbf16, #tpu.memory_space<vmem>>, vector<1x8x32xbf16>
      %26 = vector.shape_cast %25 : vector<1x8x32xbf16> to vector<8x32xbf16>
      %27 = vector.extract_strided_slice %24 {offsets = [0, 0], sizes = [32, 8], strides = [1, 1]} : vector<32x10xbf16> to vector<32x8xbf16>
      %cst_22 = arith.constant dense<0.000000e+00> : vector<8x8xf32>
      %28 = tpu.matmul %26, %27, %cst_22 {dimension_numbers = #tpu.dot_dimension_numbers<[1], [0], [0], [1], [0, 0, 1, 1], [], []>} : vector<8x32xbf16>, vector<32x8xbf16>, vector<8x8xf32> -> vector<8x8xf32>
      %29 = arith.addf %20, %28 : vector<8x8xf32>
      %c4 = arith.constant 4 : index
      %c0_23 = arith.constant 0 : index
      %c0_24 = arith.constant 0 : index
      %30 = vector.load %arg3[%c4, %c0_23, %c0_24] : memref<9x8x32xbf16, #tpu.memory_space<vmem>>, vector<1x8x32xbf16>
      %31 = vector.shape_cast %30 : vector<1x8x32xbf16> to vector<8x32xbf16>
      %32 = vector.extract_strided_slice %24 {offsets = [0, 1], sizes = [32, 8], strides = [1, 1]} : vector<32x10xbf16> to vector<32x8xbf16>
      %cst_25 = arith.constant dense<0.000000e+00> : vector<8x8xf32>
      %33 = tpu.matmul %31, %32, %cst_25 {dimension_numbers = #tpu.dot_dimension_numbers<[1], [0], [0], [1], [0, 0, 1, 1], [], []>} : vector<8x32xbf16>, vector<32x8xbf16>, vector<8x8xf32> -> vector<8x8xf32>
      %34 = arith.addf %29, %33 : vector<8x8xf32>
      %c5 = arith.constant 5 : index
      %c0_26 = arith.constant 0 : index
      %c0_27 = arith.constant 0 : index
      %35 = vector.load %arg3[%c5, %c0_26, %c0_27] : memref<9x8x32xbf16, #tpu.memory_space<vmem>>, vector<1x8x32xbf16>
      %36 = vector.shape_cast %35 : vector<1x8x32xbf16> to vector<8x32xbf16>
      %37 = vector.extract_strided_slice %24 {offsets = [0, 2], sizes = [32, 8], strides = [1, 1]} : vector<32x10xbf16> to vector<32x8xbf16>
      %cst_28 = arith.constant dense<0.000000e+00> : vector<8x8xf32>
      %38 = tpu.matmul %36, %37, %cst_28 {dimension_numbers = #tpu.dot_dimension_numbers<[1], [0], [0], [1], [0, 0, 1, 1], [], []>} : vector<8x32xbf16>, vector<32x8xbf16>, vector<8x8xf32> -> vector<8x8xf32>
      %39 = arith.addf %34, %38 : vector<8x8xf32>
      %c2_i32 = arith.constant 2 : i32
      %40 = arith.addi %arg8, %c2_i32 : i32
      %c0_29 = arith.constant 0 : index
      %c0_30 = arith.constant 0 : index
      %41 = arith.index_cast %40 : i32 to index
      %c0_31 = arith.constant 0 : index
      %c0_32 = arith.constant 0 : index
      %42 = vector.load %arg2[%c0_29, %c0_30, %41, %c0_31, %c0_32] : memref<1x1x10x32x10xbf16, #tpu.memory_space<vmem>>, vector<1x1x1x32x10xbf16>
      %43 = vector.shape_cast %42 : vector<1x1x1x32x10xbf16> to vector<32x10xbf16>
      %c6 = arith.constant 6 : index
      %c0_33 = arith.constant 0 : index
      %c0_34 = arith.constant 0 : index
      %44 = vector.load %arg3[%c6, %c0_33, %c0_34] : memref<9x8x32xbf16, #tpu.memory_space<vmem>>, vector<1x8x32xbf16>
      %45 = vector.shape_cast %44 : vector<1x8x32xbf16> to vector<8x32xbf16>
      %46 = vector.extract_strided_slice %43 {offsets = [0, 0], sizes = [32, 8], strides = [1, 1]} : vector<32x10xbf16> to vector<32x8xbf16>
      %cst_35 = arith.constant dense<0.000000e+00> : vector<8x8xf32>
      %47 = tpu.matmul %45, %46, %cst_35 {dimension_numbers = #tpu.dot_dimension_numbers<[1], [0], [0], [1], [0, 0, 1, 1], [], []>} : vector<8x32xbf16>, vector<32x8xbf16>, vector<8x8xf32> -> vector<8x8xf32>
      %48 = arith.addf %39, %47 : vector<8x8xf32>
      %c7 = arith.constant 7 : index
      %c0_36 = arith.constant 0 : index
      %c0_37 = arith.constant 0 : index
      %49 = vector.load %arg3[%c7, %c0_36, %c0_37] : memref<9x8x32xbf16, #tpu.memory_space<vmem>>, vector<1x8x32xbf16>
      %50 = vector.shape_cast %49 : vector<1x8x32xbf16> to vector<8x32xbf16>
      %51 = vector.extract_strided_slice %43 {offsets = [0, 1], sizes = [32, 8], strides = [1, 1]} : vector<32x10xbf16> to vector<32x8xbf16>
      %cst_38 = arith.constant dense<0.000000e+00> : vector<8x8xf32>
      %52 = tpu.matmul %50, %51, %cst_38 {dimension_numbers = #tpu.dot_dimension_numbers<[1], [0], [0], [1], [0, 0, 1, 1], [], []>} : vector<8x32xbf16>, vector<32x8xbf16>, vector<8x8xf32> -> vector<8x8xf32>
      %53 = arith.addf %48, %52 : vector<8x8xf32>
      %c8 = arith.constant 8 : index
      %c0_39 = arith.constant 0 : index
      %c0_40 = arith.constant 0 : index
      %54 = vector.load %arg3[%c8, %c0_39, %c0_40] : memref<9x8x32xbf16, #tpu.memory_space<vmem>>, vector<1x8x32xbf16>
      %55 = vector.shape_cast %54 : vector<1x8x32xbf16> to vector<8x32xbf16>
      %56 = vector.extract_strided_slice %43 {offsets = [0, 2], sizes = [32, 8], strides = [1, 1]} : vector<32x10xbf16> to vector<32x8xbf16>
      %cst_41 = arith.constant dense<0.000000e+00> : vector<8x8xf32>
      %57 = tpu.matmul %55, %56, %cst_41 {dimension_numbers = #tpu.dot_dimension_numbers<[1], [0], [0], [1], [0, 0, 1, 1], [], []>} : vector<8x32xbf16>, vector<32x8xbf16>, vector<8x8xf32> -> vector<8x8xf32>
      %58 = arith.addf %53, %57 : vector<8x8xf32>
      %c0_42 = arith.constant 0 : index
      %c0_43 = arith.constant 0 : index
      %59 = vector.load %arg4[%c0_42, %c0_43] : memref<8x1xf32, #tpu.memory_space<vmem>>, vector<8x1xf32>
      %60 = vector.broadcast %59 : vector<8x1xf32> to vector<8x8xf32>
      %61 = arith.addf %58, %60 : vector<8x8xf32>
      %c0_44 = arith.constant 0 : index
      %c0_45 = arith.constant 0 : index
      %62 = vector.load %arg5[%c0_44, %c0_45] : memref<8x8xbf16, #tpu.memory_space<vmem>>, vector<8x8xbf16>
      %63 = arith.mulf %61, %61 : vector<8x8xf32>
      %64 = arith.truncf %63 : vector<8x8xf32> to vector<8x8xbf16>
      %cst_46 = arith.constant dense<0.000000e+00> : vector<8x8xf32>
      %65 = tpu.matmul %62, %64, %cst_46 {dimension_numbers = #tpu.dot_dimension_numbers<[1], [0], [0], [1], [0, 0, 1, 1], [], []>} : vector<8x8xbf16>, vector<8x8xbf16>, vector<8x8xf32> -> vector<8x8xf32>
      %c0_47 = arith.constant 0 : index
      %c0_48 = arith.constant 0 : index
      %66 = vector.load %arg6[%c0_47, %c0_48] : memref<8x1xf32, #tpu.memory_space<vmem>>, vector<8x1xf32>
      %67 = vector.broadcast %66 : vector<8x1xf32> to vector<8x8xf32>
      %68 = arith.addf %65, %67 : vector<8x8xf32>
      %69 = math.rsqrt %68 : vector<8x8xf32>
      %70 = arith.mulf %61, %69 : vector<8x8xf32>
      %71 = arith.truncf %70 : vector<8x8xf32> to vector<8x8xbf16>
      %c0_49 = arith.constant 0 : index
      %72 = arith.index_cast %arg8 : i32 to index
      %c0_50 = arith.constant 0 : index
      %c0_51 = arith.constant 0 : index
      %73 = vector.load %arg7[%c0_49, %72, %c0_50, %c0_51] : memref<1x8x8x8xbf16, #tpu.memory_space<vmem>>, vector<1x1x8x8xbf16>
      %74 = vector.shape_cast %73 : vector<1x1x8x8xbf16> to vector<8x8xbf16>
      %75 = vector.shape_cast %71 : vector<8x8xbf16> to vector<1x1x8x8xbf16>
      tpu.vector_store %arg7[%c0_49, %72, %c0_50, %c0_51], %75 {strides = array<i32>} : memref<1x8x8x8xbf16, #tpu.memory_space<vmem>>, vector<1x1x8x8xbf16>,
    }
    %c8_i32_0 = arith.constant 8 : i32
    return
  }
  func.func @transform_0(%arg0: i32, %arg1: i32) -> (i32, i32, i32, i32, i32) {
    %c0_i32 = arith.constant 0 : i32
    %c0_i32_0 = arith.constant 0 : i32
    %c0_i32_1 = arith.constant 0 : i32
    %c0_i32_2 = arith.constant 0 : i32
    return %arg0, %arg1, %c0_i32, %c0_i32_0, %c0_i32_1 : i32, i32, i32, i32, i32
  }
  func.func @transform_1(%arg0: i32, %arg1: i32) -> (i32, i32, i32) {
    %c0_i32 = arith.constant 0 : i32
    %c0_i32_0 = arith.constant 0 : i32
    %c0_i32_1 = arith.constant 0 : i32
    %c0_i32_2 = arith.constant 0 : i32
    return %c0_i32, %c0_i32_0, %c0_i32_1 : i32, i32, i32
  }
  func.func @transform_2(%arg0: i32, %arg1: i32) -> (i32, i32) {
    %c0_i32 = arith.constant 0 : i32
    %c0_i32_0 = arith.constant 0 : i32
    %c0_i32_1 = arith.constant 0 : i32
    return %c0_i32, %c0_i32_0 : i32, i32
  }
  func.func @transform_3(%arg0: i32, %arg1: i32) -> (i32, i32) {
    %c0_i32 = arith.constant 0 : i32
    %c0_i32_0 = arith.constant 0 : i32
    %c0_i32_1 = arith.constant 0 : i32
    return %c0_i32, %c0_i32_0 : i32, i32
  }
  func.func @transform_4(%arg0: i32, %arg1: i32) -> (i32, i32) {
    %c0_i32 = arith.constant 0 : i32
    %c0_i32_0 = arith.constant 0 : i32
    %c0_i32_1 = arith.constant 0 : i32
    return %c0_i32, %c0_i32_0 : i32, i32
  }
  func.func @transform_5(%arg0: i32, %arg1: i32) -> (i32, i32, i32, i32) {
    %c0_i32 = arith.constant 0 : i32
    %c0_i32_0 = arith.constant 0 : i32
    %c0_i32_1 = arith.constant 0 : i32
    return %arg0, %arg1, %c0_i32, %c0_i32_0 : i32, i32, i32, i32
  }
}

module attributes {stable_mosaic.version = 11 : i64} {
  func.func @_conv_kernel(%arg0: i32, %arg1: i32, %arg2: memref<1x1x6x32x6xbf16, #tpu.memory_space<vmem>>, %arg3: memref<9x16x32xbf16, #tpu.memory_space<vmem>>, %arg4: memref<16x1xf32, #tpu.memory_space<vmem>>, %arg5: memref<1x4x16x4xf32, #tpu.memory_space<vmem>>) attributes {dimension_semantics = [#tpu.dimension_semantics<parallel>, #tpu.dimension_semantics<parallel>], iteration_bounds = array<i64: 2, 1>, scalar_prefetch = 0 : i64, scratch_operands = 0 : i64, tpu.core_type = #tpu.core_type<tc>, window_params = [{transform_indices = @transform_0, window_bounds = array<i64: 1, 1, 6, 32, 6>}, {pipeline_mode = #tpu.pipeline_mode<synchronous>, transform_indices = @transform_1, window_bounds = array<i64: 9, 16, 32>}, {pipeline_mode = #tpu.pipeline_mode<synchronous>, transform_indices = @transform_2, window_bounds = array<i64: 16, 1>}, {transform_indices = @transform_3, window_bounds = array<i64: 1, 4, 16, 4>}]} {
    %c0_i32 = arith.constant 0 : i32
    %c4_i32 = arith.constant 4 : i32
    %0 = arith.addi %c0_i32, %c4_i32 : i32
    %c1_i32 = arith.constant 1 : i32
    scf.for %arg6 = %c0_i32 to %0 step %c1_i32  : i32 {
      %cst = arith.constant 0.000000e+00 : f32
      %1 = vector.broadcast %cst : f32 to vector<16x4xf32>
      %c0_i32_1 = arith.constant 0 : i32
      %2 = arith.addi %arg6, %c0_i32_1 : i32
      %c0 = arith.constant 0 : index
      %c0_2 = arith.constant 0 : index
      %3 = arith.index_cast %2 : i32 to index
      %c0_3 = arith.constant 0 : index
      %c0_4 = arith.constant 0 : index
      %4 = vector.load %arg2[%c0, %c0_2, %3, %c0_3, %c0_4] : memref<1x1x6x32x6xbf16, #tpu.memory_space<vmem>>, vector<1x1x1x32x6xbf16>
      %5 = vector.shape_cast %4 : vector<1x1x1x32x6xbf16> to vector<32x6xbf16>
      %c0_5 = arith.constant 0 : index
      %c0_6 = arith.constant 0 : index
      %c0_7 = arith.constant 0 : index
      %6 = vector.load %arg3[%c0_5, %c0_6, %c0_7] : memref<9x16x32xbf16, #tpu.memory_space<vmem>>, vector<1x16x32xbf16>
      %7 = vector.shape_cast %6 : vector<1x16x32xbf16> to vector<16x32xbf16>
      %8 = vector.extract_strided_slice %5 {offsets = [0, 0], sizes = [32, 4], strides = [1, 1]} : vector<32x6xbf16> to vector<32x4xbf16>
      %cst_8 = arith.constant dense<0.000000e+00> : vector<16x4xf32>
      %9 = tpu.matmul %7, %8, %cst_8 {dimension_numbers = #tpu.dot_dimension_numbers<[1], [0], [0], [1], [0, 0, 1, 1], [], []>} : vector<16x32xbf16>, vector<32x4xbf16>, vector<16x4xf32> -> vector<16x4xf32>
      %10 = arith.addf %1, %9 : vector<16x4xf32>
      %c1 = arith.constant 1 : index
      %c0_9 = arith.constant 0 : index
      %c0_10 = arith.constant 0 : index
      %11 = vector.load %arg3[%c1, %c0_9, %c0_10] : memref<9x16x32xbf16, #tpu.memory_space<vmem>>, vector<1x16x32xbf16>
      %12 = vector.shape_cast %11 : vector<1x16x32xbf16> to vector<16x32xbf16>
      %13 = vector.extract_strided_slice %5 {offsets = [0, 1], sizes = [32, 4], strides = [1, 1]} : vector<32x6xbf16> to vector<32x4xbf16>
      %cst_11 = arith.constant dense<0.000000e+00> : vector<16x4xf32>
      %14 = tpu.matmul %12, %13, %cst_11 {dimension_numbers = #tpu.dot_dimension_numbers<[1], [0], [0], [1], [0, 0, 1, 1], [], []>} : vector<16x32xbf16>, vector<32x4xbf16>, vector<16x4xf32> -> vector<16x4xf32>
      %15 = arith.addf %10, %14 : vector<16x4xf32>
      %c2 = arith.constant 2 : index
      %c0_12 = arith.constant 0 : index
      %c0_13 = arith.constant 0 : index
      %16 = vector.load %arg3[%c2, %c0_12, %c0_13] : memref<9x16x32xbf16, #tpu.memory_space<vmem>>, vector<1x16x32xbf16>
      %17 = vector.shape_cast %16 : vector<1x16x32xbf16> to vector<16x32xbf16>
      %18 = vector.extract_strided_slice %5 {offsets = [0, 2], sizes = [32, 4], strides = [1, 1]} : vector<32x6xbf16> to vector<32x4xbf16>
      %cst_14 = arith.constant dense<0.000000e+00> : vector<16x4xf32>
      %19 = tpu.matmul %17, %18, %cst_14 {dimension_numbers = #tpu.dot_dimension_numbers<[1], [0], [0], [1], [0, 0, 1, 1], [], []>} : vector<16x32xbf16>, vector<32x4xbf16>, vector<16x4xf32> -> vector<16x4xf32>
      %20 = arith.addf %15, %19 : vector<16x4xf32>
      %c1_i32_15 = arith.constant 1 : i32
      %21 = arith.addi %arg6, %c1_i32_15 : i32
      %c0_16 = arith.constant 0 : index
      %c0_17 = arith.constant 0 : index
      %22 = arith.index_cast %21 : i32 to index
      %c0_18 = arith.constant 0 : index
      %c0_19 = arith.constant 0 : index
      %23 = vector.load %arg2[%c0_16, %c0_17, %22, %c0_18, %c0_19] : memref<1x1x6x32x6xbf16, #tpu.memory_space<vmem>>, vector<1x1x1x32x6xbf16>
      %24 = vector.shape_cast %23 : vector<1x1x1x32x6xbf16> to vector<32x6xbf16>
      %c3 = arith.constant 3 : index
      %c0_20 = arith.constant 0 : index
      %c0_21 = arith.constant 0 : index
      %25 = vector.load %arg3[%c3, %c0_20, %c0_21] : memref<9x16x32xbf16, #tpu.memory_space<vmem>>, vector<1x16x32xbf16>
      %26 = vector.shape_cast %25 : vector<1x16x32xbf16> to vector<16x32xbf16>
      %27 = vector.extract_strided_slice %24 {offsets = [0, 0], sizes = [32, 4], strides = [1, 1]} : vector<32x6xbf16> to vector<32x4xbf16>
      %cst_22 = arith.constant dense<0.000000e+00> : vector<16x4xf32>
      %28 = tpu.matmul %26, %27, %cst_22 {dimension_numbers = #tpu.dot_dimension_numbers<[1], [0], [0], [1], [0, 0, 1, 1], [], []>} : vector<16x32xbf16>, vector<32x4xbf16>, vector<16x4xf32> -> vector<16x4xf32>
      %29 = arith.addf %20, %28 : vector<16x4xf32>
      %c4 = arith.constant 4 : index
      %c0_23 = arith.constant 0 : index
      %c0_24 = arith.constant 0 : index
      %30 = vector.load %arg3[%c4, %c0_23, %c0_24] : memref<9x16x32xbf16, #tpu.memory_space<vmem>>, vector<1x16x32xbf16>
      %31 = vector.shape_cast %30 : vector<1x16x32xbf16> to vector<16x32xbf16>
      %32 = vector.extract_strided_slice %24 {offsets = [0, 1], sizes = [32, 4], strides = [1, 1]} : vector<32x6xbf16> to vector<32x4xbf16>
      %cst_25 = arith.constant dense<0.000000e+00> : vector<16x4xf32>
      %33 = tpu.matmul %31, %32, %cst_25 {dimension_numbers = #tpu.dot_dimension_numbers<[1], [0], [0], [1], [0, 0, 1, 1], [], []>} : vector<16x32xbf16>, vector<32x4xbf16>, vector<16x4xf32> -> vector<16x4xf32>
      %34 = arith.addf %29, %33 : vector<16x4xf32>
      %c5 = arith.constant 5 : index
      %c0_26 = arith.constant 0 : index
      %c0_27 = arith.constant 0 : index
      %35 = vector.load %arg3[%c5, %c0_26, %c0_27] : memref<9x16x32xbf16, #tpu.memory_space<vmem>>, vector<1x16x32xbf16>
      %36 = vector.shape_cast %35 : vector<1x16x32xbf16> to vector<16x32xbf16>
      %37 = vector.extract_strided_slice %24 {offsets = [0, 2], sizes = [32, 4], strides = [1, 1]} : vector<32x6xbf16> to vector<32x4xbf16>
      %cst_28 = arith.constant dense<0.000000e+00> : vector<16x4xf32>
      %38 = tpu.matmul %36, %37, %cst_28 {dimension_numbers = #tpu.dot_dimension_numbers<[1], [0], [0], [1], [0, 0, 1, 1], [], []>} : vector<16x32xbf16>, vector<32x4xbf16>, vector<16x4xf32> -> vector<16x4xf32>
      %39 = arith.addf %34, %38 : vector<16x4xf32>
      %c2_i32 = arith.constant 2 : i32
      %40 = arith.addi %arg6, %c2_i32 : i32
      %c0_29 = arith.constant 0 : index
      %c0_30 = arith.constant 0 : index
      %41 = arith.index_cast %40 : i32 to index
      %c0_31 = arith.constant 0 : index
      %c0_32 = arith.constant 0 : index
      %42 = vector.load %arg2[%c0_29, %c0_30, %41, %c0_31, %c0_32] : memref<1x1x6x32x6xbf16, #tpu.memory_space<vmem>>, vector<1x1x1x32x6xbf16>
      %43 = vector.shape_cast %42 : vector<1x1x1x32x6xbf16> to vector<32x6xbf16>
      %c6 = arith.constant 6 : index
      %c0_33 = arith.constant 0 : index
      %c0_34 = arith.constant 0 : index
      %44 = vector.load %arg3[%c6, %c0_33, %c0_34] : memref<9x16x32xbf16, #tpu.memory_space<vmem>>, vector<1x16x32xbf16>
      %45 = vector.shape_cast %44 : vector<1x16x32xbf16> to vector<16x32xbf16>
      %46 = vector.extract_strided_slice %43 {offsets = [0, 0], sizes = [32, 4], strides = [1, 1]} : vector<32x6xbf16> to vector<32x4xbf16>
      %cst_35 = arith.constant dense<0.000000e+00> : vector<16x4xf32>
      %47 = tpu.matmul %45, %46, %cst_35 {dimension_numbers = #tpu.dot_dimension_numbers<[1], [0], [0], [1], [0, 0, 1, 1], [], []>} : vector<16x32xbf16>, vector<32x4xbf16>, vector<16x4xf32> -> vector<16x4xf32>
      %48 = arith.addf %39, %47 : vector<16x4xf32>
      %c7 = arith.constant 7 : index
      %c0_36 = arith.constant 0 : index
      %c0_37 = arith.constant 0 : index
      %49 = vector.load %arg3[%c7, %c0_36, %c0_37] : memref<9x16x32xbf16, #tpu.memory_space<vmem>>, vector<1x16x32xbf16>
      %50 = vector.shape_cast %49 : vector<1x16x32xbf16> to vector<16x32xbf16>
      %51 = vector.extract_strided_slice %43 {offsets = [0, 1], sizes = [32, 4], strides = [1, 1]} : vector<32x6xbf16> to vector<32x4xbf16>
      %cst_38 = arith.constant dense<0.000000e+00> : vector<16x4xf32>
      %52 = tpu.matmul %50, %51, %cst_38 {dimension_numbers = #tpu.dot_dimension_numbers<[1], [0], [0], [1], [0, 0, 1, 1], [], []>} : vector<16x32xbf16>, vector<32x4xbf16>, vector<16x4xf32> -> vector<16x4xf32>
      %53 = arith.addf %48, %52 : vector<16x4xf32>
      %c8 = arith.constant 8 : index
      %c0_39 = arith.constant 0 : index
      %c0_40 = arith.constant 0 : index
      %54 = vector.load %arg3[%c8, %c0_39, %c0_40] : memref<9x16x32xbf16, #tpu.memory_space<vmem>>, vector<1x16x32xbf16>
      %55 = vector.shape_cast %54 : vector<1x16x32xbf16> to vector<16x32xbf16>
      %56 = vector.extract_strided_slice %43 {offsets = [0, 2], sizes = [32, 4], strides = [1, 1]} : vector<32x6xbf16> to vector<32x4xbf16>
      %cst_41 = arith.constant dense<0.000000e+00> : vector<16x4xf32>
      %57 = tpu.matmul %55, %56, %cst_41 {dimension_numbers = #tpu.dot_dimension_numbers<[1], [0], [0], [1], [0, 0, 1, 1], [], []>} : vector<16x32xbf16>, vector<32x4xbf16>, vector<16x4xf32> -> vector<16x4xf32>
      %58 = arith.addf %53, %57 : vector<16x4xf32>
      %c0_42 = arith.constant 0 : index
      %c0_43 = arith.constant 0 : index
      %59 = vector.load %arg4[%c0_42, %c0_43] : memref<16x1xf32, #tpu.memory_space<vmem>>, vector<16x1xf32>
      %60 = vector.broadcast %59 : vector<16x1xf32> to vector<16x4xf32>
      %61 = arith.addf %58, %60 : vector<16x4xf32>
      %c0_44 = arith.constant 0 : index
      %62 = arith.index_cast %arg6 : i32 to index
      %c0_45 = arith.constant 0 : index
      %c0_46 = arith.constant 0 : index
      %63 = vector.load %arg5[%c0_44, %62, %c0_45, %c0_46] : memref<1x4x16x4xf32, #tpu.memory_space<vmem>>, vector<1x1x16x4xf32>
      %64 = vector.shape_cast %63 : vector<1x1x16x4xf32> to vector<16x4xf32>
      %65 = vector.shape_cast %61 : vector<16x4xf32> to vector<1x1x16x4xf32>
      tpu.vector_store %arg5[%c0_44, %62, %c0_45, %c0_46], %65 {strides = array<i32>} : memref<1x4x16x4xf32, #tpu.memory_space<vmem>>, vector<1x1x16x4xf32>,
    }
    %c4_i32_0 = arith.constant 4 : i32
    return
  }
  func.func @transform_0(%arg0: i32, %arg1: i32) -> (i32, i32, i32, i32, i32) {
    %c0_i32 = arith.constant 0 : i32
    %c0_i32_0 = arith.constant 0 : i32
    %c0_i32_1 = arith.constant 0 : i32
    %c0_i32_2 = arith.constant 0 : i32
    return %arg0, %arg1, %c0_i32, %c0_i32_0, %c0_i32_1 : i32, i32, i32, i32, i32
  }
  func.func @transform_1(%arg0: i32, %arg1: i32) -> (i32, i32, i32) {
    %c0_i32 = arith.constant 0 : i32
    %c0_i32_0 = arith.constant 0 : i32
    %c0_i32_1 = arith.constant 0 : i32
    %c0_i32_2 = arith.constant 0 : i32
    return %c0_i32, %c0_i32_0, %c0_i32_1 : i32, i32, i32
  }
  func.func @transform_2(%arg0: i32, %arg1: i32) -> (i32, i32) {
    %c0_i32 = arith.constant 0 : i32
    %c0_i32_0 = arith.constant 0 : i32
    %c0_i32_1 = arith.constant 0 : i32
    return %c0_i32, %c0_i32_0 : i32, i32
  }
  func.func @transform_3(%arg0: i32, %arg1: i32) -> (i32, i32, i32, i32) {
    %c0_i32 = arith.constant 0 : i32
    %c0_i32_0 = arith.constant 0 : i32
    %c0_i32_1 = arith.constant 0 : i32
    return %arg0, %arg1, %c0_i32, %c0_i32_0 : i32, i32, i32, i32
  }
}

</mosaic_0001>

<llo_original>
// kernel: g_a_forward.4
$region0: #{g_a_forward.4}
  #allocation0 [shape = 'u32[]', space=smem, size = 0x4, offset = 0x4, fixed_abs, tag = 'smem constant byte address 0x4 - core index']
  #allocation1 [shape = 'u32[72,128]{1,0:T(1,128)}', space=vmem, size = 0x9000, scoped, tag = 'internal scratch']
  %s0 = inlined_call_operand.vmem [shape: bf16[2,1,34,12,34], index: 0, kind: input, shape index: {}]
  %s1 = inlined_call_operand.vmem [shape: bf16[9,8,12], index: 1, kind: input, shape index: {}]
  %s2 = inlined_call_operand.vmem [shape: f32[8,1], index: 2, kind: input, shape index: {}]
  %s3 = inlined_call_operand.vmem [shape: bf16[8,8], index: 3, kind: input, shape index: {}]
  %s4 = inlined_call_operand.vmem [shape: f32[8,1], index: 4, kind: input, shape index: {}]
  %s5 = inlined_call_operand.vmem [shape: bf16[2,32,8,32], index: 5, kind: output, shape index: {}]
  %s6 = sld [smem:[#allocation0]]
  $region60: #{g_a_forward.4} parent=0
    _
  %s8 = ssub.s32 1, %s6
  %s9 = scalar_select 0, %s8, %s6
  loop: start=0, step=1, limit=4
  $region2: #{g_a_forward.4} parent=0 // loop_pre_header
    _
  $region3: #{g_a_forward.4} parent=0 // loop_header
    %s11 = sphi 0, %s15
    %p12 = scmp.ge.s32.totalorder %s11, 4
    %s18 = sphi 0, %s30
    %s19 = sphi 0, %s26
    %s20 = sphi 0, %s18
    %s21 = sphi 0, %s19
    %s22 = sphi 0, %s20
    %s23 = sphi 0, %s21
    %s35 = sphi 0, %s37
    %s38 = sphi 0, %s35
    %s39 = sphi 0, %s38
    %s55 = sphi 0, %s39
    %s59 = sphi 0, %s59
    %s61 = sphi 0, %s59
    %s62 = sphi 0, %s61
    %s76 = sphi 0, %s62
    %s80 = sphi 0, %s80
    %s82 = sphi 0, %s80
    %s83 = sphi 0, %s82
    %s97 = sphi 0, %s83
    %s101 = sphi 0, %s101
    %s103 = sphi 0, %s101
    %s104 = sphi 0, %s103
    %s118 = sphi 0, %s104
    %s122 = sphi 0, %s122
    %s124 = sphi 0, %s122
    %s125 = sphi 0, %s124
    %s139 = sphi 0, %s125
    %s147 = sphi 0, %s149
    %s150 = sphi 0, %s147
    %s151 = sphi 0, %s150
    %s167 = sphi 0, %s151
  $region4: #{g_a_forward.4} parent=0 // loop_header_branch
    %14 = sbr.rel (%p12) target = $region8
  $region5: #{g_a_forward.4} parent=0 // loop_body
    %s16 = ssub.s32 %s11, 1
    %s17 = ssub.s32 %s11, 2
    %s24 = sadd.s32 1, %s19
    %p25 = scmp.ge.s32.totalorder %s24, 1
    %s26 = scalar_select %p25, 0, %s24
    %s27 = sadd.s32 1, %s18
    %s28 = scalar_select %p25, %s27, %s18
    %p29 = scmp.ge.s32.totalorder %s28, 2
    %s30 = scalar_select %p29, 0, %s28
    %s31 = ssub.s32 %s18, %s30
    %s32 = ssub.s32 %s19, %s26
    %s33 = sor.u32 %s31, %s32
    %p34 = scmp.eq.s32.totalorder %s33, 0
    %s36 = sadd.s32 %s35, 1
    %s37 = scalar_select %p34, %s35, %s36
    %p40 = pneg %p34
    %p41 = scmp.eq.s32.totalorder %s11, 1
    %p42 = por %p40, %p41
    %p43 = scmp.ne.s32.totalorder %s35, %s38
    %p44 = scmp.eq.s32.totalorder %s11, 0
    %p45 = por %p43, %p44
    %p46 = scmp.ne.s32.totalorder %s35, %s38
    %p47 = scmp.eq.s32.totalorder %s16, 1
    %p48 = por %p46, %p47
    %p49 = scmp.ne.s32.totalorder %s38, %s39
    %p50 = scmp.eq.s32.totalorder %s16, 0
    %p51 = por %p49, %p50
    %p52 = scmp.ne.s32.totalorder %s38, %s39
    %p53 = scmp.eq.s32.totalorder %s17, 1
    %p54 = por %p52, %p53
    %p56 = scmp.ne.s32.totalorder %s39, %s55
    %p57 = scmp.eq.s32.totalorder %s17, 0
    %p58 = por %p56, %p57
    %s60 = sadd.s32 %s59, 1
    %p63 = scmp.eq.s32.totalorder %s11, 1
    %p64 = scmp.ne.s32.totalorder %s59, %s61
    %p65 = scmp.eq.s32.totalorder %s11, 0
    %p66 = por %p64, %p65
    %p67 = scmp.ne.s32.totalorder %s59, %s61
    %p68 = scmp.eq.s32.totalorder %s16, 1
    %p69 = por %p67, %p68
    %p70 = scmp.ne.s32.totalorder %s61, %s62
    %p71 = scmp.eq.s32.totalorder %s16, 0
    %p72 = por %p70, %p71
    %p73 = scmp.ne.s32.totalorder %s61, %s62
    %p74 = scmp.eq.s32.totalorder %s17, 1
    %p75 = por %p73, %p74
    %p77 = scmp.ne.s32.totalorder %s62, %s76
    %p78 = scmp.eq.s32.totalorder %s17, 0
    %p79 = por %p77, %p78
    %s81 = sadd.s32 %s80, 1
    %p84 = scmp.eq.s32.totalorder %s11, 1
    %p85 = scmp.ne.s32.totalorder %s80, %s82
    %p86 = scmp.eq.s32.totalorder %s11, 0
    %p87 = por %p85, %p86
    %p88 = scmp.ne.s32.totalorder %s80, %s82
    %p89 = scmp.eq.s32.totalorder %s16, 1
    %p90 = por %p88, %p89
    %p91 = scmp.ne.s32.totalorder %s82, %s83
    %p92 = scmp.eq.s32.totalorder %s16, 0
    %p93 = por %p91, %p92
    %p94 = scmp.ne.s32.totalorder %s82, %s83
    %p95 = scmp.eq.s32.totalorder %s17, 1
    %p96 = por %p94, %p95
    %p98 = scmp.ne.s32.totalorder %s83, %s97
    %p99 = scmp.eq.s32.totalorder %s17, 0
    %p100 = por %p98, %p99
    %s102 = sadd.s32 %s101, 1
    %p105 = scmp.eq.s32.totalorder %s11, 1
    %p106 = scmp.ne.s32.totalorder %s101, %s103
    %p107 = scmp.eq.s32.totalorder %s11, 0
    %p108 = por %p106, %p107
    %p109 = scmp.ne.s32.totalorder %s101, %s103
    %p110 = scmp.eq.s32.totalorder %s16, 1
    %p111 = por %p109, %p110
    %p112 = scmp.ne.s32.totalorder %s103, %s104
    %p113 = scmp.eq.s32.totalorder %s16, 0
    %p114 = por %p112, %p113
    %p115 = scmp.ne.s32.totalorder %s103, %s104
    %p116 = scmp.eq.s32.totalorder %s17, 1
    %p117 = por %p115, %p116
    %p119 = scmp.ne.s32.totalorder %s104, %s118
    %p120 = scmp.eq.s32.totalorder %s17, 0
    %p121 = por %p119, %p120
    %s123 = sadd.s32 %s122, 1
    %p126 = scmp.eq.s32.totalorder %s11, 1
    %p127 = scmp.ne.s32.totalorder %s122, %s124
    %p128 = scmp.eq.s32.totalorder %s11, 0
    %p129 = por %p127, %p128
    %p130 = scmp.ne.s32.totalorder %s122, %s124
    %p131 = scmp.eq.s32.totalorder %s16, 1
    %p132 = por %p130, %p131
    %p133 = scmp.ne.s32.totalorder %s124, %s125
    %p134 = scmp.eq.s32.totalorder %s16, 0
    %p135 = por %p133, %p134
    %p136 = scmp.ne.s32.totalorder %s124, %s125
    %p137 = scmp.eq.s32.totalorder %s17, 1
    %p138 = por %p136, %p137
    %p140 = scmp.ne.s32.totalorder %s125, %s139
    %p141 = scmp.eq.s32.totalorder %s17, 0
    %p142 = por %p140, %p141
    %s143 = ssub.s32 %s18, %s30
    %s144 = ssub.s32 %s19, %s26
    %s145 = sor.u32 %s143, %s144
    %p146 = scmp.eq.s32.totalorder %s145, 0
    %s148 = sadd.s32 %s147, 1
    %s149 = scalar_select %p146, %s147, %s148
    %p152 = pneg %p146
    %p153 = scmp.eq.s32.totalorder %s11, 1
    %p154 = por %p152, %p153
    %p155 = scmp.ne.s32.totalorder %s147, %s150
    %p156 = scmp.eq.s32.totalorder %s11, 0
    %p157 = por %p155, %p156
    %p158 = scmp.ne.s32.totalorder %s147, %s150
    %p159 = scmp.eq.s32.totalorder %s16, 1
    %p160 = por %p158, %p159
    %p161 = scmp.ne.s32.totalorder %s150, %s151
    %p162 = scmp.eq.s32.totalorder %s16, 0
    %p163 = por %p161, %p162
    %p164 = scmp.ne.s32.totalorder %s150, %s151
    %p165 = scmp.eq.s32.totalorder %s17, 1
    %p166 = por %p164, %p165
    %p168 = scmp.ne.s32.totalorder %s151, %s167
    %p169 = scmp.eq.s32.totalorder %s17, 0
    %p170 = por %p168, %p169
    %p171 = scmp.le.s32.totalorder 1, %s11
    %p172 = scmp.lt.s32.totalorder %s11, 3
    %p173 = pnand %p171, %p172
    %p174 = pneg %p173
    // Predicated region
    $region9: #{g_a_forward.4} parent=5 // pred_check
      _
    $region10: #{g_a_forward.4} parent=5 // pred_check_branch
      %176 = sbr.rel (%p173) target = $region12
    $region11: #{g_a_forward.4} parent=5 // pred_region
      %s177 = ssub.s32 %s11, 1
      // Predicated region
      $region13: #{g_a_forward.4} parent=11 // pred_check
        %p178 = pneg %p72
      $region14: #{g_a_forward.4} parent=11 // pred_check_branch
        %180 = sbr.rel (%p178) target = $region16
      $region15: #{g_a_forward.4} parent=11 // pred_region
        _
      $region16: #{g_a_forward.4} parent=11 // pred_fallthru
        _
      // Predicated region
      $region17: #{g_a_forward.4} parent=11 // pred_check
        %p181 = pneg %p93
      $region18: #{g_a_forward.4} parent=11 // pred_check_branch
        %183 = sbr.rel (%p181) target = $region20
      $region19: #{g_a_forward.4} parent=11 // pred_region
        _
      $region20: #{g_a_forward.4} parent=11 // pred_fallthru
        _
      // Predicated region
      $region21: #{g_a_forward.4} parent=11 // pred_check
        %p184 = pneg %p114
      $region22: #{g_a_forward.4} parent=11 // pred_check_branch
        %186 = sbr.rel (%p184) target = $region24
      $region23: #{g_a_forward.4} parent=11 // pred_region
        _
      $region24: #{g_a_forward.4} parent=11 // pred_fallthru
        _
      // Predicated region
      $region25: #{g_a_forward.4} parent=11 // pred_check
        %p187 = pneg %p135
      $region26: #{g_a_forward.4} parent=11 // pred_check_branch
        %189 = sbr.rel (%p187) target = $region28
      $region27: #{g_a_forward.4} parent=11 // pred_region
        _
      $region28: #{g_a_forward.4} parent=11 // pred_fallthru
        _
    $region12: #{g_a_forward.4} parent=5 // pred_fallthru
      _
    %p190 = scmp.lt.s32.totalorder %s11, 2
    // Predicated region
    $region29: #{g_a_forward.4} parent=5 // pred_check
      %p191 = pneg %p190
    $region30: #{g_a_forward.4} parent=5 // pred_check_branch
      %193 = sbr.rel (%p191) target = $region32
    $region31: #{g_a_forward.4} parent=5 // pred_region
      // Predicated region
      $region33: #{g_a_forward.4} parent=31 // pred_check
        %p194 = pneg %p45
      $region34: #{g_a_forward.4} parent=31 // pred_check_branch
        %196 = sbr.rel (%p194) target = $region36
      $region35: #{g_a_forward.4} parent=31 // pred_region
        %p197 = scmp.lt.s32.totalorder %s18, 1
        %s198 = scalar_select %p197, %s18, 1
        %p199 = scmp.lt.s32.totalorder %s19, 0
        %s200 = scalar_select %p199, %s19, 0
        %s201 = smul.addr %s200, 68
        %s202 = smul.addr %s198, 68
        %s203 = sadd.s32 %s201, %s202
        %s204 = smul.addr %s203, 4
        %s205 = scalar_lea.vmem %s0, %s204
      $region36: #{g_a_forward.4} parent=31 // pred_fallthru
        _
    $region32: #{g_a_forward.4} parent=5 // pred_fallthru
      _
    %p206 = scmp.le.s32.totalorder 1, %s11
    %p207 = scmp.lt.s32.totalorder %s11, 3
    %p208 = pnand %p206, %p207
    %p209 = pneg %p208
    // Predicated region
    $region37: #{g_a_forward.4} parent=5 // pred_check
      _
    $region38: #{g_a_forward.4} parent=5 // pred_check_branch
      %211 = sbr.rel (%p208) target = $region40
    $region39: #{g_a_forward.4} parent=5 // pred_region
      %s212 = ssub.s32 %s11, 1
      %p213 = scmp.lt.s32.totalorder %s20, 1
      %s214 = scalar_select %p213, %s20, 1
      %p215 = scmp.lt.s32.totalorder %s21, 0
      %s216 = scalar_select %p215, %s21, 0
      %s217 = smul.addr %s216, 68
      %s218 = smul.addr %s214, 68
      %s219 = sadd.s32 %s217, %s218
      %s220 = smul.addr %s219, 4
      %s221 = scalar_lea.vmem %s0, %s220
      %p222 = pneg %p51
      %p223 = pneg %p48
      %p224 = pneg %p72
      %p225 = pneg %p69
      %p226 = pneg %p93
      %p227 = pneg %p90
      %p228 = pneg %p114
      %p229 = pneg %p111
      %p230 = pneg %p135
      %p231 = pneg %p132
      %p232 = pneg %p163
      %p233 = pneg %p160
      %s234 = smul.u32 32, %s21
      %p235 = scmp.lt.s32.totalorder %s20, 1
      %s236 = scalar_select %p235, %s20, 1
      %p237 = scmp.lt.s32.totalorder %s234, 31
      %s238 = scalar_select %p237, %s234, 31
      %s239 = smul.addr %s236, 32
      %s240 = sadd.s32 %s238, %s239
      %s241 = smul.addr %s240, 4
      %s242 = scalar_lea.vmem %s5, %s241
      %p243 = scmp.lt.s32.totalorder %s20, 1
      %s244 = scalar_select %p243, %s20, 1
      %p245 = scmp.lt.s32.totalorder %s21, 0
      %s246 = scalar_select %p245, %s21, 0
      %s247 = smul.addr %s246, 68
      %s248 = smul.addr %s244, 68
      %s249 = sadd.s32 %s247, %s248
      %s250 = smul.addr %s249, 4
      %s251 = scalar_lea.vmem %s0, %s250
      %s252 = smul.u32 32, %s21
      %p253 = scmp.lt.s32.totalorder %s20, 1
      %s254 = scalar_select %p253, %s20, 1
      %p255 = scmp.lt.s32.totalorder %s252, 31
      %s256 = scalar_select %p255, %s252, 31
      %s257 = smul.addr %s254, 32
      %s258 = sadd.s32 %s256, %s257
      %s259 = smul.addr %s258, 4
      %s260 = scalar_lea.vmem %s5, %s259
      %s261 = smul.u32 32, %s21
      loop: start=0, step=1, limit=32
      $region41: #{g_a_forward.4} parent=39 // loop_pre_header
        _
      $region42: #{g_a_forward.4} parent=39 // loop_header
        %s264 = sphi 0, %s268
        %p265 = scmp.ge.s32.totalorder %s264, 32
      $region43: #{g_a_forward.4} parent=39 // loop_header_branch
        %267 = sbr.rel (%p265) target = $region47
      $region44: #{g_a_forward.4} parent=39 // loop_body
        %s269 = smul.u32 %s264, 2
        %s270 = smul.addr %s269, 4
        %s271 = scalar_lea.vmem %s251, %s270
        %v272 = vld [vmem:[%s271] sm:$0xf]
        %v273 = vld [vmem:[%s271 + $0x4] sm:$0x3]
        %v274 = vld [vmem:[%s1] sm:$0xf]
        %s275 = scalar_lea.vmem %s1, 4
        %v276 = vld [vmem:[%s275] sm:$0xf]
        %v279 = vunpack.c.l.b16 %v272
        %v280 = vunpack.c.l.b16 %v273
        %v281 = vpack.c.b16 %v280, %v279
        %282 = vrot.lane.b32.xlu0 %v281, 127
        %v283 = vpop.permute.xlu0 %282
        %vm284 = vcmask 97280
        %v286 = vsel %vm284, %v276, 0
        %vm288 = vcmask 1045504
        %v290 = vsel %vm288, %v283, 0
        %292 = vmatpush.bf16.msra.mxu0 0
        %293 = vmatpush.bf16.msra.mxu0 0
        %294 = vmatpush.bf16.msra.mxu0 0
        %295 = vmatpush.bf16.msra.mxu0 0
        %296 = vmatpush.bf16.msra.mxu0 0
        %297 = vmatpush.bf16.msra.mxu0 0
        %298 = vmatpush.bf16.msra.mxu0 0
        %299 = vmatpush.bf16.msra.mxu0 %v290
        %300 = vmatmul.bf16.gmra.mxu0 %v286
        %v301 = vpop.f32.mrf.mxu0
        %v302 = vadd.f32 0.0, %v301
        %v303 = vpop.f32.mrf.mxu0
        %304 = vdwg.mxu0
        %v306 = vsel %vm284, %v274, 0
        %v309 = vsel %vm288, %v281, 0
        %311 = vmatpush.bf16.msra.mxu0 0
        %312 = vmatpush.bf16.msra.mxu0 0
        %313 = vmatpush.bf16.msra.mxu0 0
        %314 = vmatpush.bf16.msra.mxu0 0
        %315 = vmatpush.bf16.msra.mxu0 0
        %316 = vmatpush.bf16.msra.mxu0 0
        %317 = vmatpush.bf16.msra.mxu0 0
        %318 = vmatpush.bf16.msra.mxu0 %v309
        %319 = vmatmul.bf16.gmra.mxu0 %v306
        %v320 = vpop.f32.mrf.mxu0
        %v321 = vadd.f32 %v302, %v320
        %v322 = vpop.f32.mrf.mxu0
        %323 = vdwg.mxu0
        %s324 = scalar_lea.vmem %s1, 8
        %v325 = vld [vmem:[%s324] sm:$0xf]
        %326 = vrot.lane.b32.xlu0 %v281, 126
        %v327 = vpop.permute.xlu0 %326
        %v329 = vsel %vm284, %v325, 0
        %v332 = vsel %vm288, %v327, 0
        %334 = vmatpush.bf16.msra.mxu0 0
        %335 = vmatpush.bf16.msra.mxu0 0
        %336 = vmatpush.bf16.msra.mxu0 0
        %337 = vmatpush.bf16.msra.mxu0 0
        %338 = vmatpush.bf16.msra.mxu0 0
        %339 = vmatpush.bf16.msra.mxu0 0
        %340 = vmatpush.bf16.msra.mxu0 0
        %341 = vmatpush.bf16.msra.mxu0 %v332
        %342 = vmatmul.bf16.gmra.mxu0 %v329
        %v343 = vpop.f32.mrf.mxu0
        %v344 = vadd.f32 0.0, %v343
        %v345 = vpop.f32.mrf.mxu0
        %346 = vdwg.mxu0
        %v347 = vadd.f32 %v321, %v344
        %s348 = sadd.s32 %s264, 1
        %s349 = smul.u32 %s348, 2
        %s350 = smul.addr %s349, 4
        %s351 = scalar_lea.vmem %s251, %s350
        %v352 = vld [vmem:[%s351] sm:$0xf]
        %v353 = vld [vmem:[%s351 + $0x4] sm:$0x3]
        %s354 = scalar_lea.vmem %s1, 12
        %v355 = vld [vmem:[%s354] sm:$0xf]
        %v358 = vunpack.c.l.b16 %v352
        %v359 = vunpack.c.l.b16 %v353
        %v360 = vpack.c.b16 %v359, %v358
        %v362 = vsel %vm284, %v355, 0
        %v365 = vsel %vm288, %v360, 0
        %367 = vmatpush.bf16.msra.mxu0 0
        %368 = vmatpush.bf16.msra.mxu0 0
        %369 = vmatpush.bf16.msra.mxu0 0
        %370 = vmatpush.bf16.msra.mxu0 0
        %371 = vmatpush.bf16.msra.mxu0 0
        %372 = vmatpush.bf16.msra.mxu0 0
        %373 = vmatpush.bf16.msra.mxu0 0
        %374 = vmatpush.bf16.msra.mxu0 %v365
        %375 = vmatmul.bf16.gmra.mxu0 %v362
        %v376 = vpop.f32.mrf.mxu0
        %v377 = vadd.f32 0.0, %v376
        %v378 = vpop.f32.mrf.mxu0
        %379 = vdwg.mxu0
        %v380 = vadd.f32 %v347, %v377
        %s381 = scalar_lea.vmem %s1, 16
        %v382 = vld [vmem:[%s381] sm:$0xf]
        %383 = vrot.lane.b32.xlu0 %v360, 127
        %v384 = vpop.permute.xlu0 %383
        %v386 = vsel %vm284, %v382, 0
        %v389 = vsel %vm288, %v384, 0
        %391 = vmatpush.bf16.msra.mxu0 0
        %392 = vmatpush.bf16.msra.mxu0 0
        %393 = vmatpush.bf16.msra.mxu0 0
        %394 = vmatpush.bf16.msra.mxu0 0
        %395 = vmatpush.bf16.msra.mxu0 0
        %396 = vmatpush.bf16.msra.mxu0 0
        %397 = vmatpush.bf16.msra.mxu0 0
        %398 = vmatpush.bf16.msra.mxu0 %v389
        %399 = vmatmul.bf16.gmra.mxu0 %v386
        %v400 = vpop.f32.mrf.mxu0
        %v401 = vadd.f32 0.0, %v400
        %v402 = vpop.f32.mrf.mxu0
        %403 = vdwg.mxu0
        %v404 = vadd.f32 %v380, %v401
        %s405 = scalar_lea.vmem %s1, 20
        %v406 = vld [vmem:[%s405] sm:$0xf]
        %407 = vrot.lane.b32.xlu0 %v360, 126
        %v408 = vpop.permute.xlu0 %407
        %v410 = vsel %vm284, %v406, 0
        %v413 = vsel %vm288, %v408, 0
        %415 = vmatpush.bf16.msra.mxu0 0
        %416 = vmatpush.bf16.msra.mxu0 0
        %417 = vmatpush.bf16.msra.mxu0 0
        %418 = vmatpush.bf16.msra.mxu0 0
        %419 = vmatpush.bf16.msra.mxu0 0
        %420 = vmatpush.bf16.msra.mxu0 0
        %421 = vmatpush.bf16.msra.mxu0 0
        %422 = vmatpush.bf16.msra.mxu0 %v413
        %423 = vmatmul.bf16.gmra.mxu0 %v410
        %v424 = vpop.f32.mrf.mxu0
        %v425 = vadd.f32 0.0, %v424
        %v426 = vpop.f32.mrf.mxu0
        %427 = vdwg.mxu0
        %v428 = vadd.f32 %v404, %v425
        %s429 = sadd.s32 %s264, 2
        %s430 = smul.u32 %s429, 2
        %s431 = smul.addr %s430, 4
        %s432 = scalar_lea.vmem %s251, %s431
        %v433 = vld [vmem:[%s432] sm:$0xf]
        %v434 = vld [vmem:[%s432 + $0x4] sm:$0x3]
        %s435 = scalar_lea.vmem %s1, 24
        %v436 = vld [vmem:[%s435] sm:$0xf]
        %v439 = vunpack.c.l.b16 %v433
        %v440 = vunpack.c.l.b16 %v434
        %v441 = vpack.c.b16 %v440, %v439
        %v443 = vsel %vm284, %v436, 0
        %v446 = vsel %vm288, %v441, 0
        %448 = vmatpush.bf16.msra.mxu0 0
        %449 = vmatpush.bf16.msra.mxu0 0
        %450 = vmatpush.bf16.msra.mxu0 0
        %451 = vmatpush.bf16.msra.mxu0 0
        %452 = vmatpush.bf16.msra.mxu0 0
        %453 = vmatpush.bf16.msra.mxu0 0
        %454 = vmatpush.bf16.msra.mxu0 0
        %455 = vmatpush.bf16.msra.mxu0 %v446
        %456 = vmatmul.bf16.gmra.mxu0 %v443
        %v457 = vpop.f32.mrf.mxu0
        %v458 = vadd.f32 0.0, %v457
        %v459 = vpop.f32.mrf.mxu0
        %460 = vdwg.mxu0
        %v461 = vadd.f32 %v428, %v458
        %s462 = scalar_lea.vmem %s1, 28
        %v463 = vld [vmem:[%s462] sm:$0xf]
        %464 = vrot.lane.b32.xlu0 %v441, 127
        %v465 = vpop.permute.xlu0 %464
        %v467 = vsel %vm284, %v463, 0
        %v470 = vsel %vm288, %v465, 0
        %472 = vmatpush.bf16.msra.mxu0 0
        %473 = vmatpush.bf16.msra.mxu0 0
        %474 = vmatpush.bf16.msra.mxu0 0
        %475 = vmatpush.bf16.msra.mxu0 0
        %476 = vmatpush.bf16.msra.mxu0 0
        %477 = vmatpush.bf16.msra.mxu0 0
        %478 = vmatpush.bf16.msra.mxu0 0
        %479 = vmatpush.bf16.msra.mxu0 %v470
        %480 = vmatmul.bf16.gmra.mxu0 %v467
        %v481 = vpop.f32.mrf.mxu0
        %v482 = vadd.f32 0.0, %v481
        %v483 = vpop.f32.mrf.mxu0
        %484 = vdwg.mxu0
        %v485 = vadd.f32 %v461, %v482
        %s486 = scalar_lea.vmem %s1, 32
        %v487 = vld [vmem:[%s486] sm:$0xf]
        %488 = vrot.lane.b32.xlu0 %v441, 126
        %v489 = vpop.permute.xlu0 %488
        %v491 = vsel %vm284, %v487, 0
        %v494 = vsel %vm288, %v489, 0
        %496 = vmatpush.bf16.msra.mxu0 0
        %497 = vmatpush.bf16.msra.mxu0 0
        %498 = vmatpush.bf16.msra.mxu0 0
        %499 = vmatpush.bf16.msra.mxu0 0
        %500 = vmatpush.bf16.msra.mxu0 0
        %501 = vmatpush.bf16.msra.mxu0 0
        %502 = vmatpush.bf16.msra.mxu0 0
        %503 = vmatpush.bf16.msra.mxu0 %v494
        %504 = vmatmul.bf16.gmra.mxu0 %v491
        %v505 = vpop.f32.mrf.mxu0
        %v506 = vadd.f32 0.0, %v505
        %v507 = vpop.f32.mrf.mxu0
        %508 = vdwg.mxu0
        %v509 = vadd.f32 %v485, %v506
        %v510 = vld [vmem:[%s2] sm:$0xff]
        %512 = vset.pattern.permute.xlu0 0
        %513 = vperm.xlu0 %512, %v510
        %v514 = vpop.permute.xlu0 %513
        %v516 = vadd.f32 %v509, %v514
        %v517 = vld [vmem:[%s3] sm:$0xf]
        %v518 = vmul.f32 %v516, %v516
        %v519 = vpack.c.bf16 %v518, %v518
        %v520 = vld [vmem:[%s4] sm:$0xff]
        %522 = vset.pattern.permute.xlu0 0
        %523 = vperm.xlu0 %522, %v520
        %v524 = vpop.permute.xlu0 %523
        %vm526 = vcmask 64512
        %v528 = vsel %vm526, %v517, 0
        %vm530 = vcmask 1043456
        %v532 = vsel %vm530, %v519, 0
        %534 = vmatpush.bf16.msra.mxu0 0
        %535 = vmatpush.bf16.msra.mxu0 0
        %536 = vmatpush.bf16.msra.mxu0 0
        %537 = vmatpush.bf16.msra.mxu0 0
        %538 = vmatpush.bf16.msra.mxu0 0
        %539 = vmatpush.bf16.msra.mxu0 0
        %540 = vmatpush.bf16.msra.mxu0 0
        %541 = vmatpush.bf16.msra.mxu0 %v532
        %542 = vmatmul.bf16.gmra.mxu0 %v528
        %v543 = vpop.f32.mrf.mxu0
        %v544 = vadd.f32 %v524, %v543
        %v545 = vpop.f32.mrf.mxu0
        %546 = vdwg.mxu0
        %v547 = vrsqrt.pop %v544
        %v548 = vmul.f32 %v547, %v544
        %v549 = vmul.f32 %v548, %v547
        %v550 = vmul.f32 0.5, %v549
        %v551 = vsub.f32 1.5, %v550
        %v552 = vmul.f32 %v547, %v551
        %vm553 = vweird.f32 %v544
        %vm554 = vweird.f32 %v547
        %vm555 = vmor %vm553, %vm554
        %v556 = vsel %vm555, %v547, %v552
        %v557 = vmul.f32 %v516, %v556
        %v558 = vpack.c.bf16 %v557, %v557
        %s559 = smul.addr %s264, 4
        %s560 = scalar_lea.vmem %s260, %s559
        %vm561 = vcmask 257024
        %562 = vst.msk [vmem:[%s560] sm:$0xf] %vm561, %v558
      $region45: #{g_a_forward.4} parent=39 // loop_footer
        %s268 = sadd.s32 1, %s264
      $region46: #{g_a_forward.4} parent=39 // loop_footer_branch
        %263 = sbr.rel target = $region42
      $region47: #{g_a_forward.4} parent=39 // loop_exit
        _
      %s563 = smul.u32 32, %s21
      %p564 = scmp.lt.s32.totalorder %s20, 1
      %s565 = scalar_select %p564, %s20, 1
      %p566 = scmp.lt.s32.totalorder %s563, 31
      %s567 = scalar_select %p566, %s563, 31
      %s568 = smul.addr %s565, 32
      %s569 = sadd.s32 %s567, %s568
      %s570 = smul.addr %s569, 4
      %s571 = scalar_lea.vmem %s5, %s570
      // Predicated region
      $region48: #{g_a_forward.4} parent=39 // pred_check
        %p572 = pneg %p160
      $region49: #{g_a_forward.4} parent=39 // pred_check_branch
        %574 = sbr.rel (%p572) target = $region51
      $region50: #{g_a_forward.4} parent=39 // pred_region
        %s575 = smul.u32 32, %s21
      $region51: #{g_a_forward.4} parent=39 // pred_fallthru
        _
    $region40: #{g_a_forward.4} parent=5 // pred_fallthru
      _
    %p576 = scmp.le.s32.totalorder 2, %s11
    // Predicated region
    $region52: #{g_a_forward.4} parent=5 // pred_check
      %p577 = pneg %p576
    $region53: #{g_a_forward.4} parent=5 // pred_check_branch
      %579 = sbr.rel (%p577) target = $region55
    $region54: #{g_a_forward.4} parent=5 // pred_region
      %s580 = ssub.s32 %s11, 2
      // Predicated region
      $region56: #{g_a_forward.4} parent=54 // pred_check
        %p581 = pneg %p166
      $region57: #{g_a_forward.4} parent=54 // pred_check_branch
        %583 = sbr.rel (%p581) target = $region59
      $region58: #{g_a_forward.4} parent=54 // pred_region
        %s584 = smul.u32 32, %s23
        %p585 = scmp.lt.s32.totalorder %s22, 1
        %s586 = scalar_select %p585, %s22, 1
        %p587 = scmp.lt.s32.totalorder %s584, 31
        %s588 = scalar_select %p587, %s584, 31
        %s589 = smul.addr %s586, 32
        %s590 = sadd.s32 %s588, %s589
        %s591 = smul.addr %s590, 4
        %s592 = scalar_lea.vmem %s5, %s591
      $region59: #{g_a_forward.4} parent=54 // pred_fallthru
        _
    $region55: #{g_a_forward.4} parent=5 // pred_fallthru
      _
  $region6: #{g_a_forward.4} parent=0 // loop_footer
    %s15 = sadd.s32 1, %s11
  $region7: #{g_a_forward.4} parent=0 // loop_footer_branch
    %10 = sbr.rel target = $region3
  $region8: #{g_a_forward.4} parent=0 // loop_exit
    _

// kernel: g_a_forward.5
$region0: #{g_a_forward.5}
  #allocation0 [shape = 'u32[]', space=smem, size = 0x4, offset = 0x4, fixed_abs, tag = 'smem constant byte address 0x4 - core index']
  #allocation1 [shape = 'u32[72,128]{1,0:T(1,128)}', space=vmem, size = 0x9000, scoped, tag = 'internal scratch']
  %s0 = inlined_call_operand.vmem [shape: bf16[2,1,18,32,18], index: 0, kind: input, shape index: {}]
  %s1 = inlined_call_operand.vmem [shape: bf16[9,8,32], index: 1, kind: input, shape index: {}]
  %s2 = inlined_call_operand.vmem [shape: f32[8,1], index: 2, kind: input, shape index: {}]
  %s3 = inlined_call_operand.vmem [shape: bf16[8,8], index: 3, kind: input, shape index: {}]
  %s4 = inlined_call_operand.vmem [shape: f32[8,1], index: 4, kind: input, shape index: {}]
  %s5 = inlined_call_operand.vmem [shape: bf16[2,16,8,16], index: 5, kind: output, shape index: {}]
  %s6 = sld [smem:[#allocation0]]
  $region60: #{g_a_forward.5} parent=0
    _
  %s8 = ssub.s32 1, %s6
  %s9 = scalar_select 0, %s8, %s6
  loop: start=0, step=1, limit=4
  $region2: #{g_a_forward.5} parent=0 // loop_pre_header
    _
  $region3: #{g_a_forward.5} parent=0 // loop_header
    %s11 = sphi 0, %s15
    %p12 = scmp.ge.s32.totalorder %s11, 4
    %s18 = sphi 0, %s30
    %s19 = sphi 0, %s26
    %s20 = sphi 0, %s18
    %s21 = sphi 0, %s19
    %s22 = sphi 0, %s20
    %s23 = sphi 0, %s21
    %s35 = sphi 0, %s37
    %s38 = sphi 0, %s35
    %s39 = sphi 0, %s38
    %s55 = sphi 0, %s39
    %s59 = sphi 0, %s59
    %s61 = sphi 0, %s59
    %s62 = sphi 0, %s61
    %s76 = sphi 0, %s62
    %s80 = sphi 0, %s80
    %s82 = sphi 0, %s80
    %s83 = sphi 0, %s82
    %s97 = sphi 0, %s83
    %s101 = sphi 0, %s101
    %s103 = sphi 0, %s101
    %s104 = sphi 0, %s103
    %s118 = sphi 0, %s104
    %s122 = sphi 0, %s122
    %s124 = sphi 0, %s122
    %s125 = sphi 0, %s124
    %s139 = sphi 0, %s125
    %s147 = sphi 0, %s149
    %s150 = sphi 0, %s147
    %s151 = sphi 0, %s150
    %s167 = sphi 0, %s151
  $region4: #{g_a_forward.5} parent=0 // loop_header_branch
    %14 = sbr.rel (%p12) target = $region8
  $region5: #{g_a_forward.5} parent=0 // loop_body
    %s16 = ssub.s32 %s11, 1
    %s17 = ssub.s32 %s11, 2
    %s24 = sadd.s32 1, %s19
    %p25 = scmp.ge.s32.totalorder %s24, 1
    %s26 = scalar_select %p25, 0, %s24
    %s27 = sadd.s32 1, %s18
    %s28 = scalar_select %p25, %s27, %s18
    %p29 = scmp.ge.s32.totalorder %s28, 2
    %s30 = scalar_select %p29, 0, %s28
    %s31 = ssub.s32 %s18, %s30
    %s32 = ssub.s32 %s19, %s26
    %s33 = sor.u32 %s31, %s32
    %p34 = scmp.eq.s32.totalorder %s33, 0
    %s36 = sadd.s32 %s35, 1
    %s37 = scalar_select %p34, %s35, %s36
    %p40 = pneg %p34
    %p41 = scmp.eq.s32.totalorder %s11, 1
    %p42 = por %p40, %p41
    %p43 = scmp.ne.s32.totalorder %s35, %s38
    %p44 = scmp.eq.s32.totalorder %s11, 0
    %p45 = por %p43, %p44
    %p46 = scmp.ne.s32.totalorder %s35, %s38
    %p47 = scmp.eq.s32.totalorder %s16, 1
    %p48 = por %p46, %p47
    %p49 = scmp.ne.s32.totalorder %s38, %s39
    %p50 = scmp.eq.s32.totalorder %s16, 0
    %p51 = por %p49, %p50
    %p52 = scmp.ne.s32.totalorder %s38, %s39
    %p53 = scmp.eq.s32.totalorder %s17, 1
    %p54 = por %p52, %p53
    %p56 = scmp.ne.s32.totalorder %s39, %s55
    %p57 = scmp.eq.s32.totalorder %s17, 0
    %p58 = por %p56, %p57
    %s60 = sadd.s32 %s59, 1
    %p63 = scmp.eq.s32.totalorder %s11, 1
    %p64 = scmp.ne.s32.totalorder %s59, %s61
    %p65 = scmp.eq.s32.totalorder %s11, 0
    %p66 = por %p64, %p65
    %p67 = scmp.ne.s32.totalorder %s59, %s61
    %p68 = scmp.eq.s32.totalorder %s16, 1
    %p69 = por %p67, %p68
    %p70 = scmp.ne.s32.totalorder %s61, %s62
    %p71 = scmp.eq.s32.totalorder %s16, 0
    %p72 = por %p70, %p71
    %p73 = scmp.ne.s32.totalorder %s61, %s62
    %p74 = scmp.eq.s32.totalorder %s17, 1
    %p75 = por %p73, %p74
    %p77 = scmp.ne.s32.totalorder %s62, %s76
    %p78 = scmp.eq.s32.totalorder %s17, 0
    %p79 = por %p77, %p78
    %s81 = sadd.s32 %s80, 1
    %p84 = scmp.eq.s32.totalorder %s11, 1
    %p85 = scmp.ne.s32.totalorder %s80, %s82
    %p86 = scmp.eq.s32.totalorder %s11, 0
    %p87 = por %p85, %p86
    %p88 = scmp.ne.s32.totalorder %s80, %s82
    %p89 = scmp.eq.s32.totalorder %s16, 1
    %p90 = por %p88, %p89
    %p91 = scmp.ne.s32.totalorder %s82, %s83
    %p92 = scmp.eq.s32.totalorder %s16, 0
    %p93 = por %p91, %p92
    %p94 = scmp.ne.s32.totalorder %s82, %s83
    %p95 = scmp.eq.s32.totalorder %s17, 1
    %p96 = por %p94, %p95
    %p98 = scmp.ne.s32.totalorder %s83, %s97
    %p99 = scmp.eq.s32.totalorder %s17, 0
    %p100 = por %p98, %p99
    %s102 = sadd.s32 %s101, 1
    %p105 = scmp.eq.s32.totalorder %s11, 1
    %p106 = scmp.ne.s32.totalorder %s101, %s103
    %p107 = scmp.eq.s32.totalorder %s11, 0
    %p108 = por %p106, %p107
    %p109 = scmp.ne.s32.totalorder %s101, %s103
    %p110 = scmp.eq.s32.totalorder %s16, 1
    %p111 = por %p109, %p110
    %p112 = scmp.ne.s32.totalorder %s103, %s104
    %p113 = scmp.eq.s32.totalorder %s16, 0
    %p114 = por %p112, %p113
    %p115 = scmp.ne.s32.totalorder %s103, %s104
    %p116 = scmp.eq.s32.totalorder %s17, 1
    %p117 = por %p115, %p116
    %p119 = scmp.ne.s32.totalorder %s104, %s118
    %p120 = scmp.eq.s32.totalorder %s17, 0
    %p121 = por %p119, %p120
    %s123 = sadd.s32 %s122, 1
    %p126 = scmp.eq.s32.totalorder %s11, 1
    %p127 = scmp.ne.s32.totalorder %s122, %s124
    %p128 = scmp.eq.s32.totalorder %s11, 0
    %p129 = por %p127, %p128
    %p130 = scmp.ne.s32.totalorder %s122, %s124
    %p131 = scmp.eq.s32.totalorder %s16, 1
    %p132 = por %p130, %p131
    %p133 = scmp.ne.s32.totalorder %s124, %s125
    %p134 = scmp.eq.s32.totalorder %s16, 0
    %p135 = por %p133, %p134
    %p136 = scmp.ne.s32.totalorder %s124, %s125
    %p137 = scmp.eq.s32.totalorder %s17, 1
    %p138 = por %p136, %p137
    %p140 = scmp.ne.s32.totalorder %s125, %s139
    %p141 = scmp.eq.s32.totalorder %s17, 0
    %p142 = por %p140, %p141
    %s143 = ssub.s32 %s18, %s30
    %s144 = ssub.s32 %s19, %s26
    %s145 = sor.u32 %s143, %s144
    %p146 = scmp.eq.s32.totalorder %s145, 0
    %s148 = sadd.s32 %s147, 1
    %s149 = scalar_select %p146, %s147, %s148
    %p152 = pneg %p146
    %p153 = scmp.eq.s32.totalorder %s11, 1
    %p154 = por %p152, %p153
    %p155 = scmp.ne.s32.totalorder %s147, %s150
    %p156 = scmp.eq.s32.totalorder %s11, 0
    %p157 = por %p155, %p156
    %p158 = scmp.ne.s32.totalorder %s147, %s150
    %p159 = scmp.eq.s32.totalorder %s16, 1
    %p160 = por %p158, %p159
    %p161 = scmp.ne.s32.totalorder %s150, %s151
    %p162 = scmp.eq.s32.totalorder %s16, 0
    %p163 = por %p161, %p162
    %p164 = scmp.ne.s32.totalorder %s150, %s151
    %p165 = scmp.eq.s32.totalorder %s17, 1
    %p166 = por %p164, %p165
    %p168 = scmp.ne.s32.totalorder %s151, %s167
    %p169 = scmp.eq.s32.totalorder %s17, 0
    %p170 = por %p168, %p169
    %p171 = scmp.le.s32.totalorder 1, %s11
    %p172 = scmp.lt.s32.totalorder %s11, 3
    %p173 = pnand %p171, %p172
    %p174 = pneg %p173
    // Predicated region
    $region9: #{g_a_forward.5} parent=5 // pred_check
      _
    $region10: #{g_a_forward.5} parent=5 // pred_check_branch
      %176 = sbr.rel (%p173) target = $region12
    $region11: #{g_a_forward.5} parent=5 // pred_region
      %s177 = ssub.s32 %s11, 1
      // Predicated region
      $region13: #{g_a_forward.5} parent=11 // pred_check
        %p178 = pneg %p72
      $region14: #{g_a_forward.5} parent=11 // pred_check_branch
        %180 = sbr.rel (%p178) target = $region16
      $region15: #{g_a_forward.5} parent=11 // pred_region
        _
      $region16: #{g_a_forward.5} parent=11 // pred_fallthru
        _
      // Predicated region
      $region17: #{g_a_forward.5} parent=11 // pred_check
        %p181 = pneg %p93
      $region18: #{g_a_forward.5} parent=11 // pred_check_branch
        %183 = sbr.rel (%p181) target = $region20
      $region19: #{g_a_forward.5} parent=11 // pred_region
        _
      $region20: #{g_a_forward.5} parent=11 // pred_fallthru
        _
      // Predicated region
      $region21: #{g_a_forward.5} parent=11 // pred_check
        %p184 = pneg %p114
      $region22: #{g_a_forward.5} parent=11 // pred_check_branch
        %186 = sbr.rel (%p184) target = $region24
      $region23: #{g_a_forward.5} parent=11 // pred_region
        _
      $region24: #{g_a_forward.5} parent=11 // pred_fallthru
        _
      // Predicated region
      $region25: #{g_a_forward.5} parent=11 // pred_check
        %p187 = pneg %p135
      $region26: #{g_a_forward.5} parent=11 // pred_check_branch
        %189 = sbr.rel (%p187) target = $region28
      $region27: #{g_a_forward.5} parent=11 // pred_region
        _
      $region28: #{g_a_forward.5} parent=11 // pred_fallthru
        _
    $region12: #{g_a_forward.5} parent=5 // pred_fallthru
      _
    %p190 = scmp.lt.s32.totalorder %s11, 2
    // Predicated region
    $region29: #{g_a_forward.5} parent=5 // pred_check
      %p191 = pneg %p190
    $region30: #{g_a_forward.5} parent=5 // pred_check_branch
      %193 = sbr.rel (%p191) target = $region32
    $region31: #{g_a_forward.5} parent=5 // pred_region
      // Predicated region
      $region33: #{g_a_forward.5} parent=31 // pred_check
        %p194 = pneg %p45
      $region34: #{g_a_forward.5} parent=31 // pred_check_branch
        %196 = sbr.rel (%p194) target = $region36
      $region35: #{g_a_forward.5} parent=31 // pred_region
        %p197 = scmp.lt.s32.totalorder %s18, 1
        %s198 = scalar_select %p197, %s18, 1
        %p199 = scmp.lt.s32.totalorder %s19, 0
        %s200 = scalar_select %p199, %s19, 0
        %s201 = smul.addr %s200, 72
        %s202 = smul.addr %s198, 72
        %s203 = sadd.s32 %s201, %s202
        %s204 = smul.addr %s203, 4
        %s205 = scalar_lea.vmem %s0, %s204
      $region36: #{g_a_forward.5} parent=31 // pred_fallthru
        _
    $region32: #{g_a_forward.5} parent=5 // pred_fallthru
      _
    %p206 = scmp.le.s32.totalorder 1, %s11
    %p207 = scmp.lt.s32.totalorder %s11, 3
    %p208 = pnand %p206, %p207
    %p209 = pneg %p208
    // Predicated region
    $region37: #{g_a_forward.5} parent=5 // pred_check
      _
    $region38: #{g_a_forward.5} parent=5 // pred_check_branch
      %211 = sbr.rel (%p208) target = $region40
    $region39: #{g_a_forward.5} parent=5 // pred_region
      %s212 = ssub.s32 %s11, 1
      %p213 = scmp.lt.s32.totalorder %s20, 1
      %s214 = scalar_select %p213, %s20, 1
      %p215 = scmp.lt.s32.totalorder %s21, 0
      %s216 = scalar_select %p215, %s21, 0
      %s217 = smul.addr %s216, 72
      %s218 = smul.addr %s214, 72
      %s219 = sadd.s32 %s217, %s218
      %s220 = smul.addr %s219, 4
      %s221 = scalar_lea.vmem %s0, %s220
      %p222 = pneg %p51
      %p223 = pneg %p48
      %p224 = pneg %p72
      %p225 = pneg %p69
      %p226 = pneg %p93
      %p227 = pneg %p90
      %p228 = pneg %p114
      %p229 = pneg %p111
      %p230 = pneg %p135
      %p231 = pneg %p132
      %p232 = pneg %p163
      %p233 = pneg %p160
      %s234 = smul.u32 16, %s21
      %p235 = scmp.lt.s32.totalorder %s20, 1
      %s236 = scalar_select %p235, %s20, 1
      %p237 = scmp.lt.s32.totalorder %s234, 15
      %s238 = scalar_select %p237, %s234, 15
      %s239 = smul.addr %s236, 16
      %s240 = sadd.s32 %s238, %s239
      %s241 = smul.addr %s240, 4
      %s242 = scalar_lea.vmem %s5, %s241
      %p243 = scmp.lt.s32.totalorder %s20, 1
      %s244 = scalar_select %p243, %s20, 1
      %p245 = scmp.lt.s32.totalorder %s21, 0
      %s246 = scalar_select %p245, %s21, 0
      %s247 = smul.addr %s246, 72
      %s248 = smul.addr %s244, 72
      %s249 = sadd.s32 %s247, %s248
      %s250 = smul.addr %s249, 4
      %s251 = scalar_lea.vmem %s0, %s250
      %s252 = smul.u32 16, %s21
      %p253 = scmp.lt.s32.totalorder %s20, 1
      %s254 = scalar_select %p253, %s20, 1
      %p255 = scmp.lt.s32.totalorder %s252, 15
      %s256 = scalar_select %p255, %s252, 15
      %s257 = smul.addr %s254, 16
      %s258 = sadd.s32 %s256, %s257
      %s259 = smul.addr %s258, 4
      %s260 = scalar_lea.vmem %s5, %s259
      %s261 = smul.u32 16, %s21
      loop: start=0, step=1, limit=16
      $region41: #{g_a_forward.5} parent=39 // loop_pre_header
        _
      $region42: #{g_a_forward.5} parent=39 // loop_header
        %s264 = sphi 0, %s268
        %p265 = scmp.ge.s32.totalorder %s264, 16
      $region43: #{g_a_forward.5} parent=39 // loop_header_branch
        %267 = sbr.rel (%p265) target = $region47
      $region44: #{g_a_forward.5} parent=39 // loop_body
        %s269 = smul.u32 %s264, 4
        %s270 = smul.addr %s269, 4
        %s271 = scalar_lea.vmem %s251, %s270
        %v272 = vld [vmem:[%s271] sm:$0xf]
        %v273 = vld [vmem:[%s271 + $0x4] sm:$0xf]
        %v274 = vld [vmem:[%s271 + $0x8] sm:$0xf]
        %v275 = vld [vmem:[%s271 + $0xc] sm:$0xf]
        %v276 = vld [vmem:[%s1] sm:$0xf]
        %s277 = scalar_lea.vmem %s1, 4
        %v278 = vld [vmem:[%s277] sm:$0xf]
        %v283 = vunpack.c.l.b16 %v272
        %v284 = vunpack.c.l.b16 %v273
        %v285 = vunpack.c.l.b16 %v274
        %v286 = vunpack.c.l.b16 %v275
        %v287 = vpack.c.b16 %v284, %v283
        %v288 = vpack.c.b16 %v286, %v285
        %289 = vrot.lane.b32.xlu0 %v287, 127
        %v290 = vpop.permute.xlu0 %289
        %291 = vrot.lane.b32.xlu0 %v288, 127
        %v292 = vpop.permute.xlu0 %291
        %vm295 = vcmask 261120
        %v297 = vsel %vm295, %v278, 0
        %299 = vmatpush.bf16.msra.mxu0 0
        %300 = vmatpush.bf16.msra.mxu0 0
        %301 = vmatpush.bf16.msra.mxu0 0
        %302 = vmatpush.bf16.msra.mxu0 0
        %303 = vmatpush.bf16.msra.mxu0 0
        %304 = vmatpush.bf16.msra.mxu0 0
        %305 = vmatpush.bf16.msra.mxu0 %v292
        %306 = vmatpush.bf16.msra.mxu0 %v290
        %307 = vmatmul.bf16.gmra.mxu0 %v297
        %v308 = vpop.f32.mrf.mxu0
        %v309 = vadd.f32 0.0, %v308
        %v310 = vpop.f32.mrf.mxu0
        %311 = vdwg.mxu0
        %v315 = vsel %vm295, %v276, 0
        %317 = vmatpush.bf16.msra.mxu0 0
        %318 = vmatpush.bf16.msra.mxu0 0
        %319 = vmatpush.bf16.msra.mxu0 0
        %320 = vmatpush.bf16.msra.mxu0 0
        %321 = vmatpush.bf16.msra.mxu0 0
        %322 = vmatpush.bf16.msra.mxu0 0
        %323 = vmatpush.bf16.msra.mxu0 %v288
        %324 = vmatpush.bf16.msra.mxu0 %v287
        %325 = vmatmul.bf16.gmra.mxu0 %v315
        %v326 = vpop.f32.mrf.mxu0
        %v327 = vadd.f32 %v309, %v326
        %v328 = vpop.f32.mrf.mxu0
        %329 = vdwg.mxu0
        %s330 = scalar_lea.vmem %s1, 8
        %v331 = vld [vmem:[%s330] sm:$0xf]
        %332 = vrot.lane.b32.xlu0 %v287, 126
        %v333 = vpop.permute.xlu0 %332
        %334 = vrot.lane.b32.xlu0 %v288, 126
        %v335 = vpop.permute.xlu0 %334
        %v339 = vsel %vm295, %v331, 0
        %341 = vmatpush.bf16.msra.mxu0 0
        %342 = vmatpush.bf16.msra.mxu0 0
        %343 = vmatpush.bf16.msra.mxu0 0
        %344 = vmatpush.bf16.msra.mxu0 0
        %345 = vmatpush.bf16.msra.mxu0 0
        %346 = vmatpush.bf16.msra.mxu0 0
        %347 = vmatpush.bf16.msra.mxu0 %v335
        %348 = vmatpush.bf16.msra.mxu0 %v333
        %349 = vmatmul.bf16.gmra.mxu0 %v339
        %v350 = vpop.f32.mrf.mxu0
        %v351 = vadd.f32 0.0, %v350
        %v352 = vpop.f32.mrf.mxu0
        %353 = vdwg.mxu0
        %v354 = vadd.f32 %v327, %v351
        %s355 = sadd.s32 %s264, 1
        %s356 = smul.u32 %s355, 4
        %s357 = smul.addr %s356, 4
        %s358 = scalar_lea.vmem %s251, %s357
        %v359 = vld [vmem:[%s358] sm:$0xf]
        %v360 = vld [vmem:[%s358 + $0x4] sm:$0xf]
        %v361 = vld [vmem:[%s358 + $0x8] sm:$0xf]
        %v362 = vld [vmem:[%s358 + $0xc] sm:$0xf]
        %s363 = scalar_lea.vmem %s1, 12
        %v364 = vld [vmem:[%s363] sm:$0xf]
        %v369 = vunpack.c.l.b16 %v359
        %v370 = vunpack.c.l.b16 %v360
        %v371 = vunpack.c.l.b16 %v361
        %v372 = vunpack.c.l.b16 %v362
        %v373 = vpack.c.b16 %v370, %v369
        %v374 = vpack.c.b16 %v372, %v371
        %v378 = vsel %vm295, %v364, 0
        %380 = vmatpush.bf16.msra.mxu0 0
        %381 = vmatpush.bf16.msra.mxu0 0
        %382 = vmatpush.bf16.msra.mxu0 0
        %383 = vmatpush.bf16.msra.mxu0 0
        %384 = vmatpush.bf16.msra.mxu0 0
        %385 = vmatpush.bf16.msra.mxu0 0
        %386 = vmatpush.bf16.msra.mxu0 %v374
        %387 = vmatpush.bf16.msra.mxu0 %v373
        %388 = vmatmul.bf16.gmra.mxu0 %v378
        %v389 = vpop.f32.mrf.mxu0
        %v390 = vadd.f32 0.0, %v389
        %v391 = vpop.f32.mrf.mxu0
        %392 = vdwg.mxu0
        %v393 = vadd.f32 %v354, %v390
        %s394 = scalar_lea.vmem %s1, 16
        %v395 = vld [vmem:[%s394] sm:$0xf]
        %396 = vrot.lane.b32.xlu0 %v373, 127
        %v397 = vpop.permute.xlu0 %396
        %398 = vrot.lane.b32.xlu0 %v374, 127
        %v399 = vpop.permute.xlu0 %398
        %v403 = vsel %vm295, %v395, 0
        %405 = vmatpush.bf16.msra.mxu0 0
        %406 = vmatpush.bf16.msra.mxu0 0
        %407 = vmatpush.bf16.msra.mxu0 0
        %408 = vmatpush.bf16.msra.mxu0 0
        %409 = vmatpush.bf16.msra.mxu0 0
        %410 = vmatpush.bf16.msra.mxu0 0
        %411 = vmatpush.bf16.msra.mxu0 %v399
        %412 = vmatpush.bf16.msra.mxu0 %v397
        %413 = vmatmul.bf16.gmra.mxu0 %v403
        %v414 = vpop.f32.mrf.mxu0
        %v415 = vadd.f32 0.0, %v414
        %v416 = vpop.f32.mrf.mxu0
        %417 = vdwg.mxu0
        %v418 = vadd.f32 %v393, %v415
        %s419 = scalar_lea.vmem %s1, 20
        %v420 = vld [vmem:[%s419] sm:$0xf]
        %421 = vrot.lane.b32.xlu0 %v373, 126
        %v422 = vpop.permute.xlu0 %421
        %423 = vrot.lane.b32.xlu0 %v374, 126
        %v424 = vpop.permute.xlu0 %423
        %v428 = vsel %vm295, %v420, 0
        %430 = vmatpush.bf16.msra.mxu0 0
        %431 = vmatpush.bf16.msra.mxu0 0
        %432 = vmatpush.bf16.msra.mxu0 0
        %433 = vmatpush.bf16.msra.mxu0 0
        %434 = vmatpush.bf16.msra.mxu0 0
        %435 = vmatpush.bf16.msra.mxu0 0
        %436 = vmatpush.bf16.msra.mxu0 %v424
        %437 = vmatpush.bf16.msra.mxu0 %v422
        %438 = vmatmul.bf16.gmra.mxu0 %v428
        %v439 = vpop.f32.mrf.mxu0
        %v440 = vadd.f32 0.0, %v439
        %v441 = vpop.f32.mrf.mxu0
        %442 = vdwg.mxu0
        %v443 = vadd.f32 %v418, %v440
        %s444 = sadd.s32 %s264, 2
        %s445 = smul.u32 %s444, 4
        %s446 = smul.addr %s445, 4
        %s447 = scalar_lea.vmem %s251, %s446
        %v448 = vld [vmem:[%s447] sm:$0xf]
        %v449 = vld [vmem:[%s447 + $0x4] sm:$0xf]
        %v450 = vld [vmem:[%s447 + $0x8] sm:$0xf]
        %v451 = vld [vmem:[%s447 + $0xc] sm:$0xf]
        %s452 = scalar_lea.vmem %s1, 24
        %v453 = vld [vmem:[%s452] sm:$0xf]
        %v458 = vunpack.c.l.b16 %v448
        %v459 = vunpack.c.l.b16 %v449
        %v460 = vunpack.c.l.b16 %v450
        %v461 = vunpack.c.l.b16 %v451
        %v462 = vpack.c.b16 %v459, %v458
        %v463 = vpack.c.b16 %v461, %v460
        %v467 = vsel %vm295, %v453, 0
        %469 = vmatpush.bf16.msra.mxu0 0
        %470 = vmatpush.bf16.msra.mxu0 0
        %471 = vmatpush.bf16.msra.mxu0 0
        %472 = vmatpush.bf16.msra.mxu0 0
        %473 = vmatpush.bf16.msra.mxu0 0
        %474 = vmatpush.bf16.msra.mxu0 0
        %475 = vmatpush.bf16.msra.mxu0 %v463
        %476 = vmatpush.bf16.msra.mxu0 %v462
        %477 = vmatmul.bf16.gmra.mxu0 %v467
        %v478 = vpop.f32.mrf.mxu0
        %v479 = vadd.f32 0.0, %v478
        %v480 = vpop.f32.mrf.mxu0
        %481 = vdwg.mxu0
        %v482 = vadd.f32 %v443, %v479
        %s483 = scalar_lea.vmem %s1, 28
        %v484 = vld [vmem:[%s483] sm:$0xf]
        %485 = vrot.lane.b32.xlu0 %v462, 127
        %v486 = vpop.permute.xlu0 %485
        %487 = vrot.lane.b32.xlu0 %v463, 127
        %v488 = vpop.permute.xlu0 %487
        %v492 = vsel %vm295, %v484, 0
        %494 = vmatpush.bf16.msra.mxu0 0
        %495 = vmatpush.bf16.msra.mxu0 0
        %496 = vmatpush.bf16.msra.mxu0 0
        %497 = vmatpush.bf16.msra.mxu0 0
        %498 = vmatpush.bf16.msra.mxu0 0
        %499 = vmatpush.bf16.msra.mxu0 0
        %500 = vmatpush.bf16.msra.mxu0 %v488
        %501 = vmatpush.bf16.msra.mxu0 %v486
        %502 = vmatmul.bf16.gmra.mxu0 %v492
        %v503 = vpop.f32.mrf.mxu0
        %v504 = vadd.f32 0.0, %v503
        %v505 = vpop.f32.mrf.mxu0
        %506 = vdwg.mxu0
        %v507 = vadd.f32 %v482, %v504
        %s508 = scalar_lea.vmem %s1, 32
        %v509 = vld [vmem:[%s508] sm:$0xf]
        %510 = vrot.lane.b32.xlu0 %v462, 126
        %v511 = vpop.permute.xlu0 %510
        %512 = vrot.lane.b32.xlu0 %v463, 126
        %v513 = vpop.permute.xlu0 %512
        %v517 = vsel %vm295, %v509, 0
        %519 = vmatpush.bf16.msra.mxu0 0
        %520 = vmatpush.bf16.msra.mxu0 0
        %521 = vmatpush.bf16.msra.mxu0 0
        %522 = vmatpush.bf16.msra.mxu0 0
        %523 = vmatpush.bf16.msra.mxu0 0
        %524 = vmatpush.bf16.msra.mxu0 0
        %525 = vmatpush.bf16.msra.mxu0 %v513
        %526 = vmatpush.bf16.msra.mxu0 %v511
        %527 = vmatmul.bf16.gmra.mxu0 %v517
        %v528 = vpop.f32.mrf.mxu0
        %v529 = vadd.f32 0.0, %v528
        %v530 = vpop.f32.mrf.mxu0
        %531 = vdwg.mxu0
        %v532 = vadd.f32 %v507, %v529
        %v533 = vld [vmem:[%s2] sm:$0xff]
        %535 = vset.pattern.permute.xlu0 0
        %536 = vperm.xlu0 %535, %v533
        %v537 = vpop.permute.xlu0 %536
        %v539 = vadd.f32 %v532, %v537
        %v540 = vld [vmem:[%s3] sm:$0xf]
        %v541 = vmul.f32 %v539, %v539
        %v542 = vpack.c.bf16 %v541, %v541
        %v543 = vld [vmem:[%s4] sm:$0xff]
        %545 = vset.pattern.permute.xlu0 0
        %546 = vperm.xlu0 %545, %v543
        %v547 = vpop.permute.xlu0 %546
        %vm549 = vcmask 64512
        %v551 = vsel %vm549, %v540, 0
        %vm553 = vcmask 1043456
        %v555 = vsel %vm553, %v542, 0
        %557 = vmatpush.bf16.msra.mxu0 0
        %558 = vmatpush.bf16.msra.mxu0 0
        %559 = vmatpush.bf16.msra.mxu0 0
        %560 = vmatpush.bf16.msra.mxu0 0
        %561 = vmatpush.bf16.msra.mxu0 0
        %562 = vmatpush.bf16.msra.mxu0 0
        %563 = vmatpush.bf16.msra.mxu0 0
        %564 = vmatpush.bf16.msra.mxu0 %v555
        %565 = vmatmul.bf16.gmra.mxu0 %v551
        %v566 = vpop.f32.mrf.mxu0
        %v567 = vadd.f32 %v547, %v566
        %v568 = vpop.f32.mrf.mxu0
        %569 = vdwg.mxu0
        %v570 = vrsqrt.pop %v567
        %v571 = vmul.f32 %v570, %v567
        %v572 = vmul.f32 %v571, %v570
        %v573 = vmul.f32 0.5, %v572
        %v574 = vsub.f32 1.5, %v573
        %v575 = vmul.f32 %v570, %v574
        %vm576 = vweird.f32 %v567
        %vm577 = vweird.f32 %v570
        %vm578 = vmor %vm576, %vm577
        %v579 = vsel %vm578, %v570, %v575
        %v580 = vmul.f32 %v539, %v579
        %v581 = vpack.c.bf16 %v580, %v580
        %s582 = smul.addr %s264, 4
        %s583 = scalar_lea.vmem %s260, %s582
        %vm584 = vcmask 125952
        %585 = vst.msk [vmem:[%s583] sm:$0xf] %vm584, %v581
      $region45: #{g_a_forward.5} parent=39 // loop_footer
        %s268 = sadd.s32 1, %s264
      $region46: #{g_a_forward.5} parent=39 // loop_footer_branch
        %263 = sbr.rel target = $region42
      $region47: #{g_a_forward.5} parent=39 // loop_exit
        _
      %s586 = smul.u32 16, %s21
      %p587 = scmp.lt.s32.totalorder %s20, 1
      %s588 = scalar_select %p587, %s20, 1
      %p589 = scmp.lt.s32.totalorder %s586, 15
      %s590 = scalar_select %p589, %s586, 15
      %s591 = smul.addr %s588, 16
      %s592 = sadd.s32 %s590, %s591
      %s593 = smul.addr %s592, 4
      %s594 = scalar_lea.vmem %s5, %s593
      // Predicated region
      $region48: #{g_a_forward.5} parent=39 // pred_check
        %p595 = pneg %p160
      $region49: #{g_a_forward.5} parent=39 // pred_check_branch
        %597 = sbr.rel (%p595) target = $region51
      $region50: #{g_a_forward.5} parent=39 // pred_region
        %s598 = smul.u32 16, %s21
      $region51: #{g_a_forward.5} parent=39 // pred_fallthru
        _
    $region40: #{g_a_forward.5} parent=5 // pred_fallthru
      _
    %p599 = scmp.le.s32.totalorder 2, %s11
    // Predicated region
    $region52: #{g_a_forward.5} parent=5 // pred_check
      %p600 = pneg %p599
    $region53: #{g_a_forward.5} parent=5 // pred_check_branch
      %602 = sbr.rel (%p600) target = $region55
    $region54: #{g_a_forward.5} parent=5 // pred_region
      %s603 = ssub.s32 %s11, 2
      // Predicated region
      $region56: #{g_a_forward.5} parent=54 // pred_check
        %p604 = pneg %p166
      $region57: #{g_a_forward.5} parent=54 // pred_check_branch
        %606 = sbr.rel (%p604) target = $region59
      $region58: #{g_a_forward.5} parent=54 // pred_region
        %s607 = smul.u32 16, %s23
        %p608 = scmp.lt.s32.totalorder %s22, 1
        %s609 = scalar_select %p608, %s22, 1
        %p610 = scmp.lt.s32.totalorder %s607, 15
        %s611 = scalar_select %p610, %s607, 15
        %s612 = smul.addr %s609, 16
        %s613 = sadd.s32 %s611, %s612
        %s614 = smul.addr %s613, 4
        %s615 = scalar_lea.vmem %s5, %s614
      $region59: #{g_a_forward.5} parent=54 // pred_fallthru
        _
    $region55: #{g_a_forward.5} parent=5 // pred_fallthru
      _
  $region6: #{g_a_forward.5} parent=0 // loop_footer
    %s15 = sadd.s32 1, %s11
  $region7: #{g_a_forward.5} parent=0 // loop_footer_branch
    %10 = sbr.rel target = $region3
  $region8: #{g_a_forward.5} parent=0 // loop_exit
    _

// kernel: g_a_forward.6
$region0: #{g_a_forward.6}
  #allocation0 [shape = 'u32[]', space=smem, size = 0x4, offset = 0x4, fixed_abs, tag = 'smem constant byte address 0x4 - core index']
  #allocation1 [shape = 'u32[72,128]{1,0:T(1,128)}', space=vmem, size = 0x9000, scoped, tag = 'internal scratch']
  %s0 = inlined_call_operand.vmem [shape: bf16[2,1,10,32,10], index: 0, kind: input, shape index: {}]
  %s1 = inlined_call_operand.vmem [shape: bf16[9,8,32], index: 1, kind: input, shape index: {}]
  %s2 = inlined_call_operand.vmem [shape: f32[8,1], index: 2, kind: input, shape index: {}]
  %s3 = inlined_call_operand.vmem [shape: bf16[8,8], index: 3, kind: input, shape index: {}]
  %s4 = inlined_call_operand.vmem [shape: f32[8,1], index: 4, kind: input, shape index: {}]
  %s5 = inlined_call_operand.vmem [shape: bf16[2,8,8,8], index: 5, kind: output, shape index: {}]
  %s6 = sld [smem:[#allocation0]]
  $region60: #{g_a_forward.6} parent=0
    _
  %s8 = ssub.s32 1, %s6
  %s9 = scalar_select 0, %s8, %s6
  loop: start=0, step=1, limit=4
  $region2: #{g_a_forward.6} parent=0 // loop_pre_header
    _
  $region3: #{g_a_forward.6} parent=0 // loop_header
    %s11 = sphi 0, %s15
    %p12 = scmp.ge.s32.totalorder %s11, 4
    %s18 = sphi 0, %s30
    %s19 = sphi 0, %s26
    %s20 = sphi 0, %s18
    %s21 = sphi 0, %s19
    %s22 = sphi 0, %s20
    %s23 = sphi 0, %s21
    %s35 = sphi 0, %s37
    %s38 = sphi 0, %s35
    %s39 = sphi 0, %s38
    %s55 = sphi 0, %s39
    %s59 = sphi 0, %s59
    %s61 = sphi 0, %s59
    %s62 = sphi 0, %s61
    %s76 = sphi 0, %s62
    %s80 = sphi 0, %s80
    %s82 = sphi 0, %s80
    %s83 = sphi 0, %s82
    %s97 = sphi 0, %s83
    %s101 = sphi 0, %s101
    %s103 = sphi 0, %s101
    %s104 = sphi 0, %s103
    %s118 = sphi 0, %s104
    %s122 = sphi 0, %s122
    %s124 = sphi 0, %s122
    %s125 = sphi 0, %s124
    %s139 = sphi 0, %s125
    %s147 = sphi 0, %s149
    %s150 = sphi 0, %s147
    %s151 = sphi 0, %s150
    %s167 = sphi 0, %s151
  $region4: #{g_a_forward.6} parent=0 // loop_header_branch
    %14 = sbr.rel (%p12) target = $region8
  $region5: #{g_a_forward.6} parent=0 // loop_body
    %s16 = ssub.s32 %s11, 1
    %s17 = ssub.s32 %s11, 2
    %s24 = sadd.s32 1, %s19
    %p25 = scmp.ge.s32.totalorder %s24, 1
    %s26 = scalar_select %p25, 0, %s24
    %s27 = sadd.s32 1, %s18
    %s28 = scalar_select %p25, %s27, %s18
    %p29 = scmp.ge.s32.totalorder %s28, 2
    %s30 = scalar_select %p29, 0, %s28
    %s31 = ssub.s32 %s18, %s30
    %s32 = ssub.s32 %s19, %s26
    %s33 = sor.u32 %s31, %s32
    %p34 = scmp.eq.s32.totalorder %s33, 0
    %s36 = sadd.s32 %s35, 1
    %s37 = scalar_select %p34, %s35, %s36
    %p40 = pneg %p34
    %p41 = scmp.eq.s32.totalorder %s11, 1
    %p42 = por %p40, %p41
    %p43 = scmp.ne.s32.totalorder %s35, %s38
    %p44 = scmp.eq.s32.totalorder %s11, 0
    %p45 = por %p43, %p44
    %p46 = scmp.ne.s32.totalorder %s35, %s38
    %p47 = scmp.eq.s32.totalorder %s16, 1
    %p48 = por %p46, %p47
    %p49 = scmp.ne.s32.totalorder %s38, %s39
    %p50 = scmp.eq.s32.totalorder %s16, 0
    %p51 = por %p49, %p50
    %p52 = scmp.ne.s32.totalorder %s38, %s39
    %p53 = scmp.eq.s32.totalorder %s17, 1
    %p54 = por %p52, %p53
    %p56 = scmp.ne.s32.totalorder %s39, %s55
    %p57 = scmp.eq.s32.totalorder %s17, 0
    %p58 = por %p56, %p57
    %s60 = sadd.s32 %s59, 1
    %p63 = scmp.eq.s32.totalorder %s11, 1
    %p64 = scmp.ne.s32.totalorder %s59, %s61
    %p65 = scmp.eq.s32.totalorder %s11, 0
    %p66 = por %p64, %p65
    %p67 = scmp.ne.s32.totalorder %s59, %s61
    %p68 = scmp.eq.s32.totalorder %s16, 1
    %p69 = por %p67, %p68
    %p70 = scmp.ne.s32.totalorder %s61, %s62
    %p71 = scmp.eq.s32.totalorder %s16, 0
    %p72 = por %p70, %p71
    %p73 = scmp.ne.s32.totalorder %s61, %s62
    %p74 = scmp.eq.s32.totalorder %s17, 1
    %p75 = por %p73, %p74
    %p77 = scmp.ne.s32.totalorder %s62, %s76
    %p78 = scmp.eq.s32.totalorder %s17, 0
    %p79 = por %p77, %p78
    %s81 = sadd.s32 %s80, 1
    %p84 = scmp.eq.s32.totalorder %s11, 1
    %p85 = scmp.ne.s32.totalorder %s80, %s82
    %p86 = scmp.eq.s32.totalorder %s11, 0
    %p87 = por %p85, %p86
    %p88 = scmp.ne.s32.totalorder %s80, %s82
    %p89 = scmp.eq.s32.totalorder %s16, 1
    %p90 = por %p88, %p89
    %p91 = scmp.ne.s32.totalorder %s82, %s83
    %p92 = scmp.eq.s32.totalorder %s16, 0
    %p93 = por %p91, %p92
    %p94 = scmp.ne.s32.totalorder %s82, %s83
    %p95 = scmp.eq.s32.totalorder %s17, 1
    %p96 = por %p94, %p95
    %p98 = scmp.ne.s32.totalorder %s83, %s97
    %p99 = scmp.eq.s32.totalorder %s17, 0
    %p100 = por %p98, %p99
    %s102 = sadd.s32 %s101, 1
    %p105 = scmp.eq.s32.totalorder %s11, 1
    %p106 = scmp.ne.s32.totalorder %s101, %s103
    %p107 = scmp.eq.s32.totalorder %s11, 0
    %p108 = por %p106, %p107
    %p109 = scmp.ne.s32.totalorder %s101, %s103
    %p110 = scmp.eq.s32.totalorder %s16, 1
    %p111 = por %p109, %p110
    %p112 = scmp.ne.s32.totalorder %s103, %s104
    %p113 = scmp.eq.s32.totalorder %s16, 0
    %p114 = por %p112, %p113
    %p115 = scmp.ne.s32.totalorder %s103, %s104
    %p116 = scmp.eq.s32.totalorder %s17, 1
    %p117 = por %p115, %p116
    %p119 = scmp.ne.s32.totalorder %s104, %s118
    %p120 = scmp.eq.s32.totalorder %s17, 0
    %p121 = por %p119, %p120
    %s123 = sadd.s32 %s122, 1
    %p126 = scmp.eq.s32.totalorder %s11, 1
    %p127 = scmp.ne.s32.totalorder %s122, %s124
    %p128 = scmp.eq.s32.totalorder %s11, 0
    %p129 = por %p127, %p128
    %p130 = scmp.ne.s32.totalorder %s122, %s124
    %p131 = scmp.eq.s32.totalorder %s16, 1
    %p132 = por %p130, %p131
    %p133 = scmp.ne.s32.totalorder %s124, %s125
    %p134 = scmp.eq.s32.totalorder %s16, 0
    %p135 = por %p133, %p134
    %p136 = scmp.ne.s32.totalorder %s124, %s125
    %p137 = scmp.eq.s32.totalorder %s17, 1
    %p138 = por %p136, %p137
    %p140 = scmp.ne.s32.totalorder %s125, %s139
    %p141 = scmp.eq.s32.totalorder %s17, 0
    %p142 = por %p140, %p141
    %s143 = ssub.s32 %s18, %s30
    %s144 = ssub.s32 %s19, %s26
    %s145 = sor.u32 %s143, %s144
    %p146 = scmp.eq.s32.totalorder %s145, 0
    %s148 = sadd.s32 %s147, 1
    %s149 = scalar_select %p146, %s147, %s148
    %p152 = pneg %p146
    %p153 = scmp.eq.s32.totalorder %s11, 1
    %p154 = por %p152, %p153
    %p155 = scmp.ne.s32.totalorder %s147, %s150
    %p156 = scmp.eq.s32.totalorder %s11, 0
    %p157 = por %p155, %p156
    %p158 = scmp.ne.s32.totalorder %s147, %s150
    %p159 = scmp.eq.s32.totalorder %s16, 1
    %p160 = por %p158, %p159
    %p161 = scmp.ne.s32.totalorder %s150, %s151
    %p162 = scmp.eq.s32.totalorder %s16, 0
    %p163 = por %p161, %p162
    %p164 = scmp.ne.s32.totalorder %s150, %s151
    %p165 = scmp.eq.s32.totalorder %s17, 1
    %p166 = por %p164, %p165
    %p168 = scmp.ne.s32.totalorder %s151, %s167
    %p169 = scmp.eq.s32.totalorder %s17, 0
    %p170 = por %p168, %p169
    %p171 = scmp.le.s32.totalorder 1, %s11
    %p172 = scmp.lt.s32.totalorder %s11, 3
    %p173 = pnand %p171, %p172
    %p174 = pneg %p173
    // Predicated region
    $region9: #{g_a_forward.6} parent=5 // pred_check
      _
    $region10: #{g_a_forward.6} parent=5 // pred_check_branch
      %176 = sbr.rel (%p173) target = $region12
    $region11: #{g_a_forward.6} parent=5 // pred_region
      %s177 = ssub.s32 %s11, 1
      // Predicated region
      $region13: #{g_a_forward.6} parent=11 // pred_check
        %p178 = pneg %p72
      $region14: #{g_a_forward.6} parent=11 // pred_check_branch
        %180 = sbr.rel (%p178) target = $region16
      $region15: #{g_a_forward.6} parent=11 // pred_region
        _
      $region16: #{g_a_forward.6} parent=11 // pred_fallthru
        _
      // Predicated region
      $region17: #{g_a_forward.6} parent=11 // pred_check
        %p181 = pneg %p93
      $region18: #{g_a_forward.6} parent=11 // pred_check_branch
        %183 = sbr.rel (%p181) target = $region20
      $region19: #{g_a_forward.6} parent=11 // pred_region
        _
      $region20: #{g_a_forward.6} parent=11 // pred_fallthru
        _
      // Predicated region
      $region21: #{g_a_forward.6} parent=11 // pred_check
        %p184 = pneg %p114
      $region22: #{g_a_forward.6} parent=11 // pred_check_branch
        %186 = sbr.rel (%p184) target = $region24
      $region23: #{g_a_forward.6} parent=11 // pred_region
        _
      $region24: #{g_a_forward.6} parent=11 // pred_fallthru
        _
      // Predicated region
      $region25: #{g_a_forward.6} parent=11 // pred_check
        %p187 = pneg %p135
      $region26: #{g_a_forward.6} parent=11 // pred_check_branch
        %189 = sbr.rel (%p187) target = $region28
      $region27: #{g_a_forward.6} parent=11 // pred_region
        _
      $region28: #{g_a_forward.6} parent=11 // pred_fallthru
        _
    $region12: #{g_a_forward.6} parent=5 // pred_fallthru
      _
    %p190 = scmp.lt.s32.totalorder %s11, 2
    // Predicated region
    $region29: #{g_a_forward.6} parent=5 // pred_check
      %p191 = pneg %p190
    $region30: #{g_a_forward.6} parent=5 // pred_check_branch
      %193 = sbr.rel (%p191) target = $region32
    $region31: #{g_a_forward.6} parent=5 // pred_region
      // Predicated region
      $region33: #{g_a_forward.6} parent=31 // pred_check
        %p194 = pneg %p45
      $region34: #{g_a_forward.6} parent=31 // pred_check_branch
        %196 = sbr.rel (%p194) target = $region36
      $region35: #{g_a_forward.6} parent=31 // pred_region
        %p197 = scmp.lt.s32.totalorder %s18, 1
        %s198 = scalar_select %p197, %s18, 1
        %p199 = scmp.lt.s32.totalorder %s19, 0
        %s200 = scalar_select %p199, %s19, 0
        %s201 = smul.addr %s200, 40
        %s202 = smul.addr %s198, 40
        %s203 = sadd.s32 %s201, %s202
        %s204 = smul.addr %s203, 4
        %s205 = scalar_lea.vmem %s0, %s204
      $region36: #{g_a_forward.6} parent=31 // pred_fallthru
        _
    $region32: #{g_a_forward.6} parent=5 // pred_fallthru
      _
    %p206 = scmp.le.s32.totalorder 1, %s11
    %p207 = scmp.lt.s32.totalorder %s11, 3
    %p208 = pnand %p206, %p207
    %p209 = pneg %p208
    // Predicated region
    $region37: #{g_a_forward.6} parent=5 // pred_check
      _
    $region38: #{g_a_forward.6} parent=5 // pred_check_branch
      %211 = sbr.rel (%p208) target = $region40
    $region39: #{g_a_forward.6} parent=5 // pred_region
      %s212 = ssub.s32 %s11, 1
      %p213 = scmp.lt.s32.totalorder %s20, 1
      %s214 = scalar_select %p213, %s20, 1
      %p215 = scmp.lt.s32.totalorder %s21, 0
      %s216 = scalar_select %p215, %s21, 0
      %s217 = smul.addr %s216, 40
      %s218 = smul.addr %s214, 40
      %s219 = sadd.s32 %s217, %s218
      %s220 = smul.addr %s219, 4
      %s221 = scalar_lea.vmem %s0, %s220
      %p222 = pneg %p51
      %p223 = pneg %p48
      %p224 = pneg %p72
      %p225 = pneg %p69
      %p226 = pneg %p93
      %p227 = pneg %p90
      %p228 = pneg %p114
      %p229 = pneg %p111
      %p230 = pneg %p135
      %p231 = pneg %p132
      %p232 = pneg %p163
      %p233 = pneg %p160
      %s234 = smul.u32 8, %s21
      %p235 = scmp.lt.s32.totalorder %s20, 1
      %s236 = scalar_select %p235, %s20, 1
      %p237 = scmp.lt.s32.totalorder %s234, 7
      %s238 = scalar_select %p237, %s234, 7
      %s239 = smul.addr %s236, 8
      %s240 = sadd.s32 %s238, %s239
      %s241 = smul.addr %s240, 4
      %s242 = scalar_lea.vmem %s5, %s241
      %p243 = scmp.lt.s32.totalorder %s20, 1
      %s244 = scalar_select %p243, %s20, 1
      %p245 = scmp.lt.s32.totalorder %s21, 0
      %s246 = scalar_select %p245, %s21, 0
      %s247 = smul.addr %s246, 40
      %s248 = smul.addr %s244, 40
      %s249 = sadd.s32 %s247, %s248
      %s250 = smul.addr %s249, 4
      %s251 = scalar_lea.vmem %s0, %s250
      %s252 = smul.u32 8, %s21
      %p253 = scmp.lt.s32.totalorder %s20, 1
      %s254 = scalar_select %p253, %s20, 1
      %p255 = scmp.lt.s32.totalorder %s252, 7
      %s256 = scalar_select %p255, %s252, 7
      %s257 = smul.addr %s254, 8
      %s258 = sadd.s32 %s256, %s257
      %s259 = smul.addr %s258, 4
      %s260 = scalar_lea.vmem %s5, %s259
      %s261 = smul.u32 8, %s21
      loop: start=0, step=1, limit=8
      $region41: #{g_a_forward.6} parent=39 // loop_pre_header
        _
      $region42: #{g_a_forward.6} parent=39 // loop_header
        %s264 = sphi 0, %s268
        %p265 = scmp.ge.s32.totalorder %s264, 8
      $region43: #{g_a_forward.6} parent=39 // loop_header_branch
        %267 = sbr.rel (%p265) target = $region47
      $region44: #{g_a_forward.6} parent=39 // loop_body
        %s269 = smul.u32 %s264, 4
        %s270 = smul.addr %s269, 4
        %s271 = scalar_lea.vmem %s251, %s270
        %v272 = vld [vmem:[%s271] sm:$0xf]
        %v273 = vld [vmem:[%s271 + $0x4] sm:$0xf]
        %v274 = vld [vmem:[%s271 + $0x8] sm:$0xf]
        %v275 = vld [vmem:[%s271 + $0xc] sm:$0xf]
        %v276 = vld [vmem:[%s1] sm:$0xf]
        %s277 = scalar_lea.vmem %s1, 4
        %v278 = vld [vmem:[%s277] sm:$0xf]
        %v283 = vunpack.c.l.b16 %v272
        %v284 = vunpack.c.l.b16 %v273
        %v285 = vunpack.c.l.b16 %v274
        %v286 = vunpack.c.l.b16 %v275
        %v287 = vpack.c.b16 %v284, %v283
        %v288 = vpack.c.b16 %v286, %v285
        %289 = vrot.lane.b32.xlu0 %v287, 127
        %v290 = vpop.permute.xlu0 %289
        %291 = vrot.lane.b32.xlu0 %v288, 127
        %v292 = vpop.permute.xlu0 %291
        %vm295 = vcmask 261120
        %v297 = vsel %vm295, %v278, 0
        %299 = vmatpush.bf16.msra.mxu0 0
        %300 = vmatpush.bf16.msra.mxu0 0
        %301 = vmatpush.bf16.msra.mxu0 0
        %302 = vmatpush.bf16.msra.mxu0 0
        %303 = vmatpush.bf16.msra.mxu0 0
        %304 = vmatpush.bf16.msra.mxu0 0
        %305 = vmatpush.bf16.msra.mxu0 %v292
        %306 = vmatpush.bf16.msra.mxu0 %v290
        %307 = vmatmul.bf16.gmra.mxu0 %v297
        %v308 = vpop.f32.mrf.mxu0
        %v309 = vadd.f32 0.0, %v308
        %v310 = vpop.f32.mrf.mxu0
        %311 = vdwg.mxu0
        %v315 = vsel %vm295, %v276, 0
        %317 = vmatpush.bf16.msra.mxu0 0
        %318 = vmatpush.bf16.msra.mxu0 0
        %319 = vmatpush.bf16.msra.mxu0 0
        %320 = vmatpush.bf16.msra.mxu0 0
        %321 = vmatpush.bf16.msra.mxu0 0
        %322 = vmatpush.bf16.msra.mxu0 0
        %323 = vmatpush.bf16.msra.mxu0 %v288
        %324 = vmatpush.bf16.msra.mxu0 %v287
        %325 = vmatmul.bf16.gmra.mxu0 %v315
        %v326 = vpop.f32.mrf.mxu0
        %v327 = vadd.f32 %v309, %v326
        %v328 = vpop.f32.mrf.mxu0
        %329 = vdwg.mxu0
        %s330 = scalar_lea.vmem %s1, 8
        %v331 = vld [vmem:[%s330] sm:$0xf]
        %332 = vrot.lane.b32.xlu0 %v287, 126
        %v333 = vpop.permute.xlu0 %332
        %334 = vrot.lane.b32.xlu0 %v288, 126
        %v335 = vpop.permute.xlu0 %334
        %v339 = vsel %vm295, %v331, 0
        %341 = vmatpush.bf16.msra.mxu0 0
        %342 = vmatpush.bf16.msra.mxu0 0
        %343 = vmatpush.bf16.msra.mxu0 0
        %344 = vmatpush.bf16.msra.mxu0 0
        %345 = vmatpush.bf16.msra.mxu0 0
        %346 = vmatpush.bf16.msra.mxu0 0
        %347 = vmatpush.bf16.msra.mxu0 %v335
        %348 = vmatpush.bf16.msra.mxu0 %v333
        %349 = vmatmul.bf16.gmra.mxu0 %v339
        %v350 = vpop.f32.mrf.mxu0
        %v351 = vadd.f32 0.0, %v350
        %v352 = vpop.f32.mrf.mxu0
        %353 = vdwg.mxu0
        %v354 = vadd.f32 %v327, %v351
        %s355 = sadd.s32 %s264, 1
        %s356 = smul.u32 %s355, 4
        %s357 = smul.addr %s356, 4
        %s358 = scalar_lea.vmem %s251, %s357
        %v359 = vld [vmem:[%s358] sm:$0xf]
        %v360 = vld [vmem:[%s358 + $0x4] sm:$0xf]
        %v361 = vld [vmem:[%s358 + $0x8] sm:$0xf]
        %v362 = vld [vmem:[%s358 + $0xc] sm:$0xf]
        %s363 = scalar_lea.vmem %s1, 12
        %v364 = vld [vmem:[%s363] sm:$0xf]
        %v369 = vunpack.c.l.b16 %v359
        %v370 = vunpack.c.l.b16 %v360
        %v371 = vunpack.c.l.b16 %v361
        %v372 = vunpack.c.l.b16 %v362
        %v373 = vpack.c.b16 %v370, %v369
        %v374 = vpack.c.b16 %v372, %v371
        %v378 = vsel %vm295, %v364, 0
        %380 = vmatpush.bf16.msra.mxu0 0
        %381 = vmatpush.bf16.msra.mxu0 0
        %382 = vmatpush.bf16.msra.mxu0 0
        %383 = vmatpush.bf16.msra.mxu0 0
        %384 = vmatpush.bf16.msra.mxu0 0
        %385 = vmatpush.bf16.msra.mxu0 0
        %386 = vmatpush.bf16.msra.mxu0 %v374
        %387 = vmatpush.bf16.msra.mxu0 %v373
        %388 = vmatmul.bf16.gmra.mxu0 %v378
        %v389 = vpop.f32.mrf.mxu0
        %v390 = vadd.f32 0.0, %v389
        %v391 = vpop.f32.mrf.mxu0
        %392 = vdwg.mxu0
        %v393 = vadd.f32 %v354, %v390
        %s394 = scalar_lea.vmem %s1, 16
        %v395 = vld [vmem:[%s394] sm:$0xf]
        %396 = vrot.lane.b32.xlu0 %v373, 127
        %v397 = vpop.permute.xlu0 %396
        %398 = vrot.lane.b32.xlu0 %v374, 127
        %v399 = vpop.permute.xlu0 %398
        %v403 = vsel %vm295, %v395, 0
        %405 = vmatpush.bf16.msra.mxu0 0
        %406 = vmatpush.bf16.msra.mxu0 0
        %407 = vmatpush.bf16.msra.mxu0 0
        %408 = vmatpush.bf16.msra.mxu0 0
        %409 = vmatpush.bf16.msra.mxu0 0
        %410 = vmatpush.bf16.msra.mxu0 0
        %411 = vmatpush.bf16.msra.mxu0 %v399
        %412 = vmatpush.bf16.msra.mxu0 %v397
        %413 = vmatmul.bf16.gmra.mxu0 %v403
        %v414 = vpop.f32.mrf.mxu0
        %v415 = vadd.f32 0.0, %v414
        %v416 = vpop.f32.mrf.mxu0
        %417 = vdwg.mxu0
        %v418 = vadd.f32 %v393, %v415
        %s419 = scalar_lea.vmem %s1, 20
        %v420 = vld [vmem:[%s419] sm:$0xf]
        %421 = vrot.lane.b32.xlu0 %v373, 126
        %v422 = vpop.permute.xlu0 %421
        %423 = vrot.lane.b32.xlu0 %v374, 126
        %v424 = vpop.permute.xlu0 %423
        %v428 = vsel %vm295, %v420, 0
        %430 = vmatpush.bf16.msra.mxu0 0
        %431 = vmatpush.bf16.msra.mxu0 0
        %432 = vmatpush.bf16.msra.mxu0 0
        %433 = vmatpush.bf16.msra.mxu0 0
        %434 = vmatpush.bf16.msra.mxu0 0
        %435 = vmatpush.bf16.msra.mxu0 0
        %436 = vmatpush.bf16.msra.mxu0 %v424
        %437 = vmatpush.bf16.msra.mxu0 %v422
        %438 = vmatmul.bf16.gmra.mxu0 %v428
        %v439 = vpop.f32.mrf.mxu0
        %v440 = vadd.f32 0.0, %v439
        %v441 = vpop.f32.mrf.mxu0
        %442 = vdwg.mxu0
        %v443 = vadd.f32 %v418, %v440
        %s444 = sadd.s32 %s264, 2
        %s445 = smul.u32 %s444, 4
        %s446 = smul.addr %s445, 4
        %s447 = scalar_lea.vmem %s251, %s446
        %v448 = vld [vmem:[%s447] sm:$0xf]
        %v449 = vld [vmem:[%s447 + $0x4] sm:$0xf]
        %v450 = vld [vmem:[%s447 + $0x8] sm:$0xf]
        %v451 = vld [vmem:[%s447 + $0xc] sm:$0xf]
        %s452 = scalar_lea.vmem %s1, 24
        %v453 = vld [vmem:[%s452] sm:$0xf]
        %v458 = vunpack.c.l.b16 %v448
        %v459 = vunpack.c.l.b16 %v449
        %v460 = vunpack.c.l.b16 %v450
        %v461 = vunpack.c.l.b16 %v451
        %v462 = vpack.c.b16 %v459, %v458
        %v463 = vpack.c.b16 %v461, %v460
        %v467 = vsel %vm295, %v453, 0
        %469 = vmatpush.bf16.msra.mxu0 0
        %470 = vmatpush.bf16.msra.mxu0 0
        %471 = vmatpush.bf16.msra.mxu0 0
        %472 = vmatpush.bf16.msra.mxu0 0
        %473 = vmatpush.bf16.msra.mxu0 0
        %474 = vmatpush.bf16.msra.mxu0 0
        %475 = vmatpush.bf16.msra.mxu0 %v463
        %476 = vmatpush.bf16.msra.mxu0 %v462
        %477 = vmatmul.bf16.gmra.mxu0 %v467
        %v478 = vpop.f32.mrf.mxu0
        %v479 = vadd.f32 0.0, %v478
        %v480 = vpop.f32.mrf.mxu0
        %481 = vdwg.mxu0
        %v482 = vadd.f32 %v443, %v479
        %s483 = scalar_lea.vmem %s1, 28
        %v484 = vld [vmem:[%s483] sm:$0xf]
        %485 = vrot.lane.b32.xlu0 %v462, 127
        %v486 = vpop.permute.xlu0 %485
        %487 = vrot.lane.b32.xlu0 %v463, 127
        %v488 = vpop.permute.xlu0 %487
        %v492 = vsel %vm295, %v484, 0
        %494 = vmatpush.bf16.msra.mxu0 0
        %495 = vmatpush.bf16.msra.mxu0 0
        %496 = vmatpush.bf16.msra.mxu0 0
        %497 = vmatpush.bf16.msra.mxu0 0
        %498 = vmatpush.bf16.msra.mxu0 0
        %499 = vmatpush.bf16.msra.mxu0 0
        %500 = vmatpush.bf16.msra.mxu0 %v488
        %501 = vmatpush.bf16.msra.mxu0 %v486
        %502 = vmatmul.bf16.gmra.mxu0 %v492
        %v503 = vpop.f32.mrf.mxu0
        %v504 = vadd.f32 0.0, %v503
        %v505 = vpop.f32.mrf.mxu0
        %506 = vdwg.mxu0
        %v507 = vadd.f32 %v482, %v504
        %s508 = scalar_lea.vmem %s1, 32
        %v509 = vld [vmem:[%s508] sm:$0xf]
        %510 = vrot.lane.b32.xlu0 %v462, 126
        %v511 = vpop.permute.xlu0 %510
        %512 = vrot.lane.b32.xlu0 %v463, 126
        %v513 = vpop.permute.xlu0 %512
        %v517 = vsel %vm295, %v509, 0
        %519 = vmatpush.bf16.msra.mxu0 0
        %520 = vmatpush.bf16.msra.mxu0 0
        %521 = vmatpush.bf16.msra.mxu0 0
        %522 = vmatpush.bf16.msra.mxu0 0
        %523 = vmatpush.bf16.msra.mxu0 0
        %524 = vmatpush.bf16.msra.mxu0 0
        %525 = vmatpush.bf16.msra.mxu0 %v513
        %526 = vmatpush.bf16.msra.mxu0 %v511
        %527 = vmatmul.bf16.gmra.mxu0 %v517
        %v528 = vpop.f32.mrf.mxu0
        %v529 = vadd.f32 0.0, %v528
        %v530 = vpop.f32.mrf.mxu0
        %531 = vdwg.mxu0
        %v532 = vadd.f32 %v507, %v529
        %v533 = vld [vmem:[%s2] sm:$0xff]
        %535 = vset.pattern.permute.xlu0 0
        %536 = vperm.xlu0 %535, %v533
        %v537 = vpop.permute.xlu0 %536
        %v539 = vadd.f32 %v532, %v537
        %v540 = vld [vmem:[%s3] sm:$0xf]
        %v541 = vmul.f32 %v539, %v539
        %v542 = vpack.c.bf16 %v541, %v541
        %v543 = vld [vmem:[%s4] sm:$0xff]
        %545 = vset.pattern.permute.xlu0 0
        %546 = vperm.xlu0 %545, %v543
        %v547 = vpop.permute.xlu0 %546
        %vm549 = vcmask 64512
        %v551 = vsel %vm549, %v540, 0
        %vm553 = vcmask 1043456
        %v555 = vsel %vm553, %v542, 0
        %557 = vmatpush.bf16.msra.mxu0 0
        %558 = vmatpush.bf16.msra.mxu0 0
        %559 = vmatpush.bf16.msra.mxu0 0
        %560 = vmatpush.bf16.msra.mxu0 0
        %561 = vmatpush.bf16.msra.mxu0 0
        %562 = vmatpush.bf16.msra.mxu0 0
        %563 = vmatpush.bf16.msra.mxu0 0
        %564 = vmatpush.bf16.msra.mxu0 %v555
        %565 = vmatmul.bf16.gmra.mxu0 %v551
        %v566 = vpop.f32.mrf.mxu0
        %v567 = vadd.f32 %v547, %v566
        %v568 = vpop.f32.mrf.mxu0
        %569 = vdwg.mxu0
        %v570 = vrsqrt.pop %v567
        %v571 = vmul.f32 %v570, %v567
        %v572 = vmul.f32 %v571, %v570
        %v573 = vmul.f32 0.5, %v572
        %v574 = vsub.f32 1.5, %v573
        %v575 = vmul.f32 %v570, %v574
        %vm576 = vweird.f32 %v567
        %vm577 = vweird.f32 %v570
        %vm578 = vmor %vm576, %vm577
        %v579 = vsel %vm578, %v570, %v575
        %v580 = vmul.f32 %v539, %v579
        %v581 = vpack.c.bf16 %v580, %v580
        %s582 = smul.addr %s264, 4
        %s583 = scalar_lea.vmem %s260, %s582
        %vm584 = vcmask 60416
        %585 = vst.msk [vmem:[%s583] sm:$0xf] %vm584, %v581
      $region45: #{g_a_forward.6} parent=39 // loop_footer
        %s268 = sadd.s32 1, %s264
      $region46: #{g_a_forward.6} parent=39 // loop_footer_branch
        %263 = sbr.rel target = $region42
      $region47: #{g_a_forward.6} parent=39 // loop_exit
        _
      %s586 = smul.u32 8, %s21
      %p587 = scmp.lt.s32.totalorder %s20, 1
      %s588 = scalar_select %p587, %s20, 1
      %p589 = scmp.lt.s32.totalorder %s586, 7
      %s590 = scalar_select %p589, %s586, 7
      %s591 = smul.addr %s588, 8
      %s592 = sadd.s32 %s590, %s591
      %s593 = smul.addr %s592, 4
      %s594 = scalar_lea.vmem %s5, %s593
      // Predicated region
      $region48: #{g_a_forward.6} parent=39 // pred_check
        %p595 = pneg %p160
      $region49: #{g_a_forward.6} parent=39 // pred_check_branch
        %597 = sbr.rel (%p595) target = $region51
      $region50: #{g_a_forward.6} parent=39 // pred_region
        %s598 = smul.u32 8, %s21
      $region51: #{g_a_forward.6} parent=39 // pred_fallthru
        _
    $region40: #{g_a_forward.6} parent=5 // pred_fallthru
      _
    %p599 = scmp.le.s32.totalorder 2, %s11
    // Predicated region
    $region52: #{g_a_forward.6} parent=5 // pred_check
      %p600 = pneg %p599
    $region53: #{g_a_forward.6} parent=5 // pred_check_branch
      %602 = sbr.rel (%p600) target = $region55
    $region54: #{g_a_forward.6} parent=5 // pred_region
      %s603 = ssub.s32 %s11, 2
      // Predicated region
      $region56: #{g_a_forward.6} parent=54 // pred_check
        %p604 = pneg %p166
      $region57: #{g_a_forward.6} parent=54 // pred_check_branch
        %606 = sbr.rel (%p604) target = $region59
      $region58: #{g_a_forward.6} parent=54 // pred_region
        %s607 = smul.u32 8, %s23
        %p608 = scmp.lt.s32.totalorder %s22, 1
        %s609 = scalar_select %p608, %s22, 1
        %p610 = scmp.lt.s32.totalorder %s607, 7
        %s611 = scalar_select %p610, %s607, 7
        %s612 = smul.addr %s609, 8
        %s613 = sadd.s32 %s611, %s612
        %s614 = smul.addr %s613, 4
        %s615 = scalar_lea.vmem %s5, %s614
      $region59: #{g_a_forward.6} parent=54 // pred_fallthru
        _
    $region55: #{g_a_forward.6} parent=5 // pred_fallthru
      _
  $region6: #{g_a_forward.6} parent=0 // loop_footer
    %s15 = sadd.s32 1, %s11
  $region7: #{g_a_forward.6} parent=0 // loop_footer_branch
    %10 = sbr.rel target = $region3
  $region8: #{g_a_forward.6} parent=0 // loop_exit
    _

// kernel: g_a_forward.7
$region0: #{g_a_forward.7}
  #allocation0 [shape = 'u32[]', space=smem, size = 0x4, offset = 0x4, fixed_abs, tag = 'smem constant byte address 0x4 - core index']
  #allocation1 [shape = 'u32[72,128]{1,0:T(1,128)}', space=vmem, size = 0x9000, scoped, tag = 'internal scratch']
  %s0 = inlined_call_operand.vmem [shape: bf16[2,1,6,32,6], index: 0, kind: input, shape index: {}]
  %s1 = inlined_call_operand.vmem [shape: bf16[9,16,32], index: 1, kind: input, shape index: {}]
  %s2 = inlined_call_operand.vmem [shape: f32[16,1], index: 2, kind: input, shape index: {}]
  %s3 = inlined_call_operand.vmem [shape: f32[2,4,16,4], index: 3, kind: output, shape index: {}]
  %s4 = sld [smem:[#allocation0]]
  $region52: #{g_a_forward.7} parent=0
    _
  %s6 = ssub.s32 1, %s4
  %s7 = scalar_select 0, %s6, %s4
  loop: start=0, step=1, limit=4
  $region2: #{g_a_forward.7} parent=0 // loop_pre_header
    _
  $region3: #{g_a_forward.7} parent=0 // loop_header
    %s9 = sphi 0, %s13
    %p10 = scmp.ge.s32.totalorder %s9, 4
    %s16 = sphi 0, %s28
    %s17 = sphi 0, %s24
    %s18 = sphi 0, %s16
    %s19 = sphi 0, %s17
    %s20 = sphi 0, %s18
    %s21 = sphi 0, %s19
    %s33 = sphi 0, %s35
    %s36 = sphi 0, %s33
    %s37 = sphi 0, %s36
    %s53 = sphi 0, %s37
    %s57 = sphi 0, %s57
    %s59 = sphi 0, %s57
    %s60 = sphi 0, %s59
    %s74 = sphi 0, %s60
    %s78 = sphi 0, %s78
    %s80 = sphi 0, %s78
    %s81 = sphi 0, %s80
    %s95 = sphi 0, %s81
    %s103 = sphi 0, %s105
    %s106 = sphi 0, %s103
    %s107 = sphi 0, %s106
    %s123 = sphi 0, %s107
  $region4: #{g_a_forward.7} parent=0 // loop_header_branch
    %12 = sbr.rel (%p10) target = $region8
  $region5: #{g_a_forward.7} parent=0 // loop_body
    %s14 = ssub.s32 %s9, 1
    %s15 = ssub.s32 %s9, 2
    %s22 = sadd.s32 1, %s17
    %p23 = scmp.ge.s32.totalorder %s22, 1
    %s24 = scalar_select %p23, 0, %s22
    %s25 = sadd.s32 1, %s16
    %s26 = scalar_select %p23, %s25, %s16
    %p27 = scmp.ge.s32.totalorder %s26, 2
    %s28 = scalar_select %p27, 0, %s26
    %s29 = ssub.s32 %s16, %s28
    %s30 = ssub.s32 %s17, %s24
    %s31 = sor.u32 %s29, %s30
    %p32 = scmp.eq.s32.totalorder %s31, 0
    %s34 = sadd.s32 %s33, 1
    %s35 = scalar_select %p32, %s33, %s34
    %p38 = pneg %p32
    %p39 = scmp.eq.s32.totalorder %s9, 1
    %p40 = por %p38, %p39
    %p41 = scmp.ne.s32.totalorder %s33, %s36
    %p42 = scmp.eq.s32.totalorder %s9, 0
    %p43 = por %p41, %p42
    %p44 = scmp.ne.s32.totalorder %s33, %s36
    %p45 = scmp.eq.s32.totalorder %s14, 1
    %p46 = por %p44, %p45
    %p47 = scmp.ne.s32.totalorder %s36, %s37
    %p48 = scmp.eq.s32.totalorder %s14, 0
    %p49 = por %p47, %p48
    %p50 = scmp.ne.s32.totalorder %s36, %s37
    %p51 = scmp.eq.s32.totalorder %s15, 1
    %p52 = por %p50, %p51
    %p54 = scmp.ne.s32.totalorder %s37, %s53
    %p55 = scmp.eq.s32.totalorder %s15, 0
    %p56 = por %p54, %p55
    %s58 = sadd.s32 %s57, 1
    %p61 = scmp.eq.s32.totalorder %s9, 1
    %p62 = scmp.ne.s32.totalorder %s57, %s59
    %p63 = scmp.eq.s32.totalorder %s9, 0
    %p64 = por %p62, %p63
    %p65 = scmp.ne.s32.totalorder %s57, %s59
    %p66 = scmp.eq.s32.totalorder %s14, 1
    %p67 = por %p65, %p66
    %p68 = scmp.ne.s32.totalorder %s59, %s60
    %p69 = scmp.eq.s32.totalorder %s14, 0
    %p70 = por %p68, %p69
    %p71 = scmp.ne.s32.totalorder %s59, %s60
    %p72 = scmp.eq.s32.totalorder %s15, 1
    %p73 = por %p71, %p72
    %p75 = scmp.ne.s32.totalorder %s60, %s74
    %p76 = scmp.eq.s32.totalorder %s15, 0
    %p77 = por %p75, %p76
    %s79 = sadd.s32 %s78, 1
    %p82 = scmp.eq.s32.totalorder %s9, 1
    %p83 = scmp.ne.s32.totalorder %s78, %s80
    %p84 = scmp.eq.s32.totalorder %s9, 0
    %p85 = por %p83, %p84
    %p86 = scmp.ne.s32.totalorder %s78, %s80
    %p87 = scmp.eq.s32.totalorder %s14, 1
    %p88 = por %p86, %p87
    %p89 = scmp.ne.s32.totalorder %s80, %s81
    %p90 = scmp.eq.s32.totalorder %s14, 0
    %p91 = por %p89, %p90
    %p92 = scmp.ne.s32.totalorder %s80, %s81
    %p93 = scmp.eq.s32.totalorder %s15, 1
    %p94 = por %p92, %p93
    %p96 = scmp.ne.s32.totalorder %s81, %s95
    %p97 = scmp.eq.s32.totalorder %s15, 0
    %p98 = por %p96, %p97
    %s99 = ssub.s32 %s16, %s28
    %s100 = ssub.s32 %s17, %s24
    %s101 = sor.u32 %s99, %s100
    %p102 = scmp.eq.s32.totalorder %s101, 0
    %s104 = sadd.s32 %s103, 1
    %s105 = scalar_select %p102, %s103, %s104
    %p108 = pneg %p102
    %p109 = scmp.eq.s32.totalorder %s9, 1
    %p110 = por %p108, %p109
    %p111 = scmp.ne.s32.totalorder %s103, %s106
    %p112 = scmp.eq.s32.totalorder %s9, 0
    %p113 = por %p111, %p112
    %p114 = scmp.ne.s32.totalorder %s103, %s106
    %p115 = scmp.eq.s32.totalorder %s14, 1
    %p116 = por %p114, %p115
    %p117 = scmp.ne.s32.totalorder %s106, %s107
    %p118 = scmp.eq.s32.totalorder %s14, 0
    %p119 = por %p117, %p118
    %p120 = scmp.ne.s32.totalorder %s106, %s107
    %p121 = scmp.eq.s32.totalorder %s15, 1
    %p122 = por %p120, %p121
    %p124 = scmp.ne.s32.totalorder %s107, %s123
    %p125 = scmp.eq.s32.totalorder %s15, 0
    %p126 = por %p124, %p125
    %p127 = scmp.le.s32.totalorder 1, %s9
    %p128 = scmp.lt.s32.totalorder %s9, 3
    %p129 = pnand %p127, %p128
    %p130 = pneg %p129
    // Predicated region
    $region9: #{g_a_forward.7} parent=5 // pred_check
      _
    $region10: #{g_a_forward.7} parent=5 // pred_check_branch
      %132 = sbr.rel (%p129) target = $region12
    $region11: #{g_a_forward.7} parent=5 // pred_region
      %s133 = ssub.s32 %s9, 1
      // Predicated region
      $region13: #{g_a_forward.7} parent=11 // pred_check
        %p134 = pneg %p70
      $region14: #{g_a_forward.7} parent=11 // pred_check_branch
        %136 = sbr.rel (%p134) target = $region16
      $region15: #{g_a_forward.7} parent=11 // pred_region
        _
      $region16: #{g_a_forward.7} parent=11 // pred_fallthru
        _
      // Predicated region
      $region17: #{g_a_forward.7} parent=11 // pred_check
        %p137 = pneg %p91
      $region18: #{g_a_forward.7} parent=11 // pred_check_branch
        %139 = sbr.rel (%p137) target = $region20
      $region19: #{g_a_forward.7} parent=11 // pred_region
        _
      $region20: #{g_a_forward.7} parent=11 // pred_fallthru
        _
    $region12: #{g_a_forward.7} parent=5 // pred_fallthru
      _
    %p140 = scmp.lt.s32.totalorder %s9, 2
    // Predicated region
    $region21: #{g_a_forward.7} parent=5 // pred_check
      %p141 = pneg %p140
    $region22: #{g_a_forward.7} parent=5 // pred_check_branch
      %143 = sbr.rel (%p141) target = $region24
    $region23: #{g_a_forward.7} parent=5 // pred_region
      // Predicated region
      $region25: #{g_a_forward.7} parent=23 // pred_check
        %p144 = pneg %p43
      $region26: #{g_a_forward.7} parent=23 // pred_check_branch
        %146 = sbr.rel (%p144) target = $region28
      $region27: #{g_a_forward.7} parent=23 // pred_region
        %p147 = scmp.lt.s32.totalorder %s16, 1
        %s148 = scalar_select %p147, %s16, 1
        %p149 = scmp.lt.s32.totalorder %s17, 0
        %s150 = scalar_select %p149, %s17, 0
        %s151 = smul.addr %s150, 24
        %s152 = smul.addr %s148, 24
        %s153 = sadd.s32 %s151, %s152
        %s154 = smul.addr %s153, 4
        %s155 = scalar_lea.vmem %s0, %s154
      $region28: #{g_a_forward.7} parent=23 // pred_fallthru
        _
    $region24: #{g_a_forward.7} parent=5 // pred_fallthru
      _
    %p156 = scmp.le.s32.totalorder 1, %s9
    %p157 = scmp.lt.s32.totalorder %s9, 3
    %p158 = pnand %p156, %p157
    %p159 = pneg %p158
    // Predicated region
    $region29: #{g_a_forward.7} parent=5 // pred_check
      _
    $region30: #{g_a_forward.7} parent=5 // pred_check_branch
      %161 = sbr.rel (%p158) target = $region32
    $region31: #{g_a_forward.7} parent=5 // pred_region
      %s162 = ssub.s32 %s9, 1
      %p163 = scmp.lt.s32.totalorder %s18, 1
      %s164 = scalar_select %p163, %s18, 1
      %p165 = scmp.lt.s32.totalorder %s19, 0
      %s166 = scalar_select %p165, %s19, 0
      %s167 = smul.addr %s166, 24
      %s168 = smul.addr %s164, 24
      %s169 = sadd.s32 %s167, %s168
      %s170 = smul.addr %s169, 4
      %s171 = scalar_lea.vmem %s0, %s170
      %p172 = pneg %p49
      %p173 = pneg %p46
      %p174 = pneg %p70
      %p175 = pneg %p67
      %p176 = pneg %p91
      %p177 = pneg %p88
      %p178 = pneg %p119
      %p179 = pneg %p116
      %s180 = smul.u32 4, %s19
      %p181 = scmp.lt.s32.totalorder %s18, 1
      %s182 = scalar_select %p181, %s18, 1
      %p183 = scmp.lt.s32.totalorder %s180, 3
      %s184 = scalar_select %p183, %s180, 3
      %s185 = smul.addr %s184, 2
      %s186 = smul.addr %s182, 8
      %s187 = sadd.s32 %s185, %s186
      %s188 = smul.addr %s187, 8
      %s189 = scalar_lea.vmem %s3, %s188
      %p190 = scmp.lt.s32.totalorder %s18, 1
      %s191 = scalar_select %p190, %s18, 1
      %p192 = scmp.lt.s32.totalorder %s19, 0
      %s193 = scalar_select %p192, %s19, 0
      %s194 = smul.addr %s193, 24
      %s195 = smul.addr %s191, 24
      %s196 = sadd.s32 %s194, %s195
      %s197 = smul.addr %s196, 4
      %s198 = scalar_lea.vmem %s0, %s197
      %s199 = smul.u32 4, %s19
      %p200 = scmp.lt.s32.totalorder %s18, 1
      %s201 = scalar_select %p200, %s18, 1
      %p202 = scmp.lt.s32.totalorder %s199, 3
      %s203 = scalar_select %p202, %s199, 3
      %s204 = smul.addr %s203, 2
      %s205 = smul.addr %s201, 8
      %s206 = sadd.s32 %s204, %s205
      %s207 = smul.addr %s206, 8
      %s208 = scalar_lea.vmem %s3, %s207
      %s209 = smul.u32 4, %s19
      loop: start=0, step=1, limit=4
      $region33: #{g_a_forward.7} parent=31 // loop_pre_header
        _
      $region34: #{g_a_forward.7} parent=31 // loop_header
        %s212 = sphi 0, %s216
        %p213 = scmp.ge.s32.totalorder %s212, 4
      $region35: #{g_a_forward.7} parent=31 // loop_header_branch
        %215 = sbr.rel (%p213) target = $region39
      $region36: #{g_a_forward.7} parent=31 // loop_body
        %s217 = smul.u32 %s212, 4
        %s218 = smul.addr %s217, 4
        %s219 = scalar_lea.vmem %s198, %s218
        %v220 = vld [vmem:[%s219] sm:$0xf]
        %v221 = vld [vmem:[%s219 + $0x4] sm:$0xf]
        %v222 = vld [vmem:[%s219 + $0x8] sm:$0xf]
        %v223 = vld [vmem:[%s219 + $0xc] sm:$0xf]
        %v224 = vld [vmem:[%s1] sm:$0xf]
        %v225 = vld [vmem:[%s1 + $0x4] sm:$0xf]
        %s226 = scalar_lea.vmem %s1, 8
        %v227 = vld [vmem:[%s226] sm:$0xf]
        %v228 = vld [vmem:[%s226 + $0x4] sm:$0xf]
        %v231 = vunpack.c.l.b16 %v227
        %v232 = vunpack.c.l.b16 %v228
        %v233 = vpack.c.b16 %v232, %v231
        %v238 = vunpack.c.l.b16 %v220
        %v239 = vunpack.c.l.b16 %v221
        %v240 = vunpack.c.l.b16 %v222
        %v241 = vunpack.c.l.b16 %v223
        %v242 = vpack.c.b16 %v239, %v238
        %v243 = vpack.c.b16 %v241, %v240
        %244 = vrot.lane.b32.xlu0 %v242, 127
        %v245 = vpop.permute.xlu0 %244
        %246 = vrot.lane.b32.xlu0 %v243, 127
        %v247 = vpop.permute.xlu0 %246
        %vm250 = vcmask 261120
        %v252 = vsel %vm250, %v233, 0
        %254 = vmatpush.bf16.msra.mxu0 0
        %255 = vmatpush.bf16.msra.mxu0 0
        %256 = vmatpush.bf16.msra.mxu0 0
        %257 = vmatpush.bf16.msra.mxu0 0
        %258 = vmatpush.bf16.msra.mxu0 0
        %259 = vmatpush.bf16.msra.mxu0 0
        %260 = vmatpush.bf16.msra.mxu0 %v247
        %261 = vmatpush.bf16.msra.mxu0 %v245
        %262 = vmatmul.bf16.gmra.mxu0 %v252
        %v263 = vpop.f32.mrf.mxu0
        %v264 = vadd.f32 0.0, %v263
        %v265 = vpop.f32.mrf.mxu0
        %v266 = vadd.f32 0.0, %v265
        %267 = vdwg.mxu0
        %v270 = vunpack.c.l.b16 %v224
        %v271 = vunpack.c.l.b16 %v225
        %v272 = vpack.c.b16 %v271, %v270
        %v276 = vsel %vm250, %v272, 0
        %278 = vmatpush.bf16.msra.mxu0 0
        %279 = vmatpush.bf16.msra.mxu0 0
        %280 = vmatpush.bf16.msra.mxu0 0
        %281 = vmatpush.bf16.msra.mxu0 0
        %282 = vmatpush.bf16.msra.mxu0 0
        %283 = vmatpush.bf16.msra.mxu0 0
        %284 = vmatpush.bf16.msra.mxu0 %v243
        %285 = vmatpush.bf16.msra.mxu0 %v242
        %286 = vmatmul.bf16.gmra.mxu0 %v276
        %v287 = vpop.f32.mrf.mxu0
        %v288 = vadd.f32 %v264, %v287
        %v289 = vpop.f32.mrf.mxu0
        %v290 = vadd.f32 %v266, %v289
        %291 = vdwg.mxu0
        %s292 = scalar_lea.vmem %s1, 16
        %v293 = vld [vmem:[%s292] sm:$0xf]
        %v294 = vld [vmem:[%s292 + $0x4] sm:$0xf]
        %v297 = vunpack.c.l.b16 %v293
        %v298 = vunpack.c.l.b16 %v294
        %v299 = vpack.c.b16 %v298, %v297
        %300 = vrot.lane.b32.xlu0 %v242, 126
        %v301 = vpop.permute.xlu0 %300
        %302 = vrot.lane.b32.xlu0 %v243, 126
        %v303 = vpop.permute.xlu0 %302
        %v307 = vsel %vm250, %v299, 0
        %309 = vmatpush.bf16.msra.mxu0 0
        %310 = vmatpush.bf16.msra.mxu0 0
        %311 = vmatpush.bf16.msra.mxu0 0
        %312 = vmatpush.bf16.msra.mxu0 0
        %313 = vmatpush.bf16.msra.mxu0 0
        %314 = vmatpush.bf16.msra.mxu0 0
        %315 = vmatpush.bf16.msra.mxu0 %v303
        %316 = vmatpush.bf16.msra.mxu0 %v301
        %317 = vmatmul.bf16.gmra.mxu0 %v307
        %v318 = vpop.f32.mrf.mxu0
        %v319 = vadd.f32 0.0, %v318
        %v320 = vpop.f32.mrf.mxu0
        %v321 = vadd.f32 0.0, %v320
        %322 = vdwg.mxu0
        %v323 = vadd.f32 %v288, %v319
        %v324 = vadd.f32 %v290, %v321
        %s325 = sadd.s32 %s212, 1
        %s326 = smul.u32 %s325, 4
        %s327 = smul.addr %s326, 4
        %s328 = scalar_lea.vmem %s198, %s327
        %v329 = vld [vmem:[%s328] sm:$0xf]
        %v330 = vld [vmem:[%s328 + $0x4] sm:$0xf]
        %v331 = vld [vmem:[%s328 + $0x8] sm:$0xf]
        %v332 = vld [vmem:[%s328 + $0xc] sm:$0xf]
        %s333 = scalar_lea.vmem %s1, 24
        %v334 = vld [vmem:[%s333] sm:$0xf]
        %v335 = vld [vmem:[%s333 + $0x4] sm:$0xf]
        %v338 = vunpack.c.l.b16 %v334
        %v339 = vunpack.c.l.b16 %v335
        %v340 = vpack.c.b16 %v339, %v338
        %v345 = vunpack.c.l.b16 %v329
        %v346 = vunpack.c.l.b16 %v330
        %v347 = vunpack.c.l.b16 %v331
        %v348 = vunpack.c.l.b16 %v332
        %v349 = vpack.c.b16 %v346, %v345
        %v350 = vpack.c.b16 %v348, %v347
        %v354 = vsel %vm250, %v340, 0
        %356 = vmatpush.bf16.msra.mxu0 0
        %357 = vmatpush.bf16.msra.mxu0 0
        %358 = vmatpush.bf16.msra.mxu0 0
        %359 = vmatpush.bf16.msra.mxu0 0
        %360 = vmatpush.bf16.msra.mxu0 0
        %361 = vmatpush.bf16.msra.mxu0 0
        %362 = vmatpush.bf16.msra.mxu0 %v350
        %363 = vmatpush.bf16.msra.mxu0 %v349
        %364 = vmatmul.bf16.gmra.mxu0 %v354
        %v365 = vpop.f32.mrf.mxu0
        %v366 = vadd.f32 0.0, %v365
        %v367 = vpop.f32.mrf.mxu0
        %v368 = vadd.f32 0.0, %v367
        %369 = vdwg.mxu0
        %v370 = vadd.f32 %v323, %v366
        %v371 = vadd.f32 %v324, %v368
        %s372 = scalar_lea.vmem %s1, 32
        %v373 = vld [vmem:[%s372] sm:$0xf]
        %v374 = vld [vmem:[%s372 + $0x4] sm:$0xf]
        %v377 = vunpack.c.l.b16 %v373
        %v378 = vunpack.c.l.b16 %v374
        %v379 = vpack.c.b16 %v378, %v377
        %380 = vrot.lane.b32.xlu0 %v349, 127
        %v381 = vpop.permute.xlu0 %380
        %382 = vrot.lane.b32.xlu0 %v350, 127
        %v383 = vpop.permute.xlu0 %382
        %v387 = vsel %vm250, %v379, 0
        %389 = vmatpush.bf16.msra.mxu0 0
        %390 = vmatpush.bf16.msra.mxu0 0
        %391 = vmatpush.bf16.msra.mxu0 0
        %392 = vmatpush.bf16.msra.mxu0 0
        %393 = vmatpush.bf16.msra.mxu0 0
        %394 = vmatpush.bf16.msra.mxu0 0
        %395 = vmatpush.bf16.msra.mxu0 %v383
        %396 = vmatpush.bf16.msra.mxu0 %v381
        %397 = vmatmul.bf16.gmra.mxu0 %v387
        %v398 = vpop.f32.mrf.mxu0
        %v399 = vadd.f32 0.0, %v398
        %v400 = vpop.f32.mrf.mxu0
        %v401 = vadd.f32 0.0, %v400
        %402 = vdwg.mxu0
        %v403 = vadd.f32 %v370, %v399
        %v404 = vadd.f32 %v371, %v401
        %s405 = scalar_lea.vmem %s1, 40
        %v406 = vld [vmem:[%s405] sm:$0xf]
        %v407 = vld [vmem:[%s405 + $0x4] sm:$0xf]
        %v410 = vunpack.c.l.b16 %v406
        %v411 = vunpack.c.l.b16 %v407
        %v412 = vpack.c.b16 %v411, %v410
        %413 = vrot.lane.b32.xlu0 %v349, 126
        %v414 = vpop.permute.xlu0 %413
        %415 = vrot.lane.b32.xlu0 %v350, 126
        %v416 = vpop.permute.xlu0 %415
        %v420 = vsel %vm250, %v412, 0
        %422 = vmatpush.bf16.msra.mxu0 0
        %423 = vmatpush.bf16.msra.mxu0 0
        %424 = vmatpush.bf16.msra.mxu0 0
        %425 = vmatpush.bf16.msra.mxu0 0
        %426 = vmatpush.bf16.msra.mxu0 0
        %427 = vmatpush.bf16.msra.mxu0 0
        %428 = vmatpush.bf16.msra.mxu0 %v416
        %429 = vmatpush.bf16.msra.mxu0 %v414
        %430 = vmatmul.bf16.gmra.mxu0 %v420
        %v431 = vpop.f32.mrf.mxu0
        %v432 = vadd.f32 0.0, %v431
        %v433 = vpop.f32.mrf.mxu0
        %v434 = vadd.f32 0.0, %v433
        %435 = vdwg.mxu0
        %v436 = vadd.f32 %v403, %v432
        %v437 = vadd.f32 %v404, %v434
        %s438 = sadd.s32 %s212, 2
        %s439 = smul.u32 %s438, 4
        %s440 = smul.addr %s439, 4
        %s441 = scalar_lea.vmem %s198, %s440
        %v442 = vld [vmem:[%s441] sm:$0xf]
        %v443 = vld [vmem:[%s441 + $0x4] sm:$0xf]
        %v444 = vld [vmem:[%s441 + $0x8] sm:$0xf]
        %v445 = vld [vmem:[%s441 + $0xc] sm:$0xf]
        %s446 = scalar_lea.vmem %s1, 48
        %v447 = vld [vmem:[%s446] sm:$0xf]
        %v448 = vld [vmem:[%s446 + $0x4] sm:$0xf]
        %v451 = vunpack.c.l.b16 %v447
        %v452 = vunpack.c.l.b16 %v448
        %v453 = vpack.c.b16 %v452, %v451
        %v458 = vunpack.c.l.b16 %v442
        %v459 = vunpack.c.l.b16 %v443
        %v460 = vunpack.c.l.b16 %v444
        %v461 = vunpack.c.l.b16 %v445
        %v462 = vpack.c.b16 %v459, %v458
        %v463 = vpack.c.b16 %v461, %v460
        %v467 = vsel %vm250, %v453, 0
        %469 = vmatpush.bf16.msra.mxu0 0
        %470 = vmatpush.bf16.msra.mxu0 0
        %471 = vmatpush.bf16.msra.mxu0 0
        %472 = vmatpush.bf16.msra.mxu0 0
        %473 = vmatpush.bf16.msra.mxu0 0
        %474 = vmatpush.bf16.msra.mxu0 0
        %475 = vmatpush.bf16.msra.mxu0 %v463
        %476 = vmatpush.bf16.msra.mxu0 %v462
        %477 = vmatmul.bf16.gmra.mxu0 %v467
        %v478 = vpop.f32.mrf.mxu0
        %v479 = vadd.f32 0.0, %v478
        %v480 = vpop.f32.mrf.mxu0
        %v481 = vadd.f32 0.0, %v480
        %482 = vdwg.mxu0
        %v483 = vadd.f32 %v436, %v479
        %v484 = vadd.f32 %v437, %v481
        %s485 = scalar_lea.vmem %s1, 56
        %v486 = vld [vmem:[%s485] sm:$0xf]
        %v487 = vld [vmem:[%s485 + $0x4] sm:$0xf]
        %v490 = vunpack.c.l.b16 %v486
        %v491 = vunpack.c.l.b16 %v487
        %v492 = vpack.c.b16 %v491, %v490
        %493 = vrot.lane.b32.xlu0 %v462, 127
        %v494 = vpop.permute.xlu0 %493
        %495 = vrot.lane.b32.xlu0 %v463, 127
        %v496 = vpop.permute.xlu0 %495
        %v500 = vsel %vm250, %v492, 0
        %502 = vmatpush.bf16.msra.mxu0 0
        %503 = vmatpush.bf16.msra.mxu0 0
        %504 = vmatpush.bf16.msra.mxu0 0
        %505 = vmatpush.bf16.msra.mxu0 0
        %506 = vmatpush.bf16.msra.mxu0 0
        %507 = vmatpush.bf16.msra.mxu0 0
        %508 = vmatpush.bf16.msra.mxu0 %v496
        %509 = vmatpush.bf16.msra.mxu0 %v494
        %510 = vmatmul.bf16.gmra.mxu0 %v500
        %v511 = vpop.f32.mrf.mxu0
        %v512 = vadd.f32 0.0, %v511
        %v513 = vpop.f32.mrf.mxu0
        %v514 = vadd.f32 0.0, %v513
        %515 = vdwg.mxu0
        %v516 = vadd.f32 %v483, %v512
        %v517 = vadd.f32 %v484, %v514
        %s518 = scalar_lea.vmem %s1, 64
        %v519 = vld [vmem:[%s518] sm:$0xf]
        %v520 = vld [vmem:[%s518 + $0x4] sm:$0xf]
        %v523 = vunpack.c.l.b16 %v519
        %v524 = vunpack.c.l.b16 %v520
        %v525 = vpack.c.b16 %v524, %v523
        %526 = vrot.lane.b32.xlu0 %v462, 126
        %v527 = vpop.permute.xlu0 %526
        %528 = vrot.lane.b32.xlu0 %v463, 126
        %v529 = vpop.permute.xlu0 %528
        %v533 = vsel %vm250, %v525, 0
        %535 = vmatpush.bf16.msra.mxu0 0
        %536 = vmatpush.bf16.msra.mxu0 0
        %537 = vmatpush.bf16.msra.mxu0 0
        %538 = vmatpush.bf16.msra.mxu0 0
        %539 = vmatpush.bf16.msra.mxu0 0
        %540 = vmatpush.bf16.msra.mxu0 0
        %541 = vmatpush.bf16.msra.mxu0 %v529
        %542 = vmatpush.bf16.msra.mxu0 %v527
        %543 = vmatmul.bf16.gmra.mxu0 %v533
        %v544 = vpop.f32.mrf.mxu0
        %v545 = vadd.f32 0.0, %v544
        %v546 = vpop.f32.mrf.mxu0
        %v547 = vadd.f32 0.0, %v546
        %548 = vdwg.mxu0
        %v549 = vadd.f32 %v516, %v545
        %v550 = vadd.f32 %v517, %v547
        %v551 = vld [vmem:[%s2] sm:$0xff]
        %v552 = vld [vmem:[%s2 + $0x8] sm:$0xff]
        %554 = vset.pattern.permute.xlu0 0
        %555 = vperm.xlu0 %554, %v551
        %v556 = vpop.permute.xlu0 %555
        %559 = vset.pattern.permute.xlu0 0
        %560 = vperm.xlu0 %559, %v552
        %v561 = vpop.permute.xlu0 %560
        %v563 = vadd.f32 %v549, %v556
        %v564 = vadd.f32 %v550, %v561
        %s565 = smul.u32 %s212, 16
        %s566 = scalar_lea.vmem %s208, %s565
        %vm567 = vcmask 31744
        %568 = vst.msk [vmem:[%s566] sm:$0xff] %vm567, %v563
        %569 = vst.msk [vmem:[%s566 + $0x8] sm:$0xff] %vm567, %v564
      $region37: #{g_a_forward.7} parent=31 // loop_footer
        %s216 = sadd.s32 1, %s212
      $region38: #{g_a_forward.7} parent=31 // loop_footer_branch
        %211 = sbr.rel target = $region34
      $region39: #{g_a_forward.7} parent=31 // loop_exit
        _
      %s570 = smul.u32 4, %s19
      %p571 = scmp.lt.s32.totalorder %s18, 1
      %s572 = scalar_select %p571, %s18, 1
      %p573 = scmp.lt.s32.totalorder %s570, 3
      %s574 = scalar_select %p573, %s570, 3
      %s575 = smul.addr %s574, 2
      %s576 = smul.addr %s572, 8
      %s577 = sadd.s32 %s575, %s576
      %s578 = smul.addr %s577, 8
      %s579 = scalar_lea.vmem %s3, %s578
      // Predicated region
      $region40: #{g_a_forward.7} parent=31 // pred_check
        %p580 = pneg %p116
      $region41: #{g_a_forward.7} parent=31 // pred_check_branch
        %582 = sbr.rel (%p580) target = $region43
      $region42: #{g_a_forward.7} parent=31 // pred_region
        %s583 = smul.u32 4, %s19
      $region43: #{g_a_forward.7} parent=31 // pred_fallthru
        _
    $region32: #{g_a_forward.7} parent=5 // pred_fallthru
      _
    %p584 = scmp.le.s32.totalorder 2, %s9
    // Predicated region
    $region44: #{g_a_forward.7} parent=5 // pred_check
      %p585 = pneg %p584
    $region45: #{g_a_forward.7} parent=5 // pred_check_branch
      %587 = sbr.rel (%p585) target = $region47
    $region46: #{g_a_forward.7} parent=5 // pred_region
      %s588 = ssub.s32 %s9, 2
      // Predicated region
      $region48: #{g_a_forward.7} parent=46 // pred_check
        %p589 = pneg %p122
      $region49: #{g_a_forward.7} parent=46 // pred_check_branch
        %591 = sbr.rel (%p589) target = $region51
      $region50: #{g_a_forward.7} parent=46 // pred_region
        %s592 = smul.u32 4, %s21
        %p593 = scmp.lt.s32.totalorder %s20, 1
        %s594 = scalar_select %p593, %s20, 1
        %p595 = scmp.lt.s32.totalorder %s592, 3
        %s596 = scalar_select %p595, %s592, 3
        %s597 = smul.addr %s596, 2
        %s598 = smul.addr %s594, 8
        %s599 = sadd.s32 %s597, %s598
        %s600 = smul.addr %s599, 8
        %s601 = scalar_lea.vmem %s3, %s600
      $region51: #{g_a_forward.7} parent=46 // pred_fallthru
        _
    $region47: #{g_a_forward.7} parent=5 // pred_fallthru
      _
  $region6: #{g_a_forward.7} parent=0 // loop_footer
    %s13 = sadd.s32 1, %s9
  $region7: #{g_a_forward.7} parent=0 // loop_footer_branch
    %8 = sbr.rel target = $region3
  $region8: #{g_a_forward.7} parent=0 // loop_exit
    _

</llo_original>
